<compile_context>
chip_gen: v7x
topology: tpu7x:2x2x1
jax: 0.10.0
libtpu: 0.0.40
codegen_flags: <defaults>
</compile_context>

<pallas_src>
import functools
from typing import NamedTuple

import jax
import jax.numpy as jnp
from jax.experimental import pallas as pl
from jax.experimental.pallas import tpu as pltpu

KW = 4            # conv kernel size
PADW = 2          # int(np.ceil((kw - 1) / 2))
LANE = 128        # TPU lane width / single output tile width (Cout <= 64 here)
TM_CAP = 1024     # max rows per grid step (1024 x 512 bf16 x-block = 1 MiB)
SUBLANES = 16     # bf16 sublane packing: row-tile sizes kept multiples of 16
MIN_M_TILES = 2   # >=2 row tiles per layer: v7x megacore + DMA/compute overlap
COMPUTE_DTYPE = jnp.bfloat16


def _round_up(x, m):
    return (x + m - 1) // m * m


class ConvCfg(NamedTuple):
    stride: int
    cout: int
    cin_pad: int


# ---------------------------------------------------------------------------
# Pallas kernel: fused (x @ w + b) -> LeakyReLU, full-K block, 1-D M grid
# ---------------------------------------------------------------------------
def _conv_mm_kernel(x_ref, w_ref, b_ref, o_ref, *, slope):
    # Single full-K matmul per row tile: no reduction grid axis, no accumulator
    # scratch, no pl.when init/finalize.
    acc = jnp.dot(x_ref[...], w_ref[...], preferred_element_type=jnp.float32)
    r = acc + b_ref[...]                      # (tm, 128) + (1, 128) broadcast
    if slope is not None:
        r = jnp.where(r >= 0, r, slope * r)   # LeakyReLU(0.2)
    o_ref[...] = r.astype(o_ref.dtype)


def _choose_tm(M):
    """Row-tile size: >=2 tiles, <=TM_CAP rows, multiple of 16, minimal padding."""
    n_tiles = max(MIN_M_TILES, pl.cdiv(M, TM_CAP))
    return min(_round_up(pl.cdiv(M, n_tiles), SUBLANES), _round_up(M, SUBLANES))


def pallas_matmul_bias_act(x, w, b, slope):
    """act(x @ w + b) on the MXU with fused bias + LeakyReLU epilogue.

    x: (M, K)   bf16, K % 128 == 0  (full-K block: no reduction loop)
    w: (K, 128) bf16  (constant block index -> stays VMEM-resident)
    b: (1, 128) f32
    Returns the padded (Mp, 128) result in bf16; caller slices the valid region.
    """
    M, K = x.shape
    K2, Np = w.shape
    assert K == K2 and K % LANE == 0 and Np == LANE
    assert b.shape == (1, Np)

    tm = _choose_tm(M)
    Mp = _round_up(M, tm)
    if Mp != M:
        # Only conv1 (+40 rows) and conv3 (+14 rows) reach this: their M has no
        # multiple-of-16 divisor. XLA fuses the pad with the im2col concat.
        x = jnp.pad(x, ((0, Mp - M), (0, 0)))

    itemsize = jnp.dtype(x.dtype).itemsize
    cost = pl.CostEstimate(
        flops=2 * Mp * K * Np,
        transcendentals=0,
        bytes_accessed=(Mp * K + K * Np + Mp * Np) * itemsize + Np * 4,
    )

    return pl.pallas_call(
        functools.partial(_conv_mm_kernel, slope=slope),
        out_shape=jax.ShapeDtypeStruct((Mp, Np), x.dtype),
        grid_spec=pltpu.PrefetchScalarGridSpec(
            num_scalar_prefetch=0,
            grid=(Mp // tm,),                               # 1-D grid: M tiles only
            in_specs=[
                pl.BlockSpec((tm, K), lambda i: (i, 0)),
                pl.BlockSpec((K, Np), lambda i: (0, 0)),    # weight resident
                pl.BlockSpec((1, Np), lambda i: (0, 0)),    # bias resident
            ],
            out_specs=pl.BlockSpec((tm, Np), lambda i: (i, 0)),
        ),
        compiler_params=pltpu.CompilerParams(
            dimension_semantics=("parallel",),              # v7x: split over 2 TCs
        ),
        cost_estimate=cost,
    )(x, w, b)


# ---------------------------------------------------------------------------
# im2col glue (plain JAX, bf16) and conv wrapper
# ---------------------------------------------------------------------------
def _im2col(x, stride):
    """x: (B,H,W,C) NHWC -> (B*Ho*Wo, KW*KW*C) with (kh, kw, c) minor ordering."""
    B, H, W, C = x.shape
    Ho = (H + 2 * PADW - KW) // stride + 1
    Wo = (W + 2 * PADW - KW) // stride + 1
    xp = jnp.pad(x, ((0, 0), (PADW, PADW), (PADW, PADW), (0, 0)))
    cols = [
        xp[:, kh:kh + stride * Ho:stride, kw:kw + stride * Wo:stride, :]
        for kh in range(KW) for kw in range(KW)
    ]
    patches = jnp.concatenate(cols, axis=-1)            # (B, Ho, Wo, KW*KW*C)
    return patches.reshape(B * Ho * Wo, KW * KW * C), Ho, Wo


def conv2d_lrelu_pallas(x, wmat, bias, cfg):
    """Conv2d(k=4, pad=2, stride) + LeakyReLU(0.2): im2col + fused Pallas matmul."""
    B = x.shape[0]
    patches, Ho, Wo = _im2col(x, cfg.stride)
    M = patches.shape[0]
    y = pallas_matmul_bias_act(patches, wmat, bias, slope=0.2)
    return y[:M, :cfg.cout].reshape(B, Ho, Wo, cfg.cout)


# ---------------------------------------------------------------------------
# Parameters (synthetic, PyTorch-shaped, pre-transformed/padded once at init)
# ---------------------------------------------------------------------------
def init_params(key, input_nc=3, ndf=8, n_layers=3):
    # Layer plan (cin, cout, stride) exactly as FCDiscriminator.__init__ builds it.
    plan = [(input_nc, ndf, 2)]
    nf_mult = 1
    for n in range(1, n_layers):
        nf_mult_prev, nf_mult = nf_mult, min(2 ** n, 8)
        plan.append((ndf * nf_mult_prev, ndf * nf_mult, 2))
    nf_mult_prev, nf_mult = nf_mult, min(2 ** n_layers, 8)
    plan.append((ndf * nf_mult_prev, ndf * nf_mult, 1))
    plan.append((ndf * nf_mult, 1, 1))          # final Cout=1 conv, no activation

    def conv_init(k, cin, cout):
        kw_, kb_ = jax.random.split(k)
        fan_in = cin * KW * KW
        s = 1.0 / jnp.sqrt(jnp.float32(fan_in))
        w = jax.random.uniform(kw_, (cout, cin, KW, KW), jnp.float32, -s, s)
        b = jax.random.uniform(kb_, (cout,), jnp.float32, -s, s)
        return w, b

    conv_w, conv_b, cfgs = [], [], []
    last_w = last_b = None
    n_pallas = len(plan) - 1
    for idx, (cin, cout, stride) in enumerate(plan):
        key, sub = jax.random.split(key)
        w, b = conv_init(sub, cin, cout)
        if idx < n_pallas:
            assert cout <= LANE, "single 128-lane output tile assumed (ndf <= 16)"
            cin_pad = _round_up(cin, 8)          # makes K = 16*cin_pad a mult. of 128
            wp = jnp.pad(w, ((0, 0), (0, cin_pad - cin), (0, 0), (0, 0)))
            # (cout,cin,kh,kw) -> (kh,kw,cin,cout) -> (K, cout) -> pad lanes -> bf16
            wmat = jnp.transpose(wp, (2, 3, 1, 0)).reshape(KW * KW * cin_pad, cout)
            wmat = jnp.pad(wmat, ((0, 0), (0, LANE - cout))).astype(COMPUTE_DTYPE)
            bias = jnp.pad(b, (0, LANE - cout)).reshape(1, LANE).astype(jnp.float32)
            conv_w.append(wmat)
            conv_b.append(bias)
            cfgs.append(ConvCfg(stride=stride, cout=cout, cin_pad=cin_pad))
        else:
            # Final Cout=1 conv kept as a bf16 (K, 1) matrix for the jnp tail.
            last_w = jnp.transpose(w, (2, 3, 1, 0)).reshape(KW * KW * cin, cout)
            last_w = last_w.astype(COMPUTE_DTYPE)
            last_b = b                            # f32

    key, kw_, kb_ = jax.random.split(key, 3)
    lin_in = 13 * 13
    s = 1.0 / jnp.sqrt(jnp.float32(lin_in))
    lw = jax.random.uniform(kw_, (1, lin_in), jnp.float32, -s, s)
    lb = jax.random.uniform(kb_, (1,), jnp.float32, -s, s)

    params = {
        "conv_w": conv_w, "conv_b": conv_b,
        "last_w": last_w, "last_b": last_b,
        "lin_w": lw, "lin_b": lb,
    }
    return params, tuple(cfgs)


# ---------------------------------------------------------------------------
# Forward pass matching FCDiscriminator.forward (patch=False)
# ---------------------------------------------------------------------------
def fc_discriminator_forward(params, x_nchw, cfgs, use_sigmoid=False):
    x = jnp.transpose(x_nchw, (0, 2, 3, 1))                 # NCHW -> NHWC
    cin = x.shape[-1]
    cin_pad = cfgs[0].cin_pad
    if cin_pad != cin:                                      # pad 3 -> 8 channels once
        x = jnp.pad(x, ((0, 0), (0, 0), (0, 0), (0, cin_pad - cin)))
    x = x.astype(COMPUTE_DTYPE)

    for wmat, bias, cfg in zip(params["conv_w"], params["conv_b"], cfgs):
        x = conv2d_lrelu_pallas(x, wmat, bias, cfg)

    # Tail: Conv2d(Cout=1, k4, s1, p2) + view(B,-1) + Linear(169 -> 1).
    # Plain JAX (per review): with N=1 a 128-padded Pallas call is >99% zero
    # work. Kept in bf16 with f32 accumulation (no materialized f32 cast).
    B = x.shape[0]
    patches, Ho, Wo = _im2col(x, 1)                          # bf16 (B*169, 1024)
    y = jnp.dot(patches, params["last_w"],
                preferred_element_type=jnp.float32) + params["last_b"]
    flat = y.reshape(B, Ho * Wo)          # (B, 169); 1-channel NHWC == NCHW flatten
    out = flat @ params["lin_w"].T + params["lin_b"]
    if use_sigmoid:
        out = jax.nn.sigmoid(out)
    return out


if __name__ == "__main__":
    key = jax.random.PRNGKey(0)
    k_params, k_x = jax.random.split(key)

    B, C, H, W = 2, 3, 74, 74   # 74 -> 38 -> 20 -> 11 -> 12 -> 13 (13*13 = 169)
    x = jax.random.normal(k_x, (B, C, H, W), jnp.float32)

    params, cfgs = init_params(k_params, input_nc=C, ndf=8, n_layers=3)

    fwd = jax.jit(fc_discriminator_forward, static_argnums=(2, 3))
    out = fwd(params, x, cfgs, False)
    out = jax.block_until_ready(out)
    assert out.shape == (B, 1), out.shape
    assert out.dtype == jnp.float32
    print("KERNEL_OK")
</pallas_src>

<mosaic_0001>
module attributes {stable_mosaic.version = 11 : i64} {
  func.func @_conv_mm_kernel(%arg0: i32, %arg1: memref<976x128xbf16, #tpu.memory_space<vmem>>, %arg2: memref<128x128xbf16, #tpu.memory_space<vmem>>, %arg3: memref<1x128xf32, #tpu.memory_space<vmem>>, %arg4: memref<976x128xbf16, #tpu.memory_space<vmem>>) attributes {dimension_semantics = [#tpu.dimension_semantics<parallel>], iteration_bounds = array<i64: 3>, scalar_prefetch = 0 : i64, scratch_operands = 0 : i64, tpu.core_type = #tpu.core_type<tc>, window_params = [{transform_indices = @transform_0, window_bounds = array<i64: 976, 128>}, {pipeline_mode = #tpu.pipeline_mode<synchronous>, transform_indices = @transform_1, window_bounds = array<i64: 128, 128>}, {pipeline_mode = #tpu.pipeline_mode<synchronous>, transform_indices = @transform_2, window_bounds = array<i64: 1, 128>}, {transform_indices = @transform_3, window_bounds = array<i64: 976, 128>}]} {
    %c0 = arith.constant 0 : index
    %c0_0 = arith.constant 0 : index
    %0 = vector.load %arg1[%c0, %c0_0] : memref<976x128xbf16, #tpu.memory_space<vmem>>, vector<976x128xbf16>
    %c0_1 = arith.constant 0 : index
    %c0_2 = arith.constant 0 : index
    %1 = vector.load %arg2[%c0_1, %c0_2] : memref<128x128xbf16, #tpu.memory_space<vmem>>, vector<128x128xbf16>
    %cst = arith.constant dense<0.000000e+00> : vector<976x128xf32>
    %2 = tpu.matmul %0, %1, %cst {dimension_numbers = #tpu.dot_dimension_numbers<[1], [0], [0], [1], [0, 0, 1, 1], [], []>} : vector<976x128xbf16>, vector<128x128xbf16>, vector<976x128xf32> -> vector<976x128xf32>
    %c0_3 = arith.constant 0 : index
    %c0_4 = arith.constant 0 : index
    %3 = vector.load %arg3[%c0_3, %c0_4] : memref<1x128xf32, #tpu.memory_space<vmem>>, vector<1x128xf32>
    %4 = vector.broadcast %3 : vector<1x128xf32> to vector<976x128xf32>
    %5 = arith.addf %2, %4 : vector<976x128xf32>
    %cst_5 = arith.constant 0.000000e+00 : f32
    %6 = vector.broadcast %cst_5 : f32 to vector<976x128xf32>
    %7 = arith.cmpf oge, %5, %6 : vector<976x128xf32>
    %cst_6 = arith.constant 2.000000e-01 : f32
    %8 = vector.broadcast %cst_6 : f32 to vector<976x128xf32>
    %9 = arith.mulf %8, %5 : vector<976x128xf32>
    %10 = arith.select %7, %5, %9 : vector<976x128xi1>, vector<976x128xf32>
    %11 = arith.truncf %10 : vector<976x128xf32> to vector<976x128xbf16>
    %c0_7 = arith.constant 0 : index
    %c0_8 = arith.constant 0 : index
    %12 = vector.load %arg4[%c0_7, %c0_8] : memref<976x128xbf16, #tpu.memory_space<vmem>>, vector<976x128xbf16>
    tpu.vector_store %arg4[%c0_7, %c0_8], %11 {strides = array<i32>} : memref<976x128xbf16, #tpu.memory_space<vmem>>, vector<976x128xbf16>,
    return
  }
  func.func @transform_0(%arg0: i32) -> (i32, i32) {
    %c0_i32 = arith.constant 0 : i32
    %c0_i32_0 = arith.constant 0 : i32
    return %arg0, %c0_i32 : i32, i32
  }
  func.func @transform_1(%arg0: i32) -> (i32, i32) {
    %c0_i32 = arith.constant 0 : i32
    %c0_i32_0 = arith.constant 0 : i32
    %c0_i32_1 = arith.constant 0 : i32
    return %c0_i32, %c0_i32_0 : i32, i32
  }
  func.func @transform_2(%arg0: i32) -> (i32, i32) {
    %c0_i32 = arith.constant 0 : i32
    %c0_i32_0 = arith.constant 0 : i32
    %c0_i32_1 = arith.constant 0 : i32
    return %c0_i32, %c0_i32_0 : i32, i32
  }
  func.func @transform_3(%arg0: i32) -> (i32, i32) {
    %c0_i32 = arith.constant 0 : i32
    %c0_i32_0 = arith.constant 0 : i32
    return %arg0, %c0_i32 : i32, i32
  }
}

module attributes {stable_mosaic.version = 11 : i64} {
  func.func @_conv_mm_kernel(%arg0: i32, %arg1: memref<400x128xbf16, #tpu.memory_space<vmem>>, %arg2: memref<128x128xbf16, #tpu.memory_space<vmem>>, %arg3: memref<1x128xf32, #tpu.memory_space<vmem>>, %arg4: memref<400x128xbf16, #tpu.memory_space<vmem>>) attributes {dimension_semantics = [#tpu.dimension_semantics<parallel>], iteration_bounds = array<i64: 2>, scalar_prefetch = 0 : i64, scratch_operands = 0 : i64, tpu.core_type = #tpu.core_type<tc>, window_params = [{transform_indices = @transform_0, window_bounds = array<i64: 400, 128>}, {pipeline_mode = #tpu.pipeline_mode<synchronous>, transform_indices = @transform_1, window_bounds = array<i64: 128, 128>}, {pipeline_mode = #tpu.pipeline_mode<synchronous>, transform_indices = @transform_2, window_bounds = array<i64: 1, 128>}, {transform_indices = @transform_3, window_bounds = array<i64: 400, 128>}]} {
    %c0 = arith.constant 0 : index
    %c0_0 = arith.constant 0 : index
    %0 = vector.load %arg1[%c0, %c0_0] : memref<400x128xbf16, #tpu.memory_space<vmem>>, vector<400x128xbf16>
    %c0_1 = arith.constant 0 : index
    %c0_2 = arith.constant 0 : index
    %1 = vector.load %arg2[%c0_1, %c0_2] : memref<128x128xbf16, #tpu.memory_space<vmem>>, vector<128x128xbf16>
    %cst = arith.constant dense<0.000000e+00> : vector<400x128xf32>
    %2 = tpu.matmul %0, %1, %cst {dimension_numbers = #tpu.dot_dimension_numbers<[1], [0], [0], [1], [0, 0, 1, 1], [], []>} : vector<400x128xbf16>, vector<128x128xbf16>, vector<400x128xf32> -> vector<400x128xf32>
    %c0_3 = arith.constant 0 : index
    %c0_4 = arith.constant 0 : index
    %3 = vector.load %arg3[%c0_3, %c0_4] : memref<1x128xf32, #tpu.memory_space<vmem>>, vector<1x128xf32>
    %4 = vector.broadcast %3 : vector<1x128xf32> to vector<400x128xf32>
    %5 = arith.addf %2, %4 : vector<400x128xf32>
    %cst_5 = arith.constant 0.000000e+00 : f32
    %6 = vector.broadcast %cst_5 : f32 to vector<400x128xf32>
    %7 = arith.cmpf oge, %5, %6 : vector<400x128xf32>
    %cst_6 = arith.constant 2.000000e-01 : f32
    %8 = vector.broadcast %cst_6 : f32 to vector<400x128xf32>
    %9 = arith.mulf %8, %5 : vector<400x128xf32>
    %10 = arith.select %7, %5, %9 : vector<400x128xi1>, vector<400x128xf32>
    %11 = arith.truncf %10 : vector<400x128xf32> to vector<400x128xbf16>
    %c0_7 = arith.constant 0 : index
    %c0_8 = arith.constant 0 : index
    %12 = vector.load %arg4[%c0_7, %c0_8] : memref<400x128xbf16, #tpu.memory_space<vmem>>, vector<400x128xbf16>
    tpu.vector_store %arg4[%c0_7, %c0_8], %11 {strides = array<i32>} : memref<400x128xbf16, #tpu.memory_space<vmem>>, vector<400x128xbf16>,
    return
  }
  func.func @transform_0(%arg0: i32) -> (i32, i32) {
    %c0_i32 = arith.constant 0 : i32
    %c0_i32_0 = arith.constant 0 : i32
    return %arg0, %c0_i32 : i32, i32
  }
  func.func @transform_1(%arg0: i32) -> (i32, i32) {
    %c0_i32 = arith.constant 0 : i32
    %c0_i32_0 = arith.constant 0 : i32
    %c0_i32_1 = arith.constant 0 : i32
    return %c0_i32, %c0_i32_0 : i32, i32
  }
  func.func @transform_2(%arg0: i32) -> (i32, i32) {
    %c0_i32 = arith.constant 0 : i32
    %c0_i32_0 = arith.constant 0 : i32
    %c0_i32_1 = arith.constant 0 : i32
    return %c0_i32, %c0_i32_0 : i32, i32
  }
  func.func @transform_3(%arg0: i32) -> (i32, i32) {
    %c0_i32 = arith.constant 0 : i32
    %c0_i32_0 = arith.constant 0 : i32
    return %arg0, %c0_i32 : i32, i32
  }
}

module attributes {stable_mosaic.version = 11 : i64} {
  func.func @_conv_mm_kernel(%arg0: i32, %arg1: memref<128x256xbf16, #tpu.memory_space<vmem>>, %arg2: memref<256x128xbf16, #tpu.memory_space<vmem>>, %arg3: memref<1x128xf32, #tpu.memory_space<vmem>>, %arg4: memref<128x128xbf16, #tpu.memory_space<vmem>>) attributes {dimension_semantics = [#tpu.dimension_semantics<parallel>], iteration_bounds = array<i64: 2>, scalar_prefetch = 0 : i64, scratch_operands = 0 : i64, tpu.core_type = #tpu.core_type<tc>, window_params = [{transform_indices = @transform_0, window_bounds = array<i64: 128, 256>}, {pipeline_mode = #tpu.pipeline_mode<synchronous>, transform_indices = @transform_1, window_bounds = array<i64: 256, 128>}, {pipeline_mode = #tpu.pipeline_mode<synchronous>, transform_indices = @transform_2, window_bounds = array<i64: 1, 128>}, {transform_indices = @transform_3, window_bounds = array<i64: 128, 128>}]} {
    %c0 = arith.constant 0 : index
    %c0_0 = arith.constant 0 : index
    %0 = vector.load %arg1[%c0, %c0_0] : memref<128x256xbf16, #tpu.memory_space<vmem>>, vector<128x256xbf16>
    %c0_1 = arith.constant 0 : index
    %c0_2 = arith.constant 0 : index
    %1 = vector.load %arg2[%c0_1, %c0_2] : memref<256x128xbf16, #tpu.memory_space<vmem>>, vector<256x128xbf16>
    %cst = arith.constant dense<0.000000e+00> : vector<128x128xf32>
    %2 = tpu.matmul %0, %1, %cst {dimension_numbers = #tpu.dot_dimension_numbers<[1], [0], [0], [1], [0, 0, 1, 1], [], []>} : vector<128x256xbf16>, vector<256x128xbf16>, vector<128x128xf32> -> vector<128x128xf32>
    %c0_3 = arith.constant 0 : index
    %c0_4 = arith.constant 0 : index
    %3 = vector.load %arg3[%c0_3, %c0_4] : memref<1x128xf32, #tpu.memory_space<vmem>>, vector<1x128xf32>
    %4 = vector.broadcast %3 : vector<1x128xf32> to vector<128x128xf32>
    %5 = arith.addf %2, %4 : vector<128x128xf32>
    %cst_5 = arith.constant 0.000000e+00 : f32
    %6 = vector.broadcast %cst_5 : f32 to vector<128x128xf32>
    %7 = arith.cmpf oge, %5, %6 : vector<128x128xf32>
    %cst_6 = arith.constant 2.000000e-01 : f32
    %8 = vector.broadcast %cst_6 : f32 to vector<128x128xf32>
    %9 = arith.mulf %8, %5 : vector<128x128xf32>
    %10 = arith.select %7, %5, %9 : vector<128x128xi1>, vector<128x128xf32>
    %11 = arith.truncf %10 : vector<128x128xf32> to vector<128x128xbf16>
    %c0_7 = arith.constant 0 : index
    %c0_8 = arith.constant 0 : index
    %12 = vector.load %arg4[%c0_7, %c0_8] : memref<128x128xbf16, #tpu.memory_space<vmem>>, vector<128x128xbf16>
    tpu.vector_store %arg4[%c0_7, %c0_8], %11 {strides = array<i32>} : memref<128x128xbf16, #tpu.memory_space<vmem>>, vector<128x128xbf16>,
    return
  }
  func.func @transform_0(%arg0: i32) -> (i32, i32) {
    %c0_i32 = arith.constant 0 : i32
    %c0_i32_0 = arith.constant 0 : i32
    return %arg0, %c0_i32 : i32, i32
  }
  func.func @transform_1(%arg0: i32) -> (i32, i32) {
    %c0_i32 = arith.constant 0 : i32
    %c0_i32_0 = arith.constant 0 : i32
    %c0_i32_1 = arith.constant 0 : i32
    return %c0_i32, %c0_i32_0 : i32, i32
  }
  func.func @transform_2(%arg0: i32) -> (i32, i32) {
    %c0_i32 = arith.constant 0 : i32
    %c0_i32_0 = arith.constant 0 : i32
    %c0_i32_1 = arith.constant 0 : i32
    return %c0_i32, %c0_i32_0 : i32, i32
  }
  func.func @transform_3(%arg0: i32) -> (i32, i32) {
    %c0_i32 = arith.constant 0 : i32
    %c0_i32_0 = arith.constant 0 : i32
    return %arg0, %c0_i32 : i32, i32
  }
}

module attributes {stable_mosaic.version = 11 : i64} {
  func.func @_conv_mm_kernel(%arg0: i32, %arg1: memref<144x512xbf16, #tpu.memory_space<vmem>>, %arg2: memref<512x128xbf16, #tpu.memory_space<vmem>>, %arg3: memref<1x128xf32, #tpu.memory_space<vmem>>, %arg4: memref<144x128xbf16, #tpu.memory_space<vmem>>) attributes {dimension_semantics = [#tpu.dimension_semantics<parallel>], iteration_bounds = array<i64: 2>, scalar_prefetch = 0 : i64, scratch_operands = 0 : i64, tpu.core_type = #tpu.core_type<tc>, window_params = [{transform_indices = @transform_0, window_bounds = array<i64: 144, 512>}, {pipeline_mode = #tpu.pipeline_mode<synchronous>, transform_indices = @transform_1, window_bounds = array<i64: 512, 128>}, {pipeline_mode = #tpu.pipeline_mode<synchronous>, transform_indices = @transform_2, window_bounds = array<i64: 1, 128>}, {transform_indices = @transform_3, window_bounds = array<i64: 144, 128>}]} {
    %c0 = arith.constant 0 : index
    %c0_0 = arith.constant 0 : index
    %0 = vector.load %arg1[%c0, %c0_0] : memref<144x512xbf16, #tpu.memory_space<vmem>>, vector<144x512xbf16>
    %c0_1 = arith.constant 0 : index
    %c0_2 = arith.constant 0 : index
    %1 = vector.load %arg2[%c0_1, %c0_2] : memref<512x128xbf16, #tpu.memory_space<vmem>>, vector<512x128xbf16>
    %cst = arith.constant dense<0.000000e+00> : vector<144x128xf32>
    %2 = tpu.matmul %0, %1, %cst {dimension_numbers = #tpu.dot_dimension_numbers<[1], [0], [0], [1], [0, 0, 1, 1], [], []>} : vector<144x512xbf16>, vector<512x128xbf16>, vector<144x128xf32> -> vector<144x128xf32>
    %c0_3 = arith.constant 0 : index
    %c0_4 = arith.constant 0 : index
    %3 = vector.load %arg3[%c0_3, %c0_4] : memref<1x128xf32, #tpu.memory_space<vmem>>, vector<1x128xf32>
    %4 = vector.broadcast %3 : vector<1x128xf32> to vector<144x128xf32>
    %5 = arith.addf %2, %4 : vector<144x128xf32>
    %cst_5 = arith.constant 0.000000e+00 : f32
    %6 = vector.broadcast %cst_5 : f32 to vector<144x128xf32>
    %7 = arith.cmpf oge, %5, %6 : vector<144x128xf32>
    %cst_6 = arith.constant 2.000000e-01 : f32
    %8 = vector.broadcast %cst_6 : f32 to vector<144x128xf32>
    %9 = arith.mulf %8, %5 : vector<144x128xf32>
    %10 = arith.select %7, %5, %9 : vector<144x128xi1>, vector<144x128xf32>
    %11 = arith.truncf %10 : vector<144x128xf32> to vector<144x128xbf16>
    %c0_7 = arith.constant 0 : index
    %c0_8 = arith.constant 0 : index
    %12 = vector.load %arg4[%c0_7, %c0_8] : memref<144x128xbf16, #tpu.memory_space<vmem>>, vector<144x128xbf16>
    tpu.vector_store %arg4[%c0_7, %c0_8], %11 {strides = array<i32>} : memref<144x128xbf16, #tpu.memory_space<vmem>>, vector<144x128xbf16>,
    return
  }
  func.func @transform_0(%arg0: i32) -> (i32, i32) {
    %c0_i32 = arith.constant 0 : i32
    %c0_i32_0 = arith.constant 0 : i32
    return %arg0, %c0_i32 : i32, i32
  }
  func.func @transform_1(%arg0: i32) -> (i32, i32) {
    %c0_i32 = arith.constant 0 : i32
    %c0_i32_0 = arith.constant 0 : i32
    %c0_i32_1 = arith.constant 0 : i32
    return %c0_i32, %c0_i32_0 : i32, i32
  }
  func.func @transform_2(%arg0: i32) -> (i32, i32) {
    %c0_i32 = arith.constant 0 : i32
    %c0_i32_0 = arith.constant 0 : i32
    %c0_i32_1 = arith.constant 0 : i32
    return %c0_i32, %c0_i32_0 : i32, i32
  }
  func.func @transform_3(%arg0: i32) -> (i32, i32) {
    %c0_i32 = arith.constant 0 : i32
    %c0_i32_0 = arith.constant 0 : i32
    return %arg0, %c0_i32 : i32, i32
  }
}

</mosaic_0001>

<llo_original>
// kernel: fc_discriminator_forward.4
$region0: #{fc_discriminator_forward.4}
  #allocation0 [shape = 'u32[]', space=smem, size = 0x4, offset = 0x4, fixed_abs, tag = 'smem constant byte address 0x4 - core index']
  #allocation1 [shape = 'u32[144,128]{1,0:T(1,128)}', space=vmem, size = 0x12000, scoped, tag = 'internal scratch']
  %s0 = inlined_call_operand.vmem [shape: bf16[2928,128], index: 0, kind: input, shape index: {}]
  %s1 = inlined_call_operand.vmem [shape: bf16[128,128], index: 1, kind: input, shape index: {}]
  %s2 = inlined_call_operand.vmem [shape: f32[1,128], index: 2, kind: input, shape index: {}]
  %s3 = inlined_call_operand.vmem [shape: bf16[2928,128], index: 3, kind: output, shape index: {}]
  %s4 = sld [smem:[#allocation0]]
  $region45: #{fc_discriminator_forward.4} parent=0
    _
  %s6 = ssub.s32 1, %s4
  %s7 = scalar_select 0, %s6, %s4
  loop: start=0, step=1, limit=5
  $region2: #{fc_discriminator_forward.4} parent=0 // loop_pre_header
    _
  $region3: #{fc_discriminator_forward.4} parent=0 // loop_header
    %s9 = sphi 0, %s13
    %p10 = scmp.ge.s32.totalorder %s9, 5
    %s19 = sphi 0, %s21
    %s22 = sphi 0, %s19
    %s23 = sphi 0, %s22
    %s39 = sphi 0, %s23
    %s43 = sphi 0, %s43
    %s45 = sphi 0, %s43
    %s46 = sphi 0, %s45
    %s60 = sphi 0, %s46
    %s64 = sphi 0, %s64
    %s66 = sphi 0, %s64
    %s67 = sphi 0, %s66
    %s81 = sphi 0, %s67
    %s87 = sphi 0, %s89
    %s90 = sphi 0, %s87
    %s91 = sphi 0, %s90
    %s107 = sphi 0, %s91
  $region4: #{fc_discriminator_forward.4} parent=0 // loop_header_branch
    %12 = sbr.rel (%p10) target = $region8
  $region5: #{fc_discriminator_forward.4} parent=0 // loop_body
    %s14 = ssub.s32 %s9, 1
    %s15 = ssub.s32 %s9, 2
    %s16 = sadd.s32 %s9, 1
    %s17 = ssub.s32 %s9, %s16
    %p18 = scmp.eq.s32.totalorder %s17, 0
    %s20 = sadd.s32 %s19, 1
    %s21 = scalar_select %p18, %s19, %s20
    %p24 = pneg %p18
    %p25 = scmp.eq.s32.totalorder %s9, 2
    %p26 = por %p24, %p25
    %p27 = scmp.ne.s32.totalorder %s19, %s22
    %p28 = scmp.eq.s32.totalorder %s9, 0
    %p29 = por %p27, %p28
    %p30 = scmp.ne.s32.totalorder %s19, %s22
    %p31 = scmp.eq.s32.totalorder %s14, 2
    %p32 = por %p30, %p31
    %p33 = scmp.ne.s32.totalorder %s22, %s23
    %p34 = scmp.eq.s32.totalorder %s14, 0
    %p35 = por %p33, %p34
    %p36 = scmp.ne.s32.totalorder %s22, %s23
    %p37 = scmp.eq.s32.totalorder %s15, 2
    %p38 = por %p36, %p37
    %p40 = scmp.ne.s32.totalorder %s23, %s39
    %p41 = scmp.eq.s32.totalorder %s15, 0
    %p42 = por %p40, %p41
    %s44 = sadd.s32 %s43, 1
    %p47 = scmp.eq.s32.totalorder %s9, 2
    %p48 = scmp.ne.s32.totalorder %s43, %s45
    %p49 = scmp.eq.s32.totalorder %s9, 0
    %p50 = por %p48, %p49
    %p51 = scmp.ne.s32.totalorder %s43, %s45
    %p52 = scmp.eq.s32.totalorder %s14, 2
    %p53 = por %p51, %p52
    %p54 = scmp.ne.s32.totalorder %s45, %s46
    %p55 = scmp.eq.s32.totalorder %s14, 0
    %p56 = por %p54, %p55
    %p57 = scmp.ne.s32.totalorder %s45, %s46
    %p58 = scmp.eq.s32.totalorder %s15, 2
    %p59 = por %p57, %p58
    %p61 = scmp.ne.s32.totalorder %s46, %s60
    %p62 = scmp.eq.s32.totalorder %s15, 0
    %p63 = por %p61, %p62
    %s65 = sadd.s32 %s64, 1
    %p68 = scmp.eq.s32.totalorder %s9, 2
    %p69 = scmp.ne.s32.totalorder %s64, %s66
    %p70 = scmp.eq.s32.totalorder %s9, 0
    %p71 = por %p69, %p70
    %p72 = scmp.ne.s32.totalorder %s64, %s66
    %p73 = scmp.eq.s32.totalorder %s14, 2
    %p74 = por %p72, %p73
    %p75 = scmp.ne.s32.totalorder %s66, %s67
    %p76 = scmp.eq.s32.totalorder %s14, 0
    %p77 = por %p75, %p76
    %p78 = scmp.ne.s32.totalorder %s66, %s67
    %p79 = scmp.eq.s32.totalorder %s15, 2
    %p80 = por %p78, %p79
    %p82 = scmp.ne.s32.totalorder %s67, %s81
    %p83 = scmp.eq.s32.totalorder %s15, 0
    %p84 = por %p82, %p83
    %s85 = ssub.s32 %s9, %s16
    %p86 = scmp.eq.s32.totalorder %s85, 0
    %s88 = sadd.s32 %s87, 1
    %s89 = scalar_select %p86, %s87, %s88
    %p92 = pneg %p86
    %p93 = scmp.eq.s32.totalorder %s9, 2
    %p94 = por %p92, %p93
    %p95 = scmp.ne.s32.totalorder %s87, %s90
    %p96 = scmp.eq.s32.totalorder %s9, 0
    %p97 = por %p95, %p96
    %p98 = scmp.ne.s32.totalorder %s87, %s90
    %p99 = scmp.eq.s32.totalorder %s14, 2
    %p100 = por %p98, %p99
    %p101 = scmp.ne.s32.totalorder %s90, %s91
    %p102 = scmp.eq.s32.totalorder %s14, 0
    %p103 = por %p101, %p102
    %p104 = scmp.ne.s32.totalorder %s90, %s91
    %p105 = scmp.eq.s32.totalorder %s15, 2
    %p106 = por %p104, %p105
    %p108 = scmp.ne.s32.totalorder %s91, %s107
    %p109 = scmp.eq.s32.totalorder %s15, 0
    %p110 = por %p108, %p109
    %p111 = scmp.le.s32.totalorder 1, %s9
    %p112 = scmp.lt.s32.totalorder %s9, 4
    %p113 = pnand %p111, %p112
    %p114 = pneg %p113
    // Predicated region
    $region9: #{fc_discriminator_forward.4} parent=5 // pred_check
      _
    $region10: #{fc_discriminator_forward.4} parent=5 // pred_check_branch
      %116 = sbr.rel (%p113) target = $region12
    $region11: #{fc_discriminator_forward.4} parent=5 // pred_region
      %s117 = ssub.s32 %s9, 1
      // Predicated region
      $region13: #{fc_discriminator_forward.4} parent=11 // pred_check
        %p118 = pneg %p56
      $region14: #{fc_discriminator_forward.4} parent=11 // pred_check_branch
        %120 = sbr.rel (%p118) target = $region16
      $region15: #{fc_discriminator_forward.4} parent=11 // pred_region
        _
      $region16: #{fc_discriminator_forward.4} parent=11 // pred_fallthru
        _
      // Predicated region
      $region17: #{fc_discriminator_forward.4} parent=11 // pred_check
        %p121 = pneg %p77
      $region18: #{fc_discriminator_forward.4} parent=11 // pred_check_branch
        %123 = sbr.rel (%p121) target = $region20
      $region19: #{fc_discriminator_forward.4} parent=11 // pred_region
        _
      $region20: #{fc_discriminator_forward.4} parent=11 // pred_fallthru
        _
    $region12: #{fc_discriminator_forward.4} parent=5 // pred_fallthru
      _
    %p124 = scmp.lt.s32.totalorder %s9, 3
    // Predicated region
    $region21: #{fc_discriminator_forward.4} parent=5 // pred_check
      %p125 = pneg %p124
    $region22: #{fc_discriminator_forward.4} parent=5 // pred_check_branch
      %127 = sbr.rel (%p125) target = $region24
    $region23: #{fc_discriminator_forward.4} parent=5 // pred_region
      // Predicated region
      $region25: #{fc_discriminator_forward.4} parent=23 // pred_check
        %p128 = pneg %p29
      $region26: #{fc_discriminator_forward.4} parent=23 // pred_check_branch
        %130 = sbr.rel (%p128) target = $region28
      $region27: #{fc_discriminator_forward.4} parent=23 // pred_region
        %s131 = smul.u32 122, %s9
        %p132 = scmp.lt.s32.totalorder %s131, 365
        %s133 = scalar_select %p132, %s131, 365
        %s134 = smul.addr %s133, 4
        %s135 = scalar_lea.vmem %s0, %s134
        %s136 = smul.u32 122, %s9
      $region28: #{fc_discriminator_forward.4} parent=23 // pred_fallthru
        _
    $region24: #{fc_discriminator_forward.4} parent=5 // pred_fallthru
      _
    %p137 = scmp.le.s32.totalorder 1, %s9
    %p138 = scmp.lt.s32.totalorder %s9, 4
    %p139 = pnand %p137, %p138
    %p140 = pneg %p139
    // Predicated region
    $region29: #{fc_discriminator_forward.4} parent=5 // pred_check
      _
    $region30: #{fc_discriminator_forward.4} parent=5 // pred_check_branch
      %142 = sbr.rel (%p139) target = $region32
    $region31: #{fc_discriminator_forward.4} parent=5 // pred_region
      %s143 = ssub.s32 %s9, 1
      %s144 = smul.u32 122, %s14
      %p145 = scmp.lt.s32.totalorder %s144, 365
      %s146 = scalar_select %p145, %s144, 365
      %s147 = smul.addr %s146, 4
      %s148 = scalar_lea.vmem %s0, %s147
      %p149 = pneg %p35
      %p150 = pneg %p32
      %p151 = pneg %p56
      %p152 = pneg %p53
      %p153 = pneg %p77
      %p154 = pneg %p74
      %p155 = pneg %p103
      %p156 = pneg %p100
      %s157 = smul.u32 122, %s14
      %p158 = scmp.lt.s32.totalorder %s157, 365
      %s159 = scalar_select %p158, %s157, 365
      %s160 = smul.addr %s159, 4
      %s161 = scalar_lea.vmem %s3, %s160
      %s162 = smul.u32 122, %s14
      %p163 = scmp.lt.s32.totalorder %s162, 365
      %s164 = scalar_select %p163, %s162, 365
      %s165 = smul.addr %s164, 4
      %s166 = scalar_lea.vmem %s0, %s165
      %s167 = smul.u32 122, %s14
      %s168 = smul.u32 122, %s14
      %p169 = scmp.lt.s32.totalorder %s168, 365
      %s170 = scalar_select %p169, %s168, 365
      %s171 = smul.addr %s170, 4
      %s172 = scalar_lea.vmem %s3, %s171
      %s173 = smul.u32 122, %s14
      %v175 = vld [vmem:[%s166] sm:$0xf]
      %v176 = vld [vmem:[%s166 + $0x4] sm:$0xf]
      %v177 = vld [vmem:[%s166 + $0x8] sm:$0xf]
      %v178 = vld [vmem:[%s166 + $0xc] sm:$0xf]
      %v179 = vld [vmem:[%s166 + $0x10] sm:$0xf]
      %v180 = vld [vmem:[%s166 + $0x14] sm:$0xf]
      %v181 = vld [vmem:[%s166 + $0x18] sm:$0xf]
      %v182 = vld [vmem:[%s166 + $0x1c] sm:$0xf]
      %v183 = vld [vmem:[%s166 + $0x20] sm:$0xf]
      %v184 = vld [vmem:[%s166 + $0x24] sm:$0xf]
      %v185 = vld [vmem:[%s166 + $0x28] sm:$0xf]
      %v186 = vld [vmem:[%s166 + $0x2c] sm:$0xf]
      %v187 = vld [vmem:[%s166 + $0x30] sm:$0xf]
      %v188 = vld [vmem:[%s166 + $0x34] sm:$0xf]
      %v189 = vld [vmem:[%s166 + $0x38] sm:$0xf]
      %v190 = vld [vmem:[%s166 + $0x3c] sm:$0xf]
      %v191 = vld [vmem:[%s166 + $0x40] sm:$0xf]
      %v192 = vld [vmem:[%s166 + $0x44] sm:$0xf]
      %v193 = vld [vmem:[%s166 + $0x48] sm:$0xf]
      %v194 = vld [vmem:[%s166 + $0x4c] sm:$0xf]
      %v195 = vld [vmem:[%s166 + $0x50] sm:$0xf]
      %v196 = vld [vmem:[%s166 + $0x54] sm:$0xf]
      %v197 = vld [vmem:[%s166 + $0x58] sm:$0xf]
      %v198 = vld [vmem:[%s166 + $0x5c] sm:$0xf]
      %v199 = vld [vmem:[%s166 + $0x60] sm:$0xf]
      %v200 = vld [vmem:[%s166 + $0x64] sm:$0xf]
      %v201 = vld [vmem:[%s166 + $0x68] sm:$0xf]
      %v202 = vld [vmem:[%s166 + $0x6c] sm:$0xf]
      %v203 = vld [vmem:[%s166 + $0x70] sm:$0xf]
      %v204 = vld [vmem:[%s166 + $0x74] sm:$0xf]
      %v205 = vld [vmem:[%s166 + $0x78] sm:$0xf]
      %v206 = vld [vmem:[%s166 + $0x7c] sm:$0xf]
      %v207 = vld [vmem:[%s166 + $0x80] sm:$0xf]
      %v208 = vld [vmem:[%s166 + $0x84] sm:$0xf]
      %v209 = vld [vmem:[%s166 + $0x88] sm:$0xf]
      %v210 = vld [vmem:[%s166 + $0x8c] sm:$0xf]
      %v211 = vld [vmem:[%s166 + $0x90] sm:$0xf]
      %v212 = vld [vmem:[%s166 + $0x94] sm:$0xf]
      %v213 = vld [vmem:[%s166 + $0x98] sm:$0xf]
      %v214 = vld [vmem:[%s166 + $0x9c] sm:$0xf]
      %v215 = vld [vmem:[%s166 + $0xa0] sm:$0xf]
      %v216 = vld [vmem:[%s166 + $0xa4] sm:$0xf]
      %v217 = vld [vmem:[%s166 + $0xa8] sm:$0xf]
      %v218 = vld [vmem:[%s166 + $0xac] sm:$0xf]
      %v219 = vld [vmem:[%s166 + $0xb0] sm:$0xf]
      %v220 = vld [vmem:[%s166 + $0xb4] sm:$0xf]
      %v221 = vld [vmem:[%s166 + $0xb8] sm:$0xf]
      %v222 = vld [vmem:[%s166 + $0xbc] sm:$0xf]
      %v223 = vld [vmem:[%s166 + $0xc0] sm:$0xf]
      %v224 = vld [vmem:[%s166 + $0xc4] sm:$0xf]
      %v225 = vld [vmem:[%s166 + $0xc8] sm:$0xf]
      %v226 = vld [vmem:[%s166 + $0xcc] sm:$0xf]
      %v227 = vld [vmem:[%s166 + $0xd0] sm:$0xf]
      %v228 = vld [vmem:[%s166 + $0xd4] sm:$0xf]
      %v229 = vld [vmem:[%s166 + $0xd8] sm:$0xf]
      %v230 = vld [vmem:[%s166 + $0xdc] sm:$0xf]
      %v231 = vld [vmem:[%s166 + $0xe0] sm:$0xf]
      %v232 = vld [vmem:[%s166 + $0xe4] sm:$0xf]
      %v233 = vld [vmem:[%s166 + $0xe8] sm:$0xf]
      %v234 = vld [vmem:[%s166 + $0xec] sm:$0xf]
      %v235 = vld [vmem:[%s166 + $0xf0] sm:$0xf]
      %v236 = vld [vmem:[%s166 + $0xf4] sm:$0xf]
      %v237 = vld [vmem:[%s166 + $0xf8] sm:$0xf]
      %v238 = vld [vmem:[%s166 + $0xfc] sm:$0xf]
      %v239 = vld [vmem:[%s166 + $0x100] sm:$0xf]
      %v240 = vld [vmem:[%s166 + $0x104] sm:$0xf]
      %v241 = vld [vmem:[%s166 + $0x108] sm:$0xf]
      %v242 = vld [vmem:[%s166 + $0x10c] sm:$0xf]
      %v243 = vld [vmem:[%s166 + $0x110] sm:$0xf]
      %v244 = vld [vmem:[%s166 + $0x114] sm:$0xf]
      %v245 = vld [vmem:[%s166 + $0x118] sm:$0xf]
      %v246 = vld [vmem:[%s166 + $0x11c] sm:$0xf]
      %v247 = vld [vmem:[%s166 + $0x120] sm:$0xf]
      %v248 = vld [vmem:[%s166 + $0x124] sm:$0xf]
      %v249 = vld [vmem:[%s166 + $0x128] sm:$0xf]
      %v250 = vld [vmem:[%s166 + $0x12c] sm:$0xf]
      %v251 = vld [vmem:[%s166 + $0x130] sm:$0xf]
      %v252 = vld [vmem:[%s166 + $0x134] sm:$0xf]
      %v253 = vld [vmem:[%s166 + $0x138] sm:$0xf]
      %v254 = vld [vmem:[%s166 + $0x13c] sm:$0xf]
      %v255 = vld [vmem:[%s166 + $0x140] sm:$0xf]
      %v256 = vld [vmem:[%s166 + $0x144] sm:$0xf]
      %v257 = vld [vmem:[%s166 + $0x148] sm:$0xf]
      %v258 = vld [vmem:[%s166 + $0x14c] sm:$0xf]
      %v259 = vld [vmem:[%s166 + $0x150] sm:$0xf]
      %v260 = vld [vmem:[%s166 + $0x154] sm:$0xf]
      %v261 = vld [vmem:[%s166 + $0x158] sm:$0xf]
      %v262 = vld [vmem:[%s166 + $0x15c] sm:$0xf]
      %v263 = vld [vmem:[%s166 + $0x160] sm:$0xf]
      %v264 = vld [vmem:[%s166 + $0x164] sm:$0xf]
      %v265 = vld [vmem:[%s166 + $0x168] sm:$0xf]
      %v266 = vld [vmem:[%s166 + $0x16c] sm:$0xf]
      %v267 = vld [vmem:[%s166 + $0x170] sm:$0xf]
      %v268 = vld [vmem:[%s166 + $0x174] sm:$0xf]
      %v269 = vld [vmem:[%s166 + $0x178] sm:$0xf]
      %v270 = vld [vmem:[%s166 + $0x17c] sm:$0xf]
      %v271 = vld [vmem:[%s166 + $0x180] sm:$0xf]
      %v272 = vld [vmem:[%s166 + $0x184] sm:$0xf]
      %v273 = vld [vmem:[%s166 + $0x188] sm:$0xf]
      %v274 = vld [vmem:[%s166 + $0x18c] sm:$0xf]
      %v275 = vld [vmem:[%s166 + $0x190] sm:$0xf]
      %v276 = vld [vmem:[%s166 + $0x194] sm:$0xf]
      %v277 = vld [vmem:[%s166 + $0x198] sm:$0xf]
      %v278 = vld [vmem:[%s166 + $0x19c] sm:$0xf]
      %v279 = vld [vmem:[%s166 + $0x1a0] sm:$0xf]
      %v280 = vld [vmem:[%s166 + $0x1a4] sm:$0xf]
      %v281 = vld [vmem:[%s166 + $0x1a8] sm:$0xf]
      %v282 = vld [vmem:[%s166 + $0x1ac] sm:$0xf]
      %v283 = vld [vmem:[%s166 + $0x1b0] sm:$0xf]
      %v284 = vld [vmem:[%s166 + $0x1b4] sm:$0xf]
      %v285 = vld [vmem:[%s166 + $0x1b8] sm:$0xf]
      %v286 = vld [vmem:[%s166 + $0x1bc] sm:$0xf]
      %v287 = vld [vmem:[%s166 + $0x1c0] sm:$0xf]
      %v288 = vld [vmem:[%s166 + $0x1c4] sm:$0xf]
      %v289 = vld [vmem:[%s166 + $0x1c8] sm:$0xf]
      %v290 = vld [vmem:[%s166 + $0x1cc] sm:$0xf]
      %v291 = vld [vmem:[%s166 + $0x1d0] sm:$0xf]
      %v292 = vld [vmem:[%s166 + $0x1d4] sm:$0xf]
      %v293 = vld [vmem:[%s166 + $0x1d8] sm:$0xf]
      %v294 = vld [vmem:[%s166 + $0x1dc] sm:$0xf]
      %v295 = vld [vmem:[%s166 + $0x1e0] sm:$0xf]
      %v296 = vld [vmem:[%s166 + $0x1e4] sm:$0xf]
      %v297 = vld [vmem:[%s1] sm:$0xf]
      %v298 = vld [vmem:[%s1 + $0x4] sm:$0xf]
      %v299 = vld [vmem:[%s1 + $0x8] sm:$0xf]
      %v300 = vld [vmem:[%s1 + $0xc] sm:$0xf]
      %v301 = vld [vmem:[%s1 + $0x10] sm:$0xf]
      %v302 = vld [vmem:[%s1 + $0x14] sm:$0xf]
      %v303 = vld [vmem:[%s1 + $0x18] sm:$0xf]
      %v304 = vld [vmem:[%s1 + $0x1c] sm:$0xf]
      %v305 = vld [vmem:[%s1 + $0x20] sm:$0xf]
      %v306 = vld [vmem:[%s1 + $0x24] sm:$0xf]
      %v307 = vld [vmem:[%s1 + $0x28] sm:$0xf]
      %v308 = vld [vmem:[%s1 + $0x2c] sm:$0xf]
      %v309 = vld [vmem:[%s1 + $0x30] sm:$0xf]
      %v310 = vld [vmem:[%s1 + $0x34] sm:$0xf]
      %v311 = vld [vmem:[%s1 + $0x38] sm:$0xf]
      %v312 = vld [vmem:[%s1 + $0x3c] sm:$0xf]
      %v313 = vld [vmem:[%s2] sm:$0x1]
      %v315 = vlaneseq
      %v316 = vshrl.u32 %v315, 7
      %v317 = vsub.s32 0, %v316
      %v318 = vrot.slane %v313, %v317
      %v442 = vunpack.c.l.b16 %v175
      %v443 = vunpack.c.l.b16 %v176
      %v444 = vunpack.c.l.b16 %v177
      %v445 = vunpack.c.l.b16 %v178
      %v446 = vunpack.c.l.b16 %v179
      %v447 = vunpack.c.l.b16 %v180
      %v448 = vunpack.c.l.b16 %v181
      %v449 = vunpack.c.l.b16 %v182
      %v450 = vunpack.c.l.b16 %v183
      %v451 = vunpack.c.l.b16 %v184
      %v452 = vunpack.c.l.b16 %v185
      %v453 = vunpack.c.l.b16 %v186
      %v454 = vunpack.c.l.b16 %v187
      %v455 = vunpack.c.l.b16 %v188
      %v456 = vunpack.c.l.b16 %v189
      %v457 = vunpack.c.l.b16 %v190
      %v458 = vunpack.c.l.b16 %v191
      %v459 = vunpack.c.l.b16 %v192
      %v460 = vunpack.c.l.b16 %v193
      %v461 = vunpack.c.l.b16 %v194
      %v462 = vunpack.c.l.b16 %v195
      %v463 = vunpack.c.l.b16 %v196
      %v464 = vunpack.c.l.b16 %v197
      %v465 = vunpack.c.l.b16 %v198
      %v466 = vunpack.c.l.b16 %v199
      %v467 = vunpack.c.l.b16 %v200
      %v468 = vunpack.c.l.b16 %v201
      %v469 = vunpack.c.l.b16 %v202
      %v470 = vunpack.c.l.b16 %v203
      %v471 = vunpack.c.l.b16 %v204
      %v472 = vunpack.c.l.b16 %v205
      %v473 = vunpack.c.l.b16 %v206
      %v474 = vunpack.c.l.b16 %v207
      %v475 = vunpack.c.l.b16 %v208
      %v476 = vunpack.c.l.b16 %v209
      %v477 = vunpack.c.l.b16 %v210
      %v478 = vunpack.c.l.b16 %v211
      %v479 = vunpack.c.l.b16 %v212
      %v480 = vunpack.c.l.b16 %v213
      %v481 = vunpack.c.l.b16 %v214
      %v482 = vunpack.c.l.b16 %v215
      %v483 = vunpack.c.l.b16 %v216
      %v484 = vunpack.c.l.b16 %v217
      %v485 = vunpack.c.l.b16 %v218
      %v486 = vunpack.c.l.b16 %v219
      %v487 = vunpack.c.l.b16 %v220
      %v488 = vunpack.c.l.b16 %v221
      %v489 = vunpack.c.l.b16 %v222
      %v490 = vunpack.c.l.b16 %v223
      %v491 = vunpack.c.l.b16 %v224
      %v492 = vunpack.c.l.b16 %v225
      %v493 = vunpack.c.l.b16 %v226
      %v494 = vunpack.c.l.b16 %v227
      %v495 = vunpack.c.l.b16 %v228
      %v496 = vunpack.c.l.b16 %v229
      %v497 = vunpack.c.l.b16 %v230
      %v498 = vunpack.c.l.b16 %v231
      %v499 = vunpack.c.l.b16 %v232
      %v500 = vunpack.c.l.b16 %v233
      %v501 = vunpack.c.l.b16 %v234
      %v502 = vunpack.c.l.b16 %v235
      %v503 = vunpack.c.l.b16 %v236
      %v504 = vunpack.c.l.b16 %v237
      %v505 = vunpack.c.l.b16 %v238
      %v506 = vunpack.c.l.b16 %v239
      %v507 = vunpack.c.l.b16 %v240
      %v508 = vunpack.c.l.b16 %v241
      %v509 = vunpack.c.l.b16 %v242
      %v510 = vunpack.c.l.b16 %v243
      %v511 = vunpack.c.l.b16 %v244
      %v512 = vunpack.c.l.b16 %v245
      %v513 = vunpack.c.l.b16 %v246
      %v514 = vunpack.c.l.b16 %v247
      %v515 = vunpack.c.l.b16 %v248
      %v516 = vunpack.c.l.b16 %v249
      %v517 = vunpack.c.l.b16 %v250
      %v518 = vunpack.c.l.b16 %v251
      %v519 = vunpack.c.l.b16 %v252
      %v520 = vunpack.c.l.b16 %v253
      %v521 = vunpack.c.l.b16 %v254
      %v522 = vunpack.c.l.b16 %v255
      %v523 = vunpack.c.l.b16 %v256
      %v524 = vunpack.c.l.b16 %v257
      %v525 = vunpack.c.l.b16 %v258
      %v526 = vunpack.c.l.b16 %v259
      %v527 = vunpack.c.l.b16 %v260
      %v528 = vunpack.c.l.b16 %v261
      %v529 = vunpack.c.l.b16 %v262
      %v530 = vunpack.c.l.b16 %v263
      %v531 = vunpack.c.l.b16 %v264
      %v532 = vunpack.c.l.b16 %v265
      %v533 = vunpack.c.l.b16 %v266
      %v534 = vunpack.c.l.b16 %v267
      %v535 = vunpack.c.l.b16 %v268
      %v536 = vunpack.c.l.b16 %v269
      %v537 = vunpack.c.l.b16 %v270
      %v538 = vunpack.c.l.b16 %v271
      %v539 = vunpack.c.l.b16 %v272
      %v540 = vunpack.c.l.b16 %v273
      %v541 = vunpack.c.l.b16 %v274
      %v542 = vunpack.c.l.b16 %v275
      %v543 = vunpack.c.l.b16 %v276
      %v544 = vunpack.c.l.b16 %v277
      %v545 = vunpack.c.l.b16 %v278
      %v546 = vunpack.c.l.b16 %v279
      %v547 = vunpack.c.l.b16 %v280
      %v548 = vunpack.c.l.b16 %v281
      %v549 = vunpack.c.l.b16 %v282
      %v550 = vunpack.c.l.b16 %v283
      %v551 = vunpack.c.l.b16 %v284
      %v552 = vunpack.c.l.b16 %v285
      %v553 = vunpack.c.l.b16 %v286
      %v554 = vunpack.c.l.b16 %v287
      %v555 = vunpack.c.l.b16 %v288
      %v556 = vunpack.c.l.b16 %v289
      %v557 = vunpack.c.l.b16 %v290
      %v558 = vunpack.c.l.b16 %v291
      %v559 = vunpack.c.l.b16 %v292
      %v560 = vunpack.c.l.b16 %v293
      %v561 = vunpack.c.l.b16 %v294
      %v562 = vunpack.c.l.b16 %v295
      %v563 = vunpack.c.l.b16 %v296
      %v564 = vpack.c.b16 %v443, %v442
      %v565 = vpack.c.b16 %v445, %v444
      %v566 = vpack.c.b16 %v447, %v446
      %v567 = vpack.c.b16 %v449, %v448
      %v568 = vpack.c.b16 %v451, %v450
      %v569 = vpack.c.b16 %v453, %v452
      %v570 = vpack.c.b16 %v455, %v454
      %v571 = vpack.c.b16 %v457, %v456
      %v572 = vpack.c.b16 %v459, %v458
      %v573 = vpack.c.b16 %v461, %v460
      %v574 = vpack.c.b16 %v463, %v462
      %v575 = vpack.c.b16 %v465, %v464
      %v576 = vpack.c.b16 %v467, %v466
      %v577 = vpack.c.b16 %v469, %v468
      %v578 = vpack.c.b16 %v471, %v470
      %v579 = vpack.c.b16 %v473, %v472
      %v580 = vpack.c.b16 %v475, %v474
      %v581 = vpack.c.b16 %v477, %v476
      %v582 = vpack.c.b16 %v479, %v478
      %v583 = vpack.c.b16 %v481, %v480
      %v584 = vpack.c.b16 %v483, %v482
      %v585 = vpack.c.b16 %v485, %v484
      %v586 = vpack.c.b16 %v487, %v486
      %v587 = vpack.c.b16 %v489, %v488
      %v588 = vpack.c.b16 %v491, %v490
      %v589 = vpack.c.b16 %v493, %v492
      %v590 = vpack.c.b16 %v495, %v494
      %v591 = vpack.c.b16 %v497, %v496
      %v592 = vpack.c.b16 %v499, %v498
      %v593 = vpack.c.b16 %v501, %v500
      %v594 = vpack.c.b16 %v503, %v502
      %v595 = vpack.c.b16 %v505, %v504
      %v596 = vpack.c.b16 %v507, %v506
      %v597 = vpack.c.b16 %v509, %v508
      %v598 = vpack.c.b16 %v511, %v510
      %v599 = vpack.c.b16 %v513, %v512
      %v600 = vpack.c.b16 %v515, %v514
      %v601 = vpack.c.b16 %v517, %v516
      %v602 = vpack.c.b16 %v519, %v518
      %v603 = vpack.c.b16 %v521, %v520
      %v604 = vpack.c.b16 %v523, %v522
      %v605 = vpack.c.b16 %v525, %v524
      %v606 = vpack.c.b16 %v527, %v526
      %v607 = vpack.c.b16 %v529, %v528
      %v608 = vpack.c.b16 %v531, %v530
      %v609 = vpack.c.b16 %v533, %v532
      %v610 = vpack.c.b16 %v535, %v534
      %v611 = vpack.c.b16 %v537, %v536
      %v612 = vpack.c.b16 %v539, %v538
      %v613 = vpack.c.b16 %v541, %v540
      %v614 = vpack.c.b16 %v543, %v542
      %v615 = vpack.c.b16 %v545, %v544
      %v616 = vpack.c.b16 %v547, %v546
      %v617 = vpack.c.b16 %v549, %v548
      %v618 = vpack.c.b16 %v551, %v550
      %v619 = vpack.c.b16 %v553, %v552
      %v620 = vpack.c.b16 %v555, %v554
      %v621 = vpack.c.b16 %v557, %v556
      %v622 = vpack.c.b16 %v559, %v558
      %v623 = vpack.c.b16 %v561, %v560
      %v624 = vpack.c.b16 %v563, %v562
      %v702 = vunpack.c.l.b16 %v297
      %v703 = vunpack.c.l.b16 %v298
      %v704 = vunpack.c.l.b16 %v299
      %v705 = vunpack.c.l.b16 %v300
      %v706 = vunpack.c.l.b16 %v301
      %v707 = vunpack.c.l.b16 %v302
      %v708 = vunpack.c.l.b16 %v303
      %v709 = vunpack.c.l.b16 %v304
      %v710 = vunpack.c.l.b16 %v305
      %v711 = vunpack.c.l.b16 %v306
      %v712 = vunpack.c.l.b16 %v307
      %v713 = vunpack.c.l.b16 %v308
      %v714 = vunpack.c.l.b16 %v309
      %v715 = vunpack.c.l.b16 %v310
      %v716 = vunpack.c.l.b16 %v311
      %v717 = vunpack.c.l.b16 %v312
      %v718 = vpack.c.b16 %v703, %v702
      %v719 = vpack.c.b16 %v705, %v704
      %v720 = vpack.c.b16 %v707, %v706
      %v721 = vpack.c.b16 %v709, %v708
      %v722 = vpack.c.b16 %v711, %v710
      %v723 = vpack.c.b16 %v713, %v712
      %v724 = vpack.c.b16 %v715, %v714
      %v725 = vpack.c.b16 %v717, %v716
      %734 = vmatprep.subr.bf16.mxu0 0
      %735 = vmatpush1.bf16.msra.mxu0 %v718
      %736 = vmatprep.subr.bf16.mxu0 0
      %737 = vmatpush1.bf16.msra.mxu0 %v719
      %738 = vmatprep.subr.bf16.mxu0 0
      %739 = vmatpush1.bf16.msra.mxu0 %v720
      %740 = vmatprep.subr.bf16.mxu0 0
      %741 = vmatpush1.bf16.msra.mxu0 %v721
      %742 = vmatprep.subr.bf16.mxu0 0
      %743 = vmatpush1.bf16.msra.mxu0 %v722
      %744 = vmatprep.subr.bf16.mxu0 0
      %745 = vmatpush1.bf16.msra.mxu0 %v723
      %746 = vmatprep.subr.bf16.mxu0 0
      %747 = vmatpush1.bf16.msra.mxu0 %v724
      %748 = vmatprep.subr.bf16.mxu0 0
      %749 = vmatpush1.bf16.msra.mxu0 %v725
      %750 = vmatprep.subr.bf16.mxu0 0
      %751 = vmatpush1.bf16.msra.mxu0 0
      %752 = vmatprep.subr.bf16.mxu0 0
      %753 = vmatpush1.bf16.msra.mxu0 0
      %754 = vmatprep.subr.bf16.mxu0 0
      %755 = vmatpush1.bf16.msra.mxu0 0
      %756 = vmatprep.subr.bf16.mxu0 0
      %757 = vmatpush1.bf16.msra.mxu0 0
      %758 = vmatprep.subr.bf16.mxu0 0
      %759 = vmatpush1.bf16.msra.mxu0 0
      %760 = vmatprep.subr.bf16.mxu0 0
      %761 = vmatpush1.bf16.msra.mxu0 0
      %762 = vmatprep.subr.bf16.mxu0 0
      %763 = vmatpush1.bf16.msra.mxu0 0
      %764 = vmatprep.subr.bf16.mxu0 0
      %765 = vmatpush1.bf16.msra.mxu0 0
      %766 = vmatprep.mubr.bf16.mxu0 0
      %767 = vmatmul.mubr.bf16.gmra.mrb[0].mxu0 %v564
      %v768 = vpop.f32.mrb[0].mxu0
      %v769 = vadd.f32 %v318, %v768
      %v770 = vpop.f32.mrb[0].mxu0
      %v771 = vpop.f32.mrb[0].mxu0
      %v772 = vadd.f32 %v318, %v771
      %v773 = vpop.f32.mrb[0].mxu0
      %774 = vmatprep.mubr.bf16.mxu0 0
      %775 = vmatmul.mubr.bf16.gmra.mrb[0].mxu0 %v565
      %v776 = vpop.f32.mrb[0].mxu0
      %v777 = vadd.f32 %v318, %v776
      %v778 = vpop.f32.mrb[0].mxu0
      %v779 = vpop.f32.mrb[0].mxu0
      %v780 = vadd.f32 %v318, %v779
      %v781 = vpop.f32.mrb[0].mxu0
      %782 = vmatprep.mubr.bf16.mxu0 0
      %783 = vmatmul.mubr.bf16.gmra.mrb[0].mxu0 %v566
      %v784 = vpop.f32.mrb[0].mxu0
      %v785 = vadd.f32 %v318, %v784
      %v786 = vpop.f32.mrb[0].mxu0
      %v787 = vpop.f32.mrb[0].mxu0
      %v788 = vadd.f32 %v318, %v787
      %v789 = vpop.f32.mrb[0].mxu0
      %790 = vmatprep.mubr.bf16.mxu0 0
      %791 = vmatmul.mubr.bf16.gmra.mrb[0].mxu0 %v567
      %v792 = vpop.f32.mrb[0].mxu0
      %v793 = vadd.f32 %v318, %v792
      %v794 = vpop.f32.mrb[0].mxu0
      %v795 = vpop.f32.mrb[0].mxu0
      %v796 = vadd.f32 %v318, %v795
      %v797 = vpop.f32.mrb[0].mxu0
      %798 = vmatprep.mubr.bf16.mxu0 0
      %799 = vmatmul.mubr.bf16.gmra.mrb[0].mxu0 %v568
      %v800 = vpop.f32.mrb[0].mxu0
      %v801 = vadd.f32 %v318, %v800
      %v802 = vpop.f32.mrb[0].mxu0
      %v803 = vpop.f32.mrb[0].mxu0
      %v804 = vadd.f32 %v318, %v803
      %v805 = vpop.f32.mrb[0].mxu0
      %806 = vmatprep.mubr.bf16.mxu0 0
      %807 = vmatmul.mubr.bf16.gmra.mrb[0].mxu0 %v569
      %v808 = vpop.f32.mrb[0].mxu0
      %v809 = vadd.f32 %v318, %v808
      %v810 = vpop.f32.mrb[0].mxu0
      %v811 = vpop.f32.mrb[0].mxu0
      %v812 = vadd.f32 %v318, %v811
      %v813 = vpop.f32.mrb[0].mxu0
      %814 = vmatprep.mubr.bf16.mxu0 0
      %815 = vmatmul.mubr.bf16.gmra.mrb[0].mxu0 %v570
      %v816 = vpop.f32.mrb[0].mxu0
      %v817 = vadd.f32 %v318, %v816
      %v818 = vpop.f32.mrb[0].mxu0
      %v819 = vpop.f32.mrb[0].mxu0
      %v820 = vadd.f32 %v318, %v819
      %v821 = vpop.f32.mrb[0].mxu0
      %822 = vmatprep.mubr.bf16.mxu0 0
      %823 = vmatmul.mubr.bf16.gmra.mrb[0].mxu0 %v571
      %v824 = vpop.f32.mrb[0].mxu0
      %v825 = vadd.f32 %v318, %v824
      %v826 = vpop.f32.mrb[0].mxu0
      %v827 = vpop.f32.mrb[0].mxu0
      %v828 = vadd.f32 %v318, %v827
      %v829 = vpop.f32.mrb[0].mxu0
      %830 = vmatprep.mubr.bf16.mxu0 0
      %831 = vmatmul.mubr.bf16.gmra.mrb[0].mxu0 %v572
      %v832 = vpop.f32.mrb[0].mxu0
      %v833 = vadd.f32 %v318, %v832
      %v834 = vpop.f32.mrb[0].mxu0
      %v835 = vpop.f32.mrb[0].mxu0
      %v836 = vadd.f32 %v318, %v835
      %v837 = vpop.f32.mrb[0].mxu0
      %838 = vmatprep.mubr.bf16.mxu0 0
      %839 = vmatmul.mubr.bf16.gmra.mrb[0].mxu0 %v573
      %v840 = vpop.f32.mrb[0].mxu0
      %v841 = vadd.f32 %v318, %v840
      %v842 = vpop.f32.mrb[0].mxu0
      %v843 = vpop.f32.mrb[0].mxu0
      %v844 = vadd.f32 %v318, %v843
      %v845 = vpop.f32.mrb[0].mxu0
      %846 = vmatprep.mubr.bf16.mxu0 0
      %847 = vmatmul.mubr.bf16.gmra.mrb[0].mxu0 %v574
      %v848 = vpop.f32.mrb[0].mxu0
      %v849 = vadd.f32 %v318, %v848
      %v850 = vpop.f32.mrb[0].mxu0
      %v851 = vpop.f32.mrb[0].mxu0
      %v852 = vadd.f32 %v318, %v851
      %v853 = vpop.f32.mrb[0].mxu0
      %854 = vmatprep.mubr.bf16.mxu0 0
      %855 = vmatmul.mubr.bf16.gmra.mrb[0].mxu0 %v575
      %v856 = vpop.f32.mrb[0].mxu0
      %v857 = vadd.f32 %v318, %v856
      %v858 = vpop.f32.mrb[0].mxu0
      %v859 = vpop.f32.mrb[0].mxu0
      %v860 = vadd.f32 %v318, %v859
      %v861 = vpop.f32.mrb[0].mxu0
      %862 = vmatprep.mubr.bf16.mxu0 0
      %863 = vmatmul.mubr.bf16.gmra.mrb[0].mxu0 %v576
      %v864 = vpop.f32.mrb[0].mxu0
      %v865 = vadd.f32 %v318, %v864
      %v866 = vpop.f32.mrb[0].mxu0
      %v867 = vpop.f32.mrb[0].mxu0
      %v868 = vadd.f32 %v318, %v867
      %v869 = vpop.f32.mrb[0].mxu0
      %870 = vmatprep.mubr.bf16.mxu0 0
      %871 = vmatmul.mubr.bf16.gmra.mrb[0].mxu0 %v577
      %v872 = vpop.f32.mrb[0].mxu0
      %v873 = vadd.f32 %v318, %v872
      %v874 = vpop.f32.mrb[0].mxu0
      %v875 = vpop.f32.mrb[0].mxu0
      %v876 = vadd.f32 %v318, %v875
      %v877 = vpop.f32.mrb[0].mxu0
      %878 = vmatprep.mubr.bf16.mxu0 0
      %879 = vmatmul.mubr.bf16.gmra.mrb[0].mxu0 %v578
      %v880 = vpop.f32.mrb[0].mxu0
      %v881 = vadd.f32 %v318, %v880
      %v882 = vpop.f32.mrb[0].mxu0
      %v883 = vpop.f32.mrb[0].mxu0
      %v884 = vadd.f32 %v318, %v883
      %v885 = vpop.f32.mrb[0].mxu0
      %886 = vmatprep.mubr.bf16.mxu0 0
      %887 = vmatmul.mubr.bf16.gmra.mrb[0].mxu0 %v579
      %v888 = vpop.f32.mrb[0].mxu0
      %v889 = vadd.f32 %v318, %v888
      %v890 = vpop.f32.mrb[0].mxu0
      %v891 = vpop.f32.mrb[0].mxu0
      %v892 = vadd.f32 %v318, %v891
      %v893 = vpop.f32.mrb[0].mxu0
      %894 = vmatprep.mubr.bf16.mxu0 0
      %895 = vmatmul.mubr.bf16.gmra.mrb[0].mxu0 %v580
      %v896 = vpop.f32.mrb[0].mxu0
      %v897 = vadd.f32 %v318, %v896
      %v898 = vpop.f32.mrb[0].mxu0
      %v899 = vpop.f32.mrb[0].mxu0
      %v900 = vadd.f32 %v318, %v899
      %v901 = vpop.f32.mrb[0].mxu0
      %902 = vmatprep.mubr.bf16.mxu0 0
      %903 = vmatmul.mubr.bf16.gmra.mrb[0].mxu0 %v581
      %v904 = vpop.f32.mrb[0].mxu0
      %v905 = vadd.f32 %v318, %v904
      %v906 = vpop.f32.mrb[0].mxu0
      %v907 = vpop.f32.mrb[0].mxu0
      %v908 = vadd.f32 %v318, %v907
      %v909 = vpop.f32.mrb[0].mxu0
      %910 = vmatprep.mubr.bf16.mxu0 0
      %911 = vmatmul.mubr.bf16.gmra.mrb[0].mxu0 %v582
      %v912 = vpop.f32.mrb[0].mxu0
      %v913 = vadd.f32 %v318, %v912
      %v914 = vpop.f32.mrb[0].mxu0
      %v915 = vpop.f32.mrb[0].mxu0
      %v916 = vadd.f32 %v318, %v915
      %v917 = vpop.f32.mrb[0].mxu0
      %918 = vmatprep.mubr.bf16.mxu0 0
      %919 = vmatmul.mubr.bf16.gmra.mrb[0].mxu0 %v583
      %v920 = vpop.f32.mrb[0].mxu0
      %v921 = vadd.f32 %v318, %v920
      %v922 = vpop.f32.mrb[0].mxu0
      %v923 = vpop.f32.mrb[0].mxu0
      %v924 = vadd.f32 %v318, %v923
      %v925 = vpop.f32.mrb[0].mxu0
      %926 = vmatprep.mubr.bf16.mxu0 0
      %927 = vmatmul.mubr.bf16.gmra.mrb[0].mxu0 %v584
      %v928 = vpop.f32.mrb[0].mxu0
      %v929 = vadd.f32 %v318, %v928
      %v930 = vpop.f32.mrb[0].mxu0
      %v931 = vpop.f32.mrb[0].mxu0
      %v932 = vadd.f32 %v318, %v931
      %v933 = vpop.f32.mrb[0].mxu0
      %934 = vmatprep.mubr.bf16.mxu0 0
      %935 = vmatmul.mubr.bf16.gmra.mrb[0].mxu0 %v585
      %v936 = vpop.f32.mrb[0].mxu0
      %v937 = vadd.f32 %v318, %v936
      %v938 = vpop.f32.mrb[0].mxu0
      %v939 = vpop.f32.mrb[0].mxu0
      %v940 = vadd.f32 %v318, %v939
      %v941 = vpop.f32.mrb[0].mxu0
      %942 = vmatprep.mubr.bf16.mxu0 0
      %943 = vmatmul.mubr.bf16.gmra.mrb[0].mxu0 %v586
      %v944 = vpop.f32.mrb[0].mxu0
      %v945 = vadd.f32 %v318, %v944
      %v946 = vpop.f32.mrb[0].mxu0
      %v947 = vpop.f32.mrb[0].mxu0
      %v948 = vadd.f32 %v318, %v947
      %v949 = vpop.f32.mrb[0].mxu0
      %950 = vmatprep.mubr.bf16.mxu0 0
      %951 = vmatmul.mubr.bf16.gmra.mrb[0].mxu0 %v587
      %v952 = vpop.f32.mrb[0].mxu0
      %v953 = vadd.f32 %v318, %v952
      %v954 = vpop.f32.mrb[0].mxu0
      %v955 = vpop.f32.mrb[0].mxu0
      %v956 = vadd.f32 %v318, %v955
      %v957 = vpop.f32.mrb[0].mxu0
      %958 = vmatprep.mubr.bf16.mxu0 0
      %959 = vmatmul.mubr.bf16.gmra.mrb[0].mxu0 %v588
      %v960 = vpop.f32.mrb[0].mxu0
      %v961 = vadd.f32 %v318, %v960
      %v962 = vpop.f32.mrb[0].mxu0
      %v963 = vpop.f32.mrb[0].mxu0
      %v964 = vadd.f32 %v318, %v963
      %v965 = vpop.f32.mrb[0].mxu0
      %966 = vmatprep.mubr.bf16.mxu0 0
      %967 = vmatmul.mubr.bf16.gmra.mrb[0].mxu0 %v589
      %v968 = vpop.f32.mrb[0].mxu0
      %v969 = vadd.f32 %v318, %v968
      %v970 = vpop.f32.mrb[0].mxu0
      %v971 = vpop.f32.mrb[0].mxu0
      %v972 = vadd.f32 %v318, %v971
      %v973 = vpop.f32.mrb[0].mxu0
      %974 = vmatprep.mubr.bf16.mxu0 0
      %975 = vmatmul.mubr.bf16.gmra.mrb[0].mxu0 %v590
      %v976 = vpop.f32.mrb[0].mxu0
      %v977 = vadd.f32 %v318, %v976
      %v978 = vpop.f32.mrb[0].mxu0
      %v979 = vpop.f32.mrb[0].mxu0
      %v980 = vadd.f32 %v318, %v979
      %v981 = vpop.f32.mrb[0].mxu0
      %982 = vmatprep.mubr.bf16.mxu0 0
      %983 = vmatmul.mubr.bf16.gmra.mrb[0].mxu0 %v591
      %v984 = vpop.f32.mrb[0].mxu0
      %v985 = vadd.f32 %v318, %v984
      %v986 = vpop.f32.mrb[0].mxu0
      %v987 = vpop.f32.mrb[0].mxu0
      %v988 = vadd.f32 %v318, %v987
      %v989 = vpop.f32.mrb[0].mxu0
      %990 = vmatprep.mubr.bf16.mxu0 0
      %991 = vmatmul.mubr.bf16.gmra.mrb[0].mxu0 %v592
      %v992 = vpop.f32.mrb[0].mxu0
      %v993 = vadd.f32 %v318, %v992
      %v994 = vpop.f32.mrb[0].mxu0
      %v995 = vpop.f32.mrb[0].mxu0
      %v996 = vadd.f32 %v318, %v995
      %v997 = vpop.f32.mrb[0].mxu0
      %998 = vmatprep.mubr.bf16.mxu0 0
      %999 = vmatmul.mubr.bf16.gmra.mrb[0].mxu0 %v593
      %v1000 = vpop.f32.mrb[0].mxu0
      %v1001 = vadd.f32 %v318, %v1000
      %v1002 = vpop.f32.mrb[0].mxu0
      %v1003 = vpop.f32.mrb[0].mxu0
      %v1004 = vadd.f32 %v318, %v1003
      %v1005 = vpop.f32.mrb[0].mxu0
      %1006 = vmatprep.mubr.bf16.mxu0 0
      %1007 = vmatmul.mubr.bf16.gmra.mrb[0].mxu0 %v594
      %v1008 = vpop.f32.mrb[0].mxu0
      %v1009 = vadd.f32 %v318, %v1008
      %v1010 = vpop.f32.mrb[0].mxu0
      %v1011 = vpop.f32.mrb[0].mxu0
      %v1012 = vadd.f32 %v318, %v1011
      %v1013 = vpop.f32.mrb[0].mxu0
      %1014 = vmatprep.mubr.bf16.mxu0 0
      %1015 = vmatmul.mubr.bf16.gmra.mrb[0].mxu0 %v595
      %v1016 = vpop.f32.mrb[0].mxu0
      %v1017 = vadd.f32 %v318, %v1016
      %v1018 = vpop.f32.mrb[0].mxu0
      %v1019 = vpop.f32.mrb[0].mxu0
      %v1020 = vadd.f32 %v318, %v1019
      %v1021 = vpop.f32.mrb[0].mxu0
      %1022 = vmatprep.mubr.bf16.mxu0 0
      %1023 = vmatmul.mubr.bf16.gmra.mrb[0].mxu0 %v596
      %v1024 = vpop.f32.mrb[0].mxu0
      %v1025 = vadd.f32 %v318, %v1024
      %v1026 = vpop.f32.mrb[0].mxu0
      %v1027 = vpop.f32.mrb[0].mxu0
      %v1028 = vadd.f32 %v318, %v1027
      %v1029 = vpop.f32.mrb[0].mxu0
      %1030 = vmatprep.mubr.bf16.mxu0 0
      %1031 = vmatmul.mubr.bf16.gmra.mrb[0].mxu0 %v597
      %v1032 = vpop.f32.mrb[0].mxu0
      %v1033 = vadd.f32 %v318, %v1032
      %v1034 = vpop.f32.mrb[0].mxu0
      %v1035 = vpop.f32.mrb[0].mxu0
      %v1036 = vadd.f32 %v318, %v1035
      %v1037 = vpop.f32.mrb[0].mxu0
      %1038 = vmatprep.mubr.bf16.mxu0 0
      %1039 = vmatmul.mubr.bf16.gmra.mrb[0].mxu0 %v598
      %v1040 = vpop.f32.mrb[0].mxu0
      %v1041 = vadd.f32 %v318, %v1040
      %v1042 = vpop.f32.mrb[0].mxu0
      %v1043 = vpop.f32.mrb[0].mxu0
      %v1044 = vadd.f32 %v318, %v1043
      %v1045 = vpop.f32.mrb[0].mxu0
      %1046 = vmatprep.mubr.bf16.mxu0 0
      %1047 = vmatmul.mubr.bf16.gmra.mrb[0].mxu0 %v599
      %v1048 = vpop.f32.mrb[0].mxu0
      %v1049 = vadd.f32 %v318, %v1048
      %v1050 = vpop.f32.mrb[0].mxu0
      %v1051 = vpop.f32.mrb[0].mxu0
      %v1052 = vadd.f32 %v318, %v1051
      %v1053 = vpop.f32.mrb[0].mxu0
      %1054 = vmatprep.mubr.bf16.mxu0 0
      %1055 = vmatmul.mubr.bf16.gmra.mrb[0].mxu0 %v600
      %v1056 = vpop.f32.mrb[0].mxu0
      %v1057 = vadd.f32 %v318, %v1056
      %v1058 = vpop.f32.mrb[0].mxu0
      %v1059 = vpop.f32.mrb[0].mxu0
      %v1060 = vadd.f32 %v318, %v1059
      %v1061 = vpop.f32.mrb[0].mxu0
      %1062 = vmatprep.mubr.bf16.mxu0 0
      %1063 = vmatmul.mubr.bf16.gmra.mrb[0].mxu0 %v601
      %v1064 = vpop.f32.mrb[0].mxu0
      %v1065 = vadd.f32 %v318, %v1064
      %v1066 = vpop.f32.mrb[0].mxu0
      %v1067 = vpop.f32.mrb[0].mxu0
      %v1068 = vadd.f32 %v318, %v1067
      %v1069 = vpop.f32.mrb[0].mxu0
      %1070 = vmatprep.mubr.bf16.mxu0 0
      %1071 = vmatmul.mubr.bf16.gmra.mrb[0].mxu0 %v602
      %v1072 = vpop.f32.mrb[0].mxu0
      %v1073 = vadd.f32 %v318, %v1072
      %v1074 = vpop.f32.mrb[0].mxu0
      %v1075 = vpop.f32.mrb[0].mxu0
      %v1076 = vadd.f32 %v318, %v1075
      %v1077 = vpop.f32.mrb[0].mxu0
      %1078 = vmatprep.mubr.bf16.mxu0 0
      %1079 = vmatmul.mubr.bf16.gmra.mrb[0].mxu0 %v603
      %v1080 = vpop.f32.mrb[0].mxu0
      %v1081 = vadd.f32 %v318, %v1080
      %v1082 = vpop.f32.mrb[0].mxu0
      %v1083 = vpop.f32.mrb[0].mxu0
      %v1084 = vadd.f32 %v318, %v1083
      %v1085 = vpop.f32.mrb[0].mxu0
      %1086 = vmatprep.mubr.bf16.mxu0 0
      %1087 = vmatmul.mubr.bf16.gmra.mrb[0].mxu0 %v604
      %v1088 = vpop.f32.mrb[0].mxu0
      %v1089 = vadd.f32 %v318, %v1088
      %v1090 = vpop.f32.mrb[0].mxu0
      %v1091 = vpop.f32.mrb[0].mxu0
      %v1092 = vadd.f32 %v318, %v1091
      %v1093 = vpop.f32.mrb[0].mxu0
      %1094 = vmatprep.mubr.bf16.mxu0 0
      %1095 = vmatmul.mubr.bf16.gmra.mrb[0].mxu0 %v605
      %v1096 = vpop.f32.mrb[0].mxu0
      %v1097 = vadd.f32 %v318, %v1096
      %v1098 = vpop.f32.mrb[0].mxu0
      %v1099 = vpop.f32.mrb[0].mxu0
      %v1100 = vadd.f32 %v318, %v1099
      %v1101 = vpop.f32.mrb[0].mxu0
      %1102 = vmatprep.mubr.bf16.mxu0 0
      %1103 = vmatmul.mubr.bf16.gmra.mrb[0].mxu0 %v606
      %v1104 = vpop.f32.mrb[0].mxu0
      %v1105 = vadd.f32 %v318, %v1104
      %v1106 = vpop.f32.mrb[0].mxu0
      %v1107 = vpop.f32.mrb[0].mxu0
      %v1108 = vadd.f32 %v318, %v1107
      %v1109 = vpop.f32.mrb[0].mxu0
      %1110 = vmatprep.mubr.bf16.mxu0 0
      %1111 = vmatmul.mubr.bf16.gmra.mrb[0].mxu0 %v607
      %v1112 = vpop.f32.mrb[0].mxu0
      %v1113 = vadd.f32 %v318, %v1112
      %v1114 = vpop.f32.mrb[0].mxu0
      %v1115 = vpop.f32.mrb[0].mxu0
      %v1116 = vadd.f32 %v318, %v1115
      %v1117 = vpop.f32.mrb[0].mxu0
      %1118 = vmatprep.mubr.bf16.mxu0 0
      %1119 = vmatmul.mubr.bf16.gmra.mrb[0].mxu0 %v608
      %v1120 = vpop.f32.mrb[0].mxu0
      %v1121 = vadd.f32 %v318, %v1120
      %v1122 = vpop.f32.mrb[0].mxu0
      %v1123 = vpop.f32.mrb[0].mxu0
      %v1124 = vadd.f32 %v318, %v1123
      %v1125 = vpop.f32.mrb[0].mxu0
      %1126 = vmatprep.mubr.bf16.mxu0 0
      %1127 = vmatmul.mubr.bf16.gmra.mrb[0].mxu0 %v609
      %v1128 = vpop.f32.mrb[0].mxu0
      %v1129 = vadd.f32 %v318, %v1128
      %v1130 = vpop.f32.mrb[0].mxu0
      %v1131 = vpop.f32.mrb[0].mxu0
      %v1132 = vadd.f32 %v318, %v1131
      %v1133 = vpop.f32.mrb[0].mxu0
      %1134 = vmatprep.mubr.bf16.mxu0 0
      %1135 = vmatmul.mubr.bf16.gmra.mrb[0].mxu0 %v610
      %v1136 = vpop.f32.mrb[0].mxu0
      %v1137 = vadd.f32 %v318, %v1136
      %v1138 = vpop.f32.mrb[0].mxu0
      %v1139 = vpop.f32.mrb[0].mxu0
      %v1140 = vadd.f32 %v318, %v1139
      %v1141 = vpop.f32.mrb[0].mxu0
      %1142 = vmatprep.mubr.bf16.mxu0 0
      %1143 = vmatmul.mubr.bf16.gmra.mrb[0].mxu0 %v611
      %v1144 = vpop.f32.mrb[0].mxu0
      %v1145 = vadd.f32 %v318, %v1144
      %v1146 = vpop.f32.mrb[0].mxu0
      %v1147 = vpop.f32.mrb[0].mxu0
      %v1148 = vadd.f32 %v318, %v1147
      %v1149 = vpop.f32.mrb[0].mxu0
      %1150 = vmatprep.mubr.bf16.mxu0 0
      %1151 = vmatmul.mubr.bf16.gmra.mrb[0].mxu0 %v612
      %v1152 = vpop.f32.mrb[0].mxu0
      %v1153 = vadd.f32 %v318, %v1152
      %v1154 = vpop.f32.mrb[0].mxu0
      %v1155 = vpop.f32.mrb[0].mxu0
      %v1156 = vadd.f32 %v318, %v1155
      %v1157 = vpop.f32.mrb[0].mxu0
      %1158 = vmatprep.mubr.bf16.mxu0 0
      %1159 = vmatmul.mubr.bf16.gmra.mrb[0].mxu0 %v613
      %v1160 = vpop.f32.mrb[0].mxu0
      %v1161 = vadd.f32 %v318, %v1160
      %v1162 = vpop.f32.mrb[0].mxu0
      %v1163 = vpop.f32.mrb[0].mxu0
      %v1164 = vadd.f32 %v318, %v1163
      %v1165 = vpop.f32.mrb[0].mxu0
      %1166 = vmatprep.mubr.bf16.mxu0 0
      %1167 = vmatmul.mubr.bf16.gmra.mrb[0].mxu0 %v614
      %v1168 = vpop.f32.mrb[0].mxu0
      %v1169 = vadd.f32 %v318, %v1168
      %v1170 = vpop.f32.mrb[0].mxu0
      %v1171 = vpop.f32.mrb[0].mxu0
      %v1172 = vadd.f32 %v318, %v1171
      %v1173 = vpop.f32.mrb[0].mxu0
      %1174 = vmatprep.mubr.bf16.mxu0 0
      %1175 = vmatmul.mubr.bf16.gmra.mrb[0].mxu0 %v615
      %v1176 = vpop.f32.mrb[0].mxu0
      %v1177 = vadd.f32 %v318, %v1176
      %v1178 = vpop.f32.mrb[0].mxu0
      %v1179 = vpop.f32.mrb[0].mxu0
      %v1180 = vadd.f32 %v318, %v1179
      %v1181 = vpop.f32.mrb[0].mxu0
      %1182 = vmatprep.mubr.bf16.mxu0 0
      %1183 = vmatmul.mubr.bf16.gmra.mrb[0].mxu0 %v616
      %v1184 = vpop.f32.mrb[0].mxu0
      %v1185 = vadd.f32 %v318, %v1184
      %v1186 = vpop.f32.mrb[0].mxu0
      %v1187 = vpop.f32.mrb[0].mxu0
      %v1188 = vadd.f32 %v318, %v1187
      %v1189 = vpop.f32.mrb[0].mxu0
      %1190 = vmatprep.mubr.bf16.mxu0 0
      %1191 = vmatmul.mubr.bf16.gmra.mrb[0].mxu0 %v617
      %v1192 = vpop.f32.mrb[0].mxu0
      %v1193 = vadd.f32 %v318, %v1192
      %v1194 = vpop.f32.mrb[0].mxu0
      %v1195 = vpop.f32.mrb[0].mxu0
      %v1196 = vadd.f32 %v318, %v1195
      %v1197 = vpop.f32.mrb[0].mxu0
      %1198 = vmatprep.mubr.bf16.mxu0 0
      %1199 = vmatmul.mubr.bf16.gmra.mrb[0].mxu0 %v618
      %v1200 = vpop.f32.mrb[0].mxu0
      %v1201 = vadd.f32 %v318, %v1200
      %v1202 = vpop.f32.mrb[0].mxu0
      %v1203 = vpop.f32.mrb[0].mxu0
      %v1204 = vadd.f32 %v318, %v1203
      %v1205 = vpop.f32.mrb[0].mxu0
      %1206 = vmatprep.mubr.bf16.mxu0 0
      %1207 = vmatmul.mubr.bf16.gmra.mrb[0].mxu0 %v619
      %v1208 = vpop.f32.mrb[0].mxu0
      %v1209 = vadd.f32 %v318, %v1208
      %v1210 = vpop.f32.mrb[0].mxu0
      %v1211 = vpop.f32.mrb[0].mxu0
      %v1212 = vadd.f32 %v318, %v1211
      %v1213 = vpop.f32.mrb[0].mxu0
      %1214 = vmatprep.mubr.bf16.mxu0 0
      %1215 = vmatmul.mubr.bf16.gmra.mrb[0].mxu0 %v620
      %v1216 = vpop.f32.mrb[0].mxu0
      %v1217 = vadd.f32 %v318, %v1216
      %v1218 = vpop.f32.mrb[0].mxu0
      %v1219 = vpop.f32.mrb[0].mxu0
      %v1220 = vadd.f32 %v318, %v1219
      %v1221 = vpop.f32.mrb[0].mxu0
      %1222 = vmatprep.mubr.bf16.mxu0 0
      %1223 = vmatmul.mubr.bf16.gmra.mrb[0].mxu0 %v621
      %v1224 = vpop.f32.mrb[0].mxu0
      %v1225 = vadd.f32 %v318, %v1224
      %v1226 = vpop.f32.mrb[0].mxu0
      %v1227 = vpop.f32.mrb[0].mxu0
      %v1228 = vadd.f32 %v318, %v1227
      %v1229 = vpop.f32.mrb[0].mxu0
      %1230 = vmatprep.mubr.bf16.mxu0 0
      %1231 = vmatmul.mubr.bf16.gmra.mrb[0].mxu0 %v622
      %v1232 = vpop.f32.mrb[0].mxu0
      %v1233 = vadd.f32 %v318, %v1232
      %v1234 = vpop.f32.mrb[0].mxu0
      %v1235 = vpop.f32.mrb[0].mxu0
      %v1236 = vadd.f32 %v318, %v1235
      %v1237 = vpop.f32.mrb[0].mxu0
      %1238 = vmatprep.mubr.bf16.mxu0 0
      %1239 = vmatmul.mubr.bf16.gmra.mrb[0].mxu0 %v623
      %v1240 = vpop.f32.mrb[0].mxu0
      %v1241 = vadd.f32 %v318, %v1240
      %v1242 = vpop.f32.mrb[0].mxu0
      %v1243 = vpop.f32.mrb[0].mxu0
      %v1244 = vadd.f32 %v318, %v1243
      %v1245 = vpop.f32.mrb[0].mxu0
      %1246 = vmatprep.mubr.bf16.mxu0 0
      %1247 = vmatmul.mubr.bf16.gmra.mrb[0].mxu0 %v624
      %v1248 = vpop.f32.mrb[0].mxu0
      %v1249 = vadd.f32 %v318, %v1248
      %v1250 = vpop.f32.mrb[0].mxu0
      %v1251 = vpop.f32.mrb[0].mxu0
      %v1252 = vadd.f32 %v318, %v1251
      %v1253 = vpop.f32.mrb[0].mxu0
      %1254 = vdwg.mxu0
      %vm1255 = vcmp.ge.f32.partialorder %v769, 0.0
      %vm1256 = vcmp.ge.f32.partialorder %v772, 0.0
      %vm1257 = vcmp.ge.f32.partialorder %v777, 0.0
      %vm1258 = vcmp.ge.f32.partialorder %v780, 0.0
      %vm1259 = vcmp.ge.f32.partialorder %v785, 0.0
      %vm1260 = vcmp.ge.f32.partialorder %v788, 0.0
      %vm1261 = vcmp.ge.f32.partialorder %v793, 0.0
      %vm1262 = vcmp.ge.f32.partialorder %v796, 0.0
      %vm1263 = vcmp.ge.f32.partialorder %v801, 0.0
      %vm1264 = vcmp.ge.f32.partialorder %v804, 0.0
      %vm1265 = vcmp.ge.f32.partialorder %v809, 0.0
      %vm1266 = vcmp.ge.f32.partialorder %v812, 0.0
      %vm1267 = vcmp.ge.f32.partialorder %v817, 0.0
      %vm1268 = vcmp.ge.f32.partialorder %v820, 0.0
      %vm1269 = vcmp.ge.f32.partialorder %v825, 0.0
      %vm1270 = vcmp.ge.f32.partialorder %v828, 0.0
      %vm1271 = vcmp.ge.f32.partialorder %v833, 0.0
      %vm1272 = vcmp.ge.f32.partialorder %v836, 0.0
      %vm1273 = vcmp.ge.f32.partialorder %v841, 0.0
      %vm1274 = vcmp.ge.f32.partialorder %v844, 0.0
      %vm1275 = vcmp.ge.f32.partialorder %v849, 0.0
      %vm1276 = vcmp.ge.f32.partialorder %v852, 0.0
      %vm1277 = vcmp.ge.f32.partialorder %v857, 0.0
      %vm1278 = vcmp.ge.f32.partialorder %v860, 0.0
      %vm1279 = vcmp.ge.f32.partialorder %v865, 0.0
      %vm1280 = vcmp.ge.f32.partialorder %v868, 0.0
      %vm1281 = vcmp.ge.f32.partialorder %v873, 0.0
      %vm1282 = vcmp.ge.f32.partialorder %v876, 0.0
      %vm1283 = vcmp.ge.f32.partialorder %v881, 0.0
      %vm1284 = vcmp.ge.f32.partialorder %v884, 0.0
      %vm1285 = vcmp.ge.f32.partialorder %v889, 0.0
      %vm1286 = vcmp.ge.f32.partialorder %v892, 0.0
      %vm1287 = vcmp.ge.f32.partialorder %v897, 0.0
      %vm1288 = vcmp.ge.f32.partialorder %v900, 0.0
      %vm1289 = vcmp.ge.f32.partialorder %v905, 0.0
      %vm1290 = vcmp.ge.f32.partialorder %v908, 0.0
      %vm1291 = vcmp.ge.f32.partialorder %v913, 0.0
      %vm1292 = vcmp.ge.f32.partialorder %v916, 0.0
      %vm1293 = vcmp.ge.f32.partialorder %v921, 0.0
      %vm1294 = vcmp.ge.f32.partialorder %v924, 0.0
      %vm1295 = vcmp.ge.f32.partialorder %v929, 0.0
      %vm1296 = vcmp.ge.f32.partialorder %v932, 0.0
      %vm1297 = vcmp.ge.f32.partialorder %v937, 0.0
      %vm1298 = vcmp.ge.f32.partialorder %v940, 0.0
      %vm1299 = vcmp.ge.f32.partialorder %v945, 0.0
      %vm1300 = vcmp.ge.f32.partialorder %v948, 0.0
      %vm1301 = vcmp.ge.f32.partialorder %v953, 0.0
      %vm1302 = vcmp.ge.f32.partialorder %v956, 0.0
      %vm1303 = vcmp.ge.f32.partialorder %v961, 0.0
      %vm1304 = vcmp.ge.f32.partialorder %v964, 0.0
      %vm1305 = vcmp.ge.f32.partialorder %v969, 0.0
      %vm1306 = vcmp.ge.f32.partialorder %v972, 0.0
      %vm1307 = vcmp.ge.f32.partialorder %v977, 0.0
      %vm1308 = vcmp.ge.f32.partialorder %v980, 0.0
      %vm1309 = vcmp.ge.f32.partialorder %v985, 0.0
      %vm1310 = vcmp.ge.f32.partialorder %v988, 0.0
      %vm1311 = vcmp.ge.f32.partialorder %v993, 0.0
      %vm1312 = vcmp.ge.f32.partialorder %v996, 0.0
      %vm1313 = vcmp.ge.f32.partialorder %v1001, 0.0
      %vm1314 = vcmp.ge.f32.partialorder %v1004, 0.0
      %vm1315 = vcmp.ge.f32.partialorder %v1009, 0.0
      %vm1316 = vcmp.ge.f32.partialorder %v1012, 0.0
      %vm1317 = vcmp.ge.f32.partialorder %v1017, 0.0
      %vm1318 = vcmp.ge.f32.partialorder %v1020, 0.0
      %vm1319 = vcmp.ge.f32.partialorder %v1025, 0.0
      %vm1320 = vcmp.ge.f32.partialorder %v1028, 0.0
      %vm1321 = vcmp.ge.f32.partialorder %v1033, 0.0
      %vm1322 = vcmp.ge.f32.partialorder %v1036, 0.0
      %vm1323 = vcmp.ge.f32.partialorder %v1041, 0.0
      %vm1324 = vcmp.ge.f32.partialorder %v1044, 0.0
      %vm1325 = vcmp.ge.f32.partialorder %v1049, 0.0
      %vm1326 = vcmp.ge.f32.partialorder %v1052, 0.0
      %vm1327 = vcmp.ge.f32.partialorder %v1057, 0.0
      %vm1328 = vcmp.ge.f32.partialorder %v1060, 0.0
      %vm1329 = vcmp.ge.f32.partialorder %v1065, 0.0
      %vm1330 = vcmp.ge.f32.partialorder %v1068, 0.0
      %vm1331 = vcmp.ge.f32.partialorder %v1073, 0.0
      %vm1332 = vcmp.ge.f32.partialorder %v1076, 0.0
      %vm1333 = vcmp.ge.f32.partialorder %v1081, 0.0
      %vm1334 = vcmp.ge.f32.partialorder %v1084, 0.0
      %vm1335 = vcmp.ge.f32.partialorder %v1089, 0.0
      %vm1336 = vcmp.ge.f32.partialorder %v1092, 0.0
      %vm1337 = vcmp.ge.f32.partialorder %v1097, 0.0
      %vm1338 = vcmp.ge.f32.partialorder %v1100, 0.0
      %vm1339 = vcmp.ge.f32.partialorder %v1105, 0.0
      %vm1340 = vcmp.ge.f32.partialorder %v1108, 0.0
      %vm1341 = vcmp.ge.f32.partialorder %v1113, 0.0
      %vm1342 = vcmp.ge.f32.partialorder %v1116, 0.0
      %vm1343 = vcmp.ge.f32.partialorder %v1121, 0.0
      %vm1344 = vcmp.ge.f32.partialorder %v1124, 0.0
      %vm1345 = vcmp.ge.f32.partialorder %v1129, 0.0
      %vm1346 = vcmp.ge.f32.partialorder %v1132, 0.0
      %vm1347 = vcmp.ge.f32.partialorder %v1137, 0.0
      %vm1348 = vcmp.ge.f32.partialorder %v1140, 0.0
      %vm1349 = vcmp.ge.f32.partialorder %v1145, 0.0
      %vm1350 = vcmp.ge.f32.partialorder %v1148, 0.0
      %vm1351 = vcmp.ge.f32.partialorder %v1153, 0.0
      %vm1352 = vcmp.ge.f32.partialorder %v1156, 0.0
      %vm1353 = vcmp.ge.f32.partialorder %v1161, 0.0
      %vm1354 = vcmp.ge.f32.partialorder %v1164, 0.0
      %vm1355 = vcmp.ge.f32.partialorder %v1169, 0.0
      %vm1356 = vcmp.ge.f32.partialorder %v1172, 0.0
      %vm1357 = vcmp.ge.f32.partialorder %v1177, 0.0
      %vm1358 = vcmp.ge.f32.partialorder %v1180, 0.0
      %vm1359 = vcmp.ge.f32.partialorder %v1185, 0.0
      %vm1360 = vcmp.ge.f32.partialorder %v1188, 0.0
      %vm1361 = vcmp.ge.f32.partialorder %v1193, 0.0
      %vm1362 = vcmp.ge.f32.partialorder %v1196, 0.0
      %vm1363 = vcmp.ge.f32.partialorder %v1201, 0.0
      %vm1364 = vcmp.ge.f32.partialorder %v1204, 0.0
      %vm1365 = vcmp.ge.f32.partialorder %v1209, 0.0
      %vm1366 = vcmp.ge.f32.partialorder %v1212, 0.0
      %vm1367 = vcmp.ge.f32.partialorder %v1217, 0.0
      %vm1368 = vcmp.ge.f32.partialorder %v1220, 0.0
      %vm1369 = vcmp.ge.f32.partialorder %v1225, 0.0
      %vm1370 = vcmp.ge.f32.partialorder %v1228, 0.0
      %vm1371 = vcmp.ge.f32.partialorder %v1233, 0.0
      %vm1372 = vcmp.ge.f32.partialorder %v1236, 0.0
      %vm1373 = vcmp.ge.f32.partialorder %v1241, 0.0
      %vm1374 = vcmp.ge.f32.partialorder %v1244, 0.0
      %vm1375 = vcmp.ge.f32.partialorder %v1249, 0.0
      %vm1376 = vcmp.ge.f32.partialorder %v1252, 0.0
      %v1377 = vmul.f32 %v769, 0.2
      %v1378 = vmul.f32 %v772, 0.2
      %v1379 = vmul.f32 %v777, 0.2
      %v1380 = vmul.f32 %v780, 0.2
      %v1381 = vmul.f32 %v785, 0.2
      %v1382 = vmul.f32 %v788, 0.2
      %v1383 = vmul.f32 %v793, 0.2
      %v1384 = vmul.f32 %v796, 0.2
      %v1385 = vmul.f32 %v801, 0.2
      %v1386 = vmul.f32 %v804, 0.2
      %v1387 = vmul.f32 %v809, 0.2
      %v1388 = vmul.f32 %v812, 0.2
      %v1389 = vmul.f32 %v817, 0.2
      %v1390 = vmul.f32 %v820, 0.2
      %v1391 = vmul.f32 %v825, 0.2
      %v1392 = vmul.f32 %v828, 0.2
      %v1393 = vmul.f32 %v833, 0.2
      %v1394 = vmul.f32 %v836, 0.2
      %v1395 = vmul.f32 %v841, 0.2
      %v1396 = vmul.f32 %v844, 0.2
      %v1397 = vmul.f32 %v849, 0.2
      %v1398 = vmul.f32 %v852, 0.2
      %v1399 = vmul.f32 %v857, 0.2
      %v1400 = vmul.f32 %v860, 0.2
      %v1401 = vmul.f32 %v865, 0.2
      %v1402 = vmul.f32 %v868, 0.2
      %v1403 = vmul.f32 %v873, 0.2
      %v1404 = vmul.f32 %v876, 0.2
      %v1405 = vmul.f32 %v881, 0.2
      %v1406 = vmul.f32 %v884, 0.2
      %v1407 = vmul.f32 %v889, 0.2
      %v1408 = vmul.f32 %v892, 0.2
      %v1409 = vmul.f32 %v897, 0.2
      %v1410 = vmul.f32 %v900, 0.2
      %v1411 = vmul.f32 %v905, 0.2
      %v1412 = vmul.f32 %v908, 0.2
      %v1413 = vmul.f32 %v913, 0.2
      %v1414 = vmul.f32 %v916, 0.2
      %v1415 = vmul.f32 %v921, 0.2
      %v1416 = vmul.f32 %v924, 0.2
      %v1417 = vmul.f32 %v929, 0.2
      %v1418 = vmul.f32 %v932, 0.2
      %v1419 = vmul.f32 %v937, 0.2
      %v1420 = vmul.f32 %v940, 0.2
      %v1421 = vmul.f32 %v945, 0.2
      %v1422 = vmul.f32 %v948, 0.2
      %v1423 = vmul.f32 %v953, 0.2
      %v1424 = vmul.f32 %v956, 0.2
      %v1425 = vmul.f32 %v961, 0.2
      %v1426 = vmul.f32 %v964, 0.2
      %v1427 = vmul.f32 %v969, 0.2
      %v1428 = vmul.f32 %v972, 0.2
      %v1429 = vmul.f32 %v977, 0.2
      %v1430 = vmul.f32 %v980, 0.2
      %v1431 = vmul.f32 %v985, 0.2
      %v1432 = vmul.f32 %v988, 0.2
      %v1433 = vmul.f32 %v993, 0.2
      %v1434 = vmul.f32 %v996, 0.2
      %v1435 = vmul.f32 %v1001, 0.2
      %v1436 = vmul.f32 %v1004, 0.2
      %v1437 = vmul.f32 %v1009, 0.2
      %v1438 = vmul.f32 %v1012, 0.2
      %v1439 = vmul.f32 %v1017, 0.2
      %v1440 = vmul.f32 %v1020, 0.2
      %v1441 = vmul.f32 %v1025, 0.2
      %v1442 = vmul.f32 %v1028, 0.2
      %v1443 = vmul.f32 %v1033, 0.2
      %v1444 = vmul.f32 %v1036, 0.2
      %v1445 = vmul.f32 %v1041, 0.2
      %v1446 = vmul.f32 %v1044, 0.2
      %v1447 = vmul.f32 %v1049, 0.2
      %v1448 = vmul.f32 %v1052, 0.2
      %v1449 = vmul.f32 %v1057, 0.2
      %v1450 = vmul.f32 %v1060, 0.2
      %v1451 = vmul.f32 %v1065, 0.2
      %v1452 = vmul.f32 %v1068, 0.2
      %v1453 = vmul.f32 %v1073, 0.2
      %v1454 = vmul.f32 %v1076, 0.2
      %v1455 = vmul.f32 %v1081, 0.2
      %v1456 = vmul.f32 %v1084, 0.2
      %v1457 = vmul.f32 %v1089, 0.2
      %v1458 = vmul.f32 %v1092, 0.2
      %v1459 = vmul.f32 %v1097, 0.2
      %v1460 = vmul.f32 %v1100, 0.2
      %v1461 = vmul.f32 %v1105, 0.2
      %v1462 = vmul.f32 %v1108, 0.2
      %v1463 = vmul.f32 %v1113, 0.2
      %v1464 = vmul.f32 %v1116, 0.2
      %v1465 = vmul.f32 %v1121, 0.2
      %v1466 = vmul.f32 %v1124, 0.2
      %v1467 = vmul.f32 %v1129, 0.2
      %v1468 = vmul.f32 %v1132, 0.2
      %v1469 = vmul.f32 %v1137, 0.2
      %v1470 = vmul.f32 %v1140, 0.2
      %v1471 = vmul.f32 %v1145, 0.2
      %v1472 = vmul.f32 %v1148, 0.2
      %v1473 = vmul.f32 %v1153, 0.2
      %v1474 = vmul.f32 %v1156, 0.2
      %v1475 = vmul.f32 %v1161, 0.2
      %v1476 = vmul.f32 %v1164, 0.2
      %v1477 = vmul.f32 %v1169, 0.2
      %v1478 = vmul.f32 %v1172, 0.2
      %v1479 = vmul.f32 %v1177, 0.2
      %v1480 = vmul.f32 %v1180, 0.2
      %v1481 = vmul.f32 %v1185, 0.2
      %v1482 = vmul.f32 %v1188, 0.2
      %v1483 = vmul.f32 %v1193, 0.2
      %v1484 = vmul.f32 %v1196, 0.2
      %v1485 = vmul.f32 %v1201, 0.2
      %v1486 = vmul.f32 %v1204, 0.2
      %v1487 = vmul.f32 %v1209, 0.2
      %v1488 = vmul.f32 %v1212, 0.2
      %v1489 = vmul.f32 %v1217, 0.2
      %v1490 = vmul.f32 %v1220, 0.2
      %v1491 = vmul.f32 %v1225, 0.2
      %v1492 = vmul.f32 %v1228, 0.2
      %v1493 = vmul.f32 %v1233, 0.2
      %v1494 = vmul.f32 %v1236, 0.2
      %v1495 = vmul.f32 %v1241, 0.2
      %v1496 = vmul.f32 %v1244, 0.2
      %v1497 = vmul.f32 %v1249, 0.2
      %v1498 = vmul.f32 %v1252, 0.2
      %v1499 = vsel %vm1255, %v769, %v1377
      %v1500 = vsel %vm1256, %v772, %v1378
      %v1501 = vsel %vm1257, %v777, %v1379
      %v1502 = vsel %vm1258, %v780, %v1380
      %v1503 = vsel %vm1259, %v785, %v1381
      %v1504 = vsel %vm1260, %v788, %v1382
      %v1505 = vsel %vm1261, %v793, %v1383
      %v1506 = vsel %vm1262, %v796, %v1384
      %v1507 = vsel %vm1263, %v801, %v1385
      %v1508 = vsel %vm1264, %v804, %v1386
      %v1509 = vsel %vm1265, %v809, %v1387
      %v1510 = vsel %vm1266, %v812, %v1388
      %v1511 = vsel %vm1267, %v817, %v1389
      %v1512 = vsel %vm1268, %v820, %v1390
      %v1513 = vsel %vm1269, %v825, %v1391
      %v1514 = vsel %vm1270, %v828, %v1392
      %v1515 = vsel %vm1271, %v833, %v1393
      %v1516 = vsel %vm1272, %v836, %v1394
      %v1517 = vsel %vm1273, %v841, %v1395
      %v1518 = vsel %vm1274, %v844, %v1396
      %v1519 = vsel %vm1275, %v849, %v1397
      %v1520 = vsel %vm1276, %v852, %v1398
      %v1521 = vsel %vm1277, %v857, %v1399
      %v1522 = vsel %vm1278, %v860, %v1400
      %v1523 = vsel %vm1279, %v865, %v1401
      %v1524 = vsel %vm1280, %v868, %v1402
      %v1525 = vsel %vm1281, %v873, %v1403
      %v1526 = vsel %vm1282, %v876, %v1404
      %v1527 = vsel %vm1283, %v881, %v1405
      %v1528 = vsel %vm1284, %v884, %v1406
      %v1529 = vsel %vm1285, %v889, %v1407
      %v1530 = vsel %vm1286, %v892, %v1408
      %v1531 = vsel %vm1287, %v897, %v1409
      %v1532 = vsel %vm1288, %v900, %v1410
      %v1533 = vsel %vm1289, %v905, %v1411
      %v1534 = vsel %vm1290, %v908, %v1412
      %v1535 = vsel %vm1291, %v913, %v1413
      %v1536 = vsel %vm1292, %v916, %v1414
      %v1537 = vsel %vm1293, %v921, %v1415
      %v1538 = vsel %vm1294, %v924, %v1416
      %v1539 = vsel %vm1295, %v929, %v1417
      %v1540 = vsel %vm1296, %v932, %v1418
      %v1541 = vsel %vm1297, %v937, %v1419
      %v1542 = vsel %vm1298, %v940, %v1420
      %v1543 = vsel %vm1299, %v945, %v1421
      %v1544 = vsel %vm1300, %v948, %v1422
      %v1545 = vsel %vm1301, %v953, %v1423
      %v1546 = vsel %vm1302, %v956, %v1424
      %v1547 = vsel %vm1303, %v961, %v1425
      %v1548 = vsel %vm1304, %v964, %v1426
      %v1549 = vsel %vm1305, %v969, %v1427
      %v1550 = vsel %vm1306, %v972, %v1428
      %v1551 = vsel %vm1307, %v977, %v1429
      %v1552 = vsel %vm1308, %v980, %v1430
      %v1553 = vsel %vm1309, %v985, %v1431
      %v1554 = vsel %vm1310, %v988, %v1432
      %v1555 = vsel %vm1311, %v993, %v1433
      %v1556 = vsel %vm1312, %v996, %v1434
      %v1557 = vsel %vm1313, %v1001, %v1435
      %v1558 = vsel %vm1314, %v1004, %v1436
      %v1559 = vsel %vm1315, %v1009, %v1437
      %v1560 = vsel %vm1316, %v1012, %v1438
      %v1561 = vsel %vm1317, %v1017, %v1439
      %v1562 = vsel %vm1318, %v1020, %v1440
      %v1563 = vsel %vm1319, %v1025, %v1441
      %v1564 = vsel %vm1320, %v1028, %v1442
      %v1565 = vsel %vm1321, %v1033, %v1443
      %v1566 = vsel %vm1322, %v1036, %v1444
      %v1567 = vsel %vm1323, %v1041, %v1445
      %v1568 = vsel %vm1324, %v1044, %v1446
      %v1569 = vsel %vm1325, %v1049, %v1447
      %v1570 = vsel %vm1326, %v1052, %v1448
      %v1571 = vsel %vm1327, %v1057, %v1449
      %v1572 = vsel %vm1328, %v1060, %v1450
      %v1573 = vsel %vm1329, %v1065, %v1451
      %v1574 = vsel %vm1330, %v1068, %v1452
      %v1575 = vsel %vm1331, %v1073, %v1453
      %v1576 = vsel %vm1332, %v1076, %v1454
      %v1577 = vsel %vm1333, %v1081, %v1455
      %v1578 = vsel %vm1334, %v1084, %v1456
      %v1579 = vsel %vm1335, %v1089, %v1457
      %v1580 = vsel %vm1336, %v1092, %v1458
      %v1581 = vsel %vm1337, %v1097, %v1459
      %v1582 = vsel %vm1338, %v1100, %v1460
      %v1583 = vsel %vm1339, %v1105, %v1461
      %v1584 = vsel %vm1340, %v1108, %v1462
      %v1585 = vsel %vm1341, %v1113, %v1463
      %v1586 = vsel %vm1342, %v1116, %v1464
      %v1587 = vsel %vm1343, %v1121, %v1465
      %v1588 = vsel %vm1344, %v1124, %v1466
      %v1589 = vsel %vm1345, %v1129, %v1467
      %v1590 = vsel %vm1346, %v1132, %v1468
      %v1591 = vsel %vm1347, %v1137, %v1469
      %v1592 = vsel %vm1348, %v1140, %v1470
      %v1593 = vsel %vm1349, %v1145, %v1471
      %v1594 = vsel %vm1350, %v1148, %v1472
      %v1595 = vsel %vm1351, %v1153, %v1473
      %v1596 = vsel %vm1352, %v1156, %v1474
      %v1597 = vsel %vm1353, %v1161, %v1475
      %v1598 = vsel %vm1354, %v1164, %v1476
      %v1599 = vsel %vm1355, %v1169, %v1477
      %v1600 = vsel %vm1356, %v1172, %v1478
      %v1601 = vsel %vm1357, %v1177, %v1479
      %v1602 = vsel %vm1358, %v1180, %v1480
      %v1603 = vsel %vm1359, %v1185, %v1481
      %v1604 = vsel %vm1360, %v1188, %v1482
      %v1605 = vsel %vm1361, %v1193, %v1483
      %v1606 = vsel %vm1362, %v1196, %v1484
      %v1607 = vsel %vm1363, %v1201, %v1485
      %v1608 = vsel %vm1364, %v1204, %v1486
      %v1609 = vsel %vm1365, %v1209, %v1487
      %v1610 = vsel %vm1366, %v1212, %v1488
      %v1611 = vsel %vm1367, %v1217, %v1489
      %v1612 = vsel %vm1368, %v1220, %v1490
      %v1613 = vsel %vm1369, %v1225, %v1491
      %v1614 = vsel %vm1370, %v1228, %v1492
      %v1615 = vsel %vm1371, %v1233, %v1493
      %v1616 = vsel %vm1372, %v1236, %v1494
      %v1617 = vsel %vm1373, %v1241, %v1495
      %v1618 = vsel %vm1374, %v1244, %v1496
      %v1619 = vsel %vm1375, %v1249, %v1497
      %v1620 = vsel %vm1376, %v1252, %v1498
      %v1621 = vpack.c.bf16 %v1500, %v1499
      %v1622 = vpack.c.bf16 %v1502, %v1501
      %v1623 = vpack.c.bf16 %v1504, %v1503
      %v1624 = vpack.c.bf16 %v1506, %v1505
      %v1625 = vpack.c.bf16 %v1508, %v1507
      %v1626 = vpack.c.bf16 %v1510, %v1509
      %v1627 = vpack.c.bf16 %v1512, %v1511
      %v1628 = vpack.c.bf16 %v1514, %v1513
      %v1629 = vpack.c.bf16 %v1516, %v1515
      %v1630 = vpack.c.bf16 %v1518, %v1517
      %v1631 = vpack.c.bf16 %v1520, %v1519
      %v1632 = vpack.c.bf16 %v1522, %v1521
      %v1633 = vpack.c.bf16 %v1524, %v1523
      %v1634 = vpack.c.bf16 %v1526, %v1525
      %v1635 = vpack.c.bf16 %v1528, %v1527
      %v1636 = vpack.c.bf16 %v1530, %v1529
      %v1637 = vpack.c.bf16 %v1532, %v1531
      %v1638 = vpack.c.bf16 %v1534, %v1533
      %v1639 = vpack.c.bf16 %v1536, %v1535
      %v1640 = vpack.c.bf16 %v1538, %v1537
      %v1641 = vpack.c.bf16 %v1540, %v1539
      %v1642 = vpack.c.bf16 %v1542, %v1541
      %v1643 = vpack.c.bf16 %v1544, %v1543
      %v1644 = vpack.c.bf16 %v1546, %v1545
      %v1645 = vpack.c.bf16 %v1548, %v1547
      %v1646 = vpack.c.bf16 %v1550, %v1549
      %v1647 = vpack.c.bf16 %v1552, %v1551
      %v1648 = vpack.c.bf16 %v1554, %v1553
      %v1649 = vpack.c.bf16 %v1556, %v1555
      %v1650 = vpack.c.bf16 %v1558, %v1557
      %v1651 = vpack.c.bf16 %v1560, %v1559
      %v1652 = vpack.c.bf16 %v1562, %v1561
      %v1653 = vpack.c.bf16 %v1564, %v1563
      %v1654 = vpack.c.bf16 %v1566, %v1565
      %v1655 = vpack.c.bf16 %v1568, %v1567
      %v1656 = vpack.c.bf16 %v1570, %v1569
      %v1657 = vpack.c.bf16 %v1572, %v1571
      %v1658 = vpack.c.bf16 %v1574, %v1573
      %v1659 = vpack.c.bf16 %v1576, %v1575
      %v1660 = vpack.c.bf16 %v1578, %v1577
      %v1661 = vpack.c.bf16 %v1580, %v1579
      %v1662 = vpack.c.bf16 %v1582, %v1581
      %v1663 = vpack.c.bf16 %v1584, %v1583
      %v1664 = vpack.c.bf16 %v1586, %v1585
      %v1665 = vpack.c.bf16 %v1588, %v1587
      %v1666 = vpack.c.bf16 %v1590, %v1589
      %v1667 = vpack.c.bf16 %v1592, %v1591
      %v1668 = vpack.c.bf16 %v1594, %v1593
      %v1669 = vpack.c.bf16 %v1596, %v1595
      %v1670 = vpack.c.bf16 %v1598, %v1597
      %v1671 = vpack.c.bf16 %v1600, %v1599
      %v1672 = vpack.c.bf16 %v1602, %v1601
      %v1673 = vpack.c.bf16 %v1604, %v1603
      %v1674 = vpack.c.bf16 %v1606, %v1605
      %v1675 = vpack.c.bf16 %v1608, %v1607
      %v1676 = vpack.c.bf16 %v1610, %v1609
      %v1677 = vpack.c.bf16 %v1612, %v1611
      %v1678 = vpack.c.bf16 %v1614, %v1613
      %v1679 = vpack.c.bf16 %v1616, %v1615
      %v1680 = vpack.c.bf16 %v1618, %v1617
      %v1681 = vpack.c.bf16 %v1620, %v1619
      %v1743 = vunpack.c.l.b16 %v1621
      %v1744 = vunpack.c.h.b16 %v1621
      %v1745 = vunpack.c.l.b16 %v1622
      %v1746 = vunpack.c.h.b16 %v1622
      %v1747 = vunpack.c.l.b16 %v1623
      %v1748 = vunpack.c.h.b16 %v1623
      %v1749 = vunpack.c.l.b16 %v1624
      %v1750 = vunpack.c.h.b16 %v1624
      %v1751 = vunpack.c.l.b16 %v1625
      %v1752 = vunpack.c.h.b16 %v1625
      %v1753 = vunpack.c.l.b16 %v1626
      %v1754 = vunpack.c.h.b16 %v1626
      %v1755 = vunpack.c.l.b16 %v1627
      %v1756 = vunpack.c.h.b16 %v1627
      %v1757 = vunpack.c.l.b16 %v1628
      %v1758 = vunpack.c.h.b16 %v1628
      %v1759 = vunpack.c.l.b16 %v1629
      %v1760 = vunpack.c.h.b16 %v1629
      %v1761 = vunpack.c.l.b16 %v1630
      %v1762 = vunpack.c.h.b16 %v1630
      %v1763 = vunpack.c.l.b16 %v1631
      %v1764 = vunpack.c.h.b16 %v1631
      %v1765 = vunpack.c.l.b16 %v1632
      %v1766 = vunpack.c.h.b16 %v1632
      %v1767 = vunpack.c.l.b16 %v1633
      %v1768 = vunpack.c.h.b16 %v1633
      %v1769 = vunpack.c.l.b16 %v1634
      %v1770 = vunpack.c.h.b16 %v1634
      %v1771 = vunpack.c.l.b16 %v1635
      %v1772 = vunpack.c.h.b16 %v1635
      %v1773 = vunpack.c.l.b16 %v1636
      %v1774 = vunpack.c.h.b16 %v1636
      %v1775 = vunpack.c.l.b16 %v1637
      %v1776 = vunpack.c.h.b16 %v1637
      %v1777 = vunpack.c.l.b16 %v1638
      %v1778 = vunpack.c.h.b16 %v1638
      %v1779 = vunpack.c.l.b16 %v1639
      %v1780 = vunpack.c.h.b16 %v1639
      %v1781 = vunpack.c.l.b16 %v1640
      %v1782 = vunpack.c.h.b16 %v1640
      %v1783 = vunpack.c.l.b16 %v1641
      %v1784 = vunpack.c.h.b16 %v1641
      %v1785 = vunpack.c.l.b16 %v1642
      %v1786 = vunpack.c.h.b16 %v1642
      %v1787 = vunpack.c.l.b16 %v1643
      %v1788 = vunpack.c.h.b16 %v1643
      %v1789 = vunpack.c.l.b16 %v1644
      %v1790 = vunpack.c.h.b16 %v1644
      %v1791 = vunpack.c.l.b16 %v1645
      %v1792 = vunpack.c.h.b16 %v1645
      %v1793 = vunpack.c.l.b16 %v1646
      %v1794 = vunpack.c.h.b16 %v1646
      %v1795 = vunpack.c.l.b16 %v1647
      %v1796 = vunpack.c.h.b16 %v1647
      %v1797 = vunpack.c.l.b16 %v1648
      %v1798 = vunpack.c.h.b16 %v1648
      %v1799 = vunpack.c.l.b16 %v1649
      %v1800 = vunpack.c.h.b16 %v1649
      %v1801 = vunpack.c.l.b16 %v1650
      %v1802 = vunpack.c.h.b16 %v1650
      %v1803 = vunpack.c.l.b16 %v1651
      %v1804 = vunpack.c.h.b16 %v1651
      %v1805 = vunpack.c.l.b16 %v1652
      %v1806 = vunpack.c.h.b16 %v1652
      %v1807 = vunpack.c.l.b16 %v1653
      %v1808 = vunpack.c.h.b16 %v1653
      %v1809 = vunpack.c.l.b16 %v1654
      %v1810 = vunpack.c.h.b16 %v1654
      %v1811 = vunpack.c.l.b16 %v1655
      %v1812 = vunpack.c.h.b16 %v1655
      %v1813 = vunpack.c.l.b16 %v1656
      %v1814 = vunpack.c.h.b16 %v1656
      %v1815 = vunpack.c.l.b16 %v1657
      %v1816 = vunpack.c.h.b16 %v1657
      %v1817 = vunpack.c.l.b16 %v1658
      %v1818 = vunpack.c.h.b16 %v1658
      %v1819 = vunpack.c.l.b16 %v1659
      %v1820 = vunpack.c.h.b16 %v1659
      %v1821 = vunpack.c.l.b16 %v1660
      %v1822 = vunpack.c.h.b16 %v1660
      %v1823 = vunpack.c.l.b16 %v1661
      %v1824 = vunpack.c.h.b16 %v1661
      %v1825 = vunpack.c.l.b16 %v1662
      %v1826 = vunpack.c.h.b16 %v1662
      %v1827 = vunpack.c.l.b16 %v1663
      %v1828 = vunpack.c.h.b16 %v1663
      %v1829 = vunpack.c.l.b16 %v1664
      %v1830 = vunpack.c.h.b16 %v1664
      %v1831 = vunpack.c.l.b16 %v1665
      %v1832 = vunpack.c.h.b16 %v1665
      %v1833 = vunpack.c.l.b16 %v1666
      %v1834 = vunpack.c.h.b16 %v1666
      %v1835 = vunpack.c.l.b16 %v1667
      %v1836 = vunpack.c.h.b16 %v1667
      %v1837 = vunpack.c.l.b16 %v1668
      %v1838 = vunpack.c.h.b16 %v1668
      %v1839 = vunpack.c.l.b16 %v1669
      %v1840 = vunpack.c.h.b16 %v1669
      %v1841 = vunpack.c.l.b16 %v1670
      %v1842 = vunpack.c.h.b16 %v1670
      %v1843 = vunpack.c.l.b16 %v1671
      %v1844 = vunpack.c.h.b16 %v1671
      %v1845 = vunpack.c.l.b16 %v1672
      %v1846 = vunpack.c.h.b16 %v1672
      %v1847 = vunpack.c.l.b16 %v1673
      %v1848 = vunpack.c.h.b16 %v1673
      %v1849 = vunpack.c.l.b16 %v1674
      %v1850 = vunpack.c.h.b16 %v1674
      %v1851 = vunpack.c.l.b16 %v1675
      %v1852 = vunpack.c.h.b16 %v1675
      %v1853 = vunpack.c.l.b16 %v1676
      %v1854 = vunpack.c.h.b16 %v1676
      %v1855 = vunpack.c.l.b16 %v1677
      %v1856 = vunpack.c.h.b16 %v1677
      %v1857 = vunpack.c.l.b16 %v1678
      %v1858 = vunpack.c.h.b16 %v1678
      %v1859 = vunpack.c.l.b16 %v1679
      %v1860 = vunpack.c.h.b16 %v1679
      %v1861 = vunpack.c.l.b16 %v1680
      %v1862 = vunpack.c.h.b16 %v1680
      %v1863 = vunpack.c.l.b16 %v1681
      %v1864 = vunpack.c.h.b16 %v1681
      %v1865 = vpack.c.b16 %v1743, %v1743
      %v1866 = vpack.c.b16 %v1744, %v1744
      %v1867 = vpack.c.b16 %v1745, %v1745
      %v1868 = vpack.c.b16 %v1746, %v1746
      %v1869 = vpack.c.b16 %v1747, %v1747
      %v1870 = vpack.c.b16 %v1748, %v1748
      %v1871 = vpack.c.b16 %v1749, %v1749
      %v1872 = vpack.c.b16 %v1750, %v1750
      %v1873 = vpack.c.b16 %v1751, %v1751
      %v1874 = vpack.c.b16 %v1752, %v1752
      %v1875 = vpack.c.b16 %v1753, %v1753
      %v1876 = vpack.c.b16 %v1754, %v1754
      %v1877 = vpack.c.b16 %v1755, %v1755
      %v1878 = vpack.c.b16 %v1756, %v1756
      %v1879 = vpack.c.b16 %v1757, %v1757
      %v1880 = vpack.c.b16 %v1758, %v1758
      %v1881 = vpack.c.b16 %v1759, %v1759
      %v1882 = vpack.c.b16 %v1760, %v1760
      %v1883 = vpack.c.b16 %v1761, %v1761
      %v1884 = vpack.c.b16 %v1762, %v1762
      %v1885 = vpack.c.b16 %v1763, %v1763
      %v1886 = vpack.c.b16 %v1764, %v1764
      %v1887 = vpack.c.b16 %v1765, %v1765
      %v1888 = vpack.c.b16 %v1766, %v1766
      %v1889 = vpack.c.b16 %v1767, %v1767
      %v1890 = vpack.c.b16 %v1768, %v1768
      %v1891 = vpack.c.b16 %v1769, %v1769
      %v1892 = vpack.c.b16 %v1770, %v1770
      %v1893 = vpack.c.b16 %v1771, %v1771
      %v1894 = vpack.c.b16 %v1772, %v1772
      %v1895 = vpack.c.b16 %v1773, %v1773
      %v1896 = vpack.c.b16 %v1774, %v1774
      %v1897 = vpack.c.b16 %v1775, %v1775
      %v1898 = vpack.c.b16 %v1776, %v1776
      %v1899 = vpack.c.b16 %v1777, %v1777
      %v1900 = vpack.c.b16 %v1778, %v1778
      %v1901 = vpack.c.b16 %v1779, %v1779
      %v1902 = vpack.c.b16 %v1780, %v1780
      %v1903 = vpack.c.b16 %v1781, %v1781
      %v1904 = vpack.c.b16 %v1782, %v1782
      %v1905 = vpack.c.b16 %v1783, %v1783
      %v1906 = vpack.c.b16 %v1784, %v1784
      %v1907 = vpack.c.b16 %v1785, %v1785
      %v1908 = vpack.c.b16 %v1786, %v1786
      %v1909 = vpack.c.b16 %v1787, %v1787
      %v1910 = vpack.c.b16 %v1788, %v1788
      %v1911 = vpack.c.b16 %v1789, %v1789
      %v1912 = vpack.c.b16 %v1790, %v1790
      %v1913 = vpack.c.b16 %v1791, %v1791
      %v1914 = vpack.c.b16 %v1792, %v1792
      %v1915 = vpack.c.b16 %v1793, %v1793
      %v1916 = vpack.c.b16 %v1794, %v1794
      %v1917 = vpack.c.b16 %v1795, %v1795
      %v1918 = vpack.c.b16 %v1796, %v1796
      %v1919 = vpack.c.b16 %v1797, %v1797
      %v1920 = vpack.c.b16 %v1798, %v1798
      %v1921 = vpack.c.b16 %v1799, %v1799
      %v1922 = vpack.c.b16 %v1800, %v1800
      %v1923 = vpack.c.b16 %v1801, %v1801
      %v1924 = vpack.c.b16 %v1802, %v1802
      %v1925 = vpack.c.b16 %v1803, %v1803
      %v1926 = vpack.c.b16 %v1804, %v1804
      %v1927 = vpack.c.b16 %v1805, %v1805
      %v1928 = vpack.c.b16 %v1806, %v1806
      %v1929 = vpack.c.b16 %v1807, %v1807
      %v1930 = vpack.c.b16 %v1808, %v1808
      %v1931 = vpack.c.b16 %v1809, %v1809
      %v1932 = vpack.c.b16 %v1810, %v1810
      %v1933 = vpack.c.b16 %v1811, %v1811
      %v1934 = vpack.c.b16 %v1812, %v1812
      %v1935 = vpack.c.b16 %v1813, %v1813
      %v1936 = vpack.c.b16 %v1814, %v1814
      %v1937 = vpack.c.b16 %v1815, %v1815
      %v1938 = vpack.c.b16 %v1816, %v1816
      %v1939 = vpack.c.b16 %v1817, %v1817
      %v1940 = vpack.c.b16 %v1818, %v1818
      %v1941 = vpack.c.b16 %v1819, %v1819
      %v1942 = vpack.c.b16 %v1820, %v1820
      %v1943 = vpack.c.b16 %v1821, %v1821
      %v1944 = vpack.c.b16 %v1822, %v1822
      %v1945 = vpack.c.b16 %v1823, %v1823
      %v1946 = vpack.c.b16 %v1824, %v1824
      %v1947 = vpack.c.b16 %v1825, %v1825
      %v1948 = vpack.c.b16 %v1826, %v1826
      %v1949 = vpack.c.b16 %v1827, %v1827
      %v1950 = vpack.c.b16 %v1828, %v1828
      %v1951 = vpack.c.b16 %v1829, %v1829
      %v1952 = vpack.c.b16 %v1830, %v1830
      %v1953 = vpack.c.b16 %v1831, %v1831
      %v1954 = vpack.c.b16 %v1832, %v1832
      %v1955 = vpack.c.b16 %v1833, %v1833
      %v1956 = vpack.c.b16 %v1834, %v1834
      %v1957 = vpack.c.b16 %v1835, %v1835
      %v1958 = vpack.c.b16 %v1836, %v1836
      %v1959 = vpack.c.b16 %v1837, %v1837
      %v1960 = vpack.c.b16 %v1838, %v1838
      %v1961 = vpack.c.b16 %v1839, %v1839
      %v1962 = vpack.c.b16 %v1840, %v1840
      %v1963 = vpack.c.b16 %v1841, %v1841
      %v1964 = vpack.c.b16 %v1842, %v1842
      %v1965 = vpack.c.b16 %v1843, %v1843
      %v1966 = vpack.c.b16 %v1844, %v1844
      %v1967 = vpack.c.b16 %v1845, %v1845
      %v1968 = vpack.c.b16 %v1846, %v1846
      %v1969 = vpack.c.b16 %v1847, %v1847
      %v1970 = vpack.c.b16 %v1848, %v1848
      %v1971 = vpack.c.b16 %v1849, %v1849
      %v1972 = vpack.c.b16 %v1850, %v1850
      %v1973 = vpack.c.b16 %v1851, %v1851
      %v1974 = vpack.c.b16 %v1852, %v1852
      %v1975 = vpack.c.b16 %v1853, %v1853
      %v1976 = vpack.c.b16 %v1854, %v1854
      %v1977 = vpack.c.b16 %v1855, %v1855
      %v1978 = vpack.c.b16 %v1856, %v1856
      %v1979 = vpack.c.b16 %v1857, %v1857
      %v1980 = vpack.c.b16 %v1858, %v1858
      %v1981 = vpack.c.b16 %v1859, %v1859
      %v1982 = vpack.c.b16 %v1860, %v1860
      %v1983 = vpack.c.b16 %v1861, %v1861
      %v1984 = vpack.c.b16 %v1862, %v1862
      %v1985 = vpack.c.b16 %v1863, %v1863
      %v1986 = vpack.c.b16 %v1864, %v1864
      %2109 = vst [vmem:[%s172] sm:$0xf] %v1865
      %2110 = vst [vmem:[%s172 + $0x4] sm:$0xf] %v1866
      %2111 = vst [vmem:[%s172 + $0x8] sm:$0xf] %v1867
      %2112 = vst [vmem:[%s172 + $0xc] sm:$0xf] %v1868
      %2113 = vst [vmem:[%s172 + $0x10] sm:$0xf] %v1869
      %2114 = vst [vmem:[%s172 + $0x14] sm:$0xf] %v1870
      %2115 = vst [vmem:[%s172 + $0x18] sm:$0xf] %v1871
      %2116 = vst [vmem:[%s172 + $0x1c] sm:$0xf] %v1872
      %2117 = vst [vmem:[%s172 + $0x20] sm:$0xf] %v1873
      %2118 = vst [vmem:[%s172 + $0x24] sm:$0xf] %v1874
      %2119 = vst [vmem:[%s172 + $0x28] sm:$0xf] %v1875
      %2120 = vst [vmem:[%s172 + $0x2c] sm:$0xf] %v1876
      %2121 = vst [vmem:[%s172 + $0x30] sm:$0xf] %v1877
      %2122 = vst [vmem:[%s172 + $0x34] sm:$0xf] %v1878
      %2123 = vst [vmem:[%s172 + $0x38] sm:$0xf] %v1879
      %2124 = vst [vmem:[%s172 + $0x3c] sm:$0xf] %v1880
      %2125 = vst [vmem:[%s172 + $0x40] sm:$0xf] %v1881
      %2126 = vst [vmem:[%s172 + $0x44] sm:$0xf] %v1882
      %2127 = vst [vmem:[%s172 + $0x48] sm:$0xf] %v1883
      %2128 = vst [vmem:[%s172 + $0x4c] sm:$0xf] %v1884
      %2129 = vst [vmem:[%s172 + $0x50] sm:$0xf] %v1885
      %2130 = vst [vmem:[%s172 + $0x54] sm:$0xf] %v1886
      %2131 = vst [vmem:[%s172 + $0x58] sm:$0xf] %v1887
      %2132 = vst [vmem:[%s172 + $0x5c] sm:$0xf] %v1888
      %2133 = vst [vmem:[%s172 + $0x60] sm:$0xf] %v1889
      %2134 = vst [vmem:[%s172 + $0x64] sm:$0xf] %v1890
      %2135 = vst [vmem:[%s172 + $0x68] sm:$0xf] %v1891
      %2136 = vst [vmem:[%s172 + $0x6c] sm:$0xf] %v1892
      %2137 = vst [vmem:[%s172 + $0x70] sm:$0xf] %v1893
      %2138 = vst [vmem:[%s172 + $0x74] sm:$0xf] %v1894
      %2139 = vst [vmem:[%s172 + $0x78] sm:$0xf] %v1895
      %2140 = vst [vmem:[%s172 + $0x7c] sm:$0xf] %v1896
      %2141 = vst [vmem:[%s172 + $0x80] sm:$0xf] %v1897
      %2142 = vst [vmem:[%s172 + $0x84] sm:$0xf] %v1898
      %2143 = vst [vmem:[%s172 + $0x88] sm:$0xf] %v1899
      %2144 = vst [vmem:[%s172 + $0x8c] sm:$0xf] %v1900
      %2145 = vst [vmem:[%s172 + $0x90] sm:$0xf] %v1901
      %2146 = vst [vmem:[%s172 + $0x94] sm:$0xf] %v1902
      %2147 = vst [vmem:[%s172 + $0x98] sm:$0xf] %v1903
      %2148 = vst [vmem:[%s172 + $0x9c] sm:$0xf] %v1904
      %2149 = vst [vmem:[%s172 + $0xa0] sm:$0xf] %v1905
      %2150 = vst [vmem:[%s172 + $0xa4] sm:$0xf] %v1906
      %2151 = vst [vmem:[%s172 + $0xa8] sm:$0xf] %v1907
      %2152 = vst [vmem:[%s172 + $0xac] sm:$0xf] %v1908
      %2153 = vst [vmem:[%s172 + $0xb0] sm:$0xf] %v1909
      %2154 = vst [vmem:[%s172 + $0xb4] sm:$0xf] %v1910
      %2155 = vst [vmem:[%s172 + $0xb8] sm:$0xf] %v1911
      %2156 = vst [vmem:[%s172 + $0xbc] sm:$0xf] %v1912
      %2157 = vst [vmem:[%s172 + $0xc0] sm:$0xf] %v1913
      %2158 = vst [vmem:[%s172 + $0xc4] sm:$0xf] %v1914
      %2159 = vst [vmem:[%s172 + $0xc8] sm:$0xf] %v1915
      %2160 = vst [vmem:[%s172 + $0xcc] sm:$0xf] %v1916
      %2161 = vst [vmem:[%s172 + $0xd0] sm:$0xf] %v1917
      %2162 = vst [vmem:[%s172 + $0xd4] sm:$0xf] %v1918
      %2163 = vst [vmem:[%s172 + $0xd8] sm:$0xf] %v1919
      %2164 = vst [vmem:[%s172 + $0xdc] sm:$0xf] %v1920
      %2165 = vst [vmem:[%s172 + $0xe0] sm:$0xf] %v1921
      %2166 = vst [vmem:[%s172 + $0xe4] sm:$0xf] %v1922
      %2167 = vst [vmem:[%s172 + $0xe8] sm:$0xf] %v1923
      %2168 = vst [vmem:[%s172 + $0xec] sm:$0xf] %v1924
      %2169 = vst [vmem:[%s172 + $0xf0] sm:$0xf] %v1925
      %2170 = vst [vmem:[%s172 + $0xf4] sm:$0xf] %v1926
      %2171 = vst [vmem:[%s172 + $0xf8] sm:$0xf] %v1927
      %2172 = vst [vmem:[%s172 + $0xfc] sm:$0xf] %v1928
      %2173 = vst [vmem:[%s172 + $0x100] sm:$0xf] %v1929
      %2174 = vst [vmem:[%s172 + $0x104] sm:$0xf] %v1930
      %2175 = vst [vmem:[%s172 + $0x108] sm:$0xf] %v1931
      %2176 = vst [vmem:[%s172 + $0x10c] sm:$0xf] %v1932
      %2177 = vst [vmem:[%s172 + $0x110] sm:$0xf] %v1933
      %2178 = vst [vmem:[%s172 + $0x114] sm:$0xf] %v1934
      %2179 = vst [vmem:[%s172 + $0x118] sm:$0xf] %v1935
      %2180 = vst [vmem:[%s172 + $0x11c] sm:$0xf] %v1936
      %2181 = vst [vmem:[%s172 + $0x120] sm:$0xf] %v1937
      %2182 = vst [vmem:[%s172 + $0x124] sm:$0xf] %v1938
      %2183 = vst [vmem:[%s172 + $0x128] sm:$0xf] %v1939
      %2184 = vst [vmem:[%s172 + $0x12c] sm:$0xf] %v1940
      %2185 = vst [vmem:[%s172 + $0x130] sm:$0xf] %v1941
      %2186 = vst [vmem:[%s172 + $0x134] sm:$0xf] %v1942
      %2187 = vst [vmem:[%s172 + $0x138] sm:$0xf] %v1943
      %2188 = vst [vmem:[%s172 + $0x13c] sm:$0xf] %v1944
      %2189 = vst [vmem:[%s172 + $0x140] sm:$0xf] %v1945
      %2190 = vst [vmem:[%s172 + $0x144] sm:$0xf] %v1946
      %2191 = vst [vmem:[%s172 + $0x148] sm:$0xf] %v1947
      %2192 = vst [vmem:[%s172 + $0x14c] sm:$0xf] %v1948
      %2193 = vst [vmem:[%s172 + $0x150] sm:$0xf] %v1949
      %2194 = vst [vmem:[%s172 + $0x154] sm:$0xf] %v1950
      %2195 = vst [vmem:[%s172 + $0x158] sm:$0xf] %v1951
      %2196 = vst [vmem:[%s172 + $0x15c] sm:$0xf] %v1952
      %2197 = vst [vmem:[%s172 + $0x160] sm:$0xf] %v1953
      %2198 = vst [vmem:[%s172 + $0x164] sm:$0xf] %v1954
      %2199 = vst [vmem:[%s172 + $0x168] sm:$0xf] %v1955
      %2200 = vst [vmem:[%s172 + $0x16c] sm:$0xf] %v1956
      %2201 = vst [vmem:[%s172 + $0x170] sm:$0xf] %v1957
      %2202 = vst [vmem:[%s172 + $0x174] sm:$0xf] %v1958
      %2203 = vst [vmem:[%s172 + $0x178] sm:$0xf] %v1959
      %2204 = vst [vmem:[%s172 + $0x17c] sm:$0xf] %v1960
      %2205 = vst [vmem:[%s172 + $0x180] sm:$0xf] %v1961
      %2206 = vst [vmem:[%s172 + $0x184] sm:$0xf] %v1962
      %2207 = vst [vmem:[%s172 + $0x188] sm:$0xf] %v1963
      %2208 = vst [vmem:[%s172 + $0x18c] sm:$0xf] %v1964
      %2209 = vst [vmem:[%s172 + $0x190] sm:$0xf] %v1965
      %2210 = vst [vmem:[%s172 + $0x194] sm:$0xf] %v1966
      %2211 = vst [vmem:[%s172 + $0x198] sm:$0xf] %v1967
      %2212 = vst [vmem:[%s172 + $0x19c] sm:$0xf] %v1968
      %2213 = vst [vmem:[%s172 + $0x1a0] sm:$0xf] %v1969
      %2214 = vst [vmem:[%s172 + $0x1a4] sm:$0xf] %v1970
      %2215 = vst [vmem:[%s172 + $0x1a8] sm:$0xf] %v1971
      %2216 = vst [vmem:[%s172 + $0x1ac] sm:$0xf] %v1972
      %2217 = vst [vmem:[%s172 + $0x1b0] sm:$0xf] %v1973
      %2218 = vst [vmem:[%s172 + $0x1b4] sm:$0xf] %v1974
      %2219 = vst [vmem:[%s172 + $0x1b8] sm:$0xf] %v1975
      %2220 = vst [vmem:[%s172 + $0x1bc] sm:$0xf] %v1976
      %2221 = vst [vmem:[%s172 + $0x1c0] sm:$0xf] %v1977
      %2222 = vst [vmem:[%s172 + $0x1c4] sm:$0xf] %v1978
      %2223 = vst [vmem:[%s172 + $0x1c8] sm:$0xf] %v1979
      %2224 = vst [vmem:[%s172 + $0x1cc] sm:$0xf] %v1980
      %2225 = vst [vmem:[%s172 + $0x1d0] sm:$0xf] %v1981
      %2226 = vst [vmem:[%s172 + $0x1d4] sm:$0xf] %v1982
      %2227 = vst [vmem:[%s172 + $0x1d8] sm:$0xf] %v1983
      %2228 = vst [vmem:[%s172 + $0x1dc] sm:$0xf] %v1984
      %2229 = vst [vmem:[%s172 + $0x1e0] sm:$0xf] %v1985
      %2230 = vst [vmem:[%s172 + $0x1e4] sm:$0xf] %v1986
      %s2231 = smul.u32 122, %s14
      %p2232 = scmp.lt.s32.totalorder %s2231, 365
      %s2233 = scalar_select %p2232, %s2231, 365
      %s2234 = smul.addr %s2233, 4
      %s2235 = scalar_lea.vmem %s3, %s2234
      // Predicated region
      $region33: #{fc_discriminator_forward.4} parent=31 // pred_check
        %p2236 = pneg %p100
      $region34: #{fc_discriminator_forward.4} parent=31 // pred_check_branch
        %2238 = sbr.rel (%p2236) target = $region36
      $region35: #{fc_discriminator_forward.4} parent=31 // pred_region
        %s2239 = smul.u32 122, %s14
      $region36: #{fc_discriminator_forward.4} parent=31 // pred_fallthru
        _
    $region32: #{fc_discriminator_forward.4} parent=5 // pred_fallthru
      _
    %p2240 = scmp.le.s32.totalorder 2, %s9
    // Predicated region
    $region37: #{fc_discriminator_forward.4} parent=5 // pred_check
      %p2241 = pneg %p2240
    $region38: #{fc_discriminator_forward.4} parent=5 // pred_check_branch
      %2243 = sbr.rel (%p2241) target = $region40
    $region39: #{fc_discriminator_forward.4} parent=5 // pred_region
      %s2244 = ssub.s32 %s9, 2
      // Predicated region
      $region41: #{fc_discriminator_forward.4} parent=39 // pred_check
        %p2245 = pneg %p106
      $region42: #{fc_discriminator_forward.4} parent=39 // pred_check_branch
        %2247 = sbr.rel (%p2245) target = $region44
      $region43: #{fc_discriminator_forward.4} parent=39 // pred_region
        %s2248 = smul.u32 122, %s15
        %p2249 = scmp.lt.s32.totalorder %s2248, 365
        %s2250 = scalar_select %p2249, %s2248, 365
        %s2251 = smul.addr %s2250, 4
        %s2252 = scalar_lea.vmem %s3, %s2251
      $region44: #{fc_discriminator_forward.4} parent=39 // pred_fallthru
        _
    $region40: #{fc_discriminator_forward.4} parent=5 // pred_fallthru
      _
  $region6: #{fc_discriminator_forward.4} parent=0 // loop_footer
    %s13 = sadd.s32 1, %s9
  $region7: #{fc_discriminator_forward.4} parent=0 // loop_footer_branch
    %8 = sbr.rel target = $region3
  $region8: #{fc_discriminator_forward.4} parent=0 // loop_exit
    _

// kernel: fc_discriminator_forward.5
$region0: #{fc_discriminator_forward.5}
  #allocation0 [shape = 'u32[]', space=smem, size = 0x4, offset = 0x4, fixed_abs, tag = 'smem constant byte address 0x4 - core index']
  #allocation1 [shape = 'u32[144,128]{1,0:T(1,128)}', space=vmem, size = 0x12000, scoped, tag = 'internal scratch']
  %s0 = inlined_call_operand.vmem [shape: bf16[800,128], index: 0, kind: input, shape index: {}]
  %s1 = inlined_call_operand.vmem [shape: bf16[128,128], index: 1, kind: input, shape index: {}]
  %s2 = inlined_call_operand.vmem [shape: f32[1,128], index: 2, kind: input, shape index: {}]
  %s3 = inlined_call_operand.vmem [shape: bf16[800,128], index: 3, kind: output, shape index: {}]
  %s4 = sld [smem:[#allocation0]]
  $region45: #{fc_discriminator_forward.5} parent=0
    _
  %s6 = ssub.s32 1, %s4
  %s7 = scalar_select 0, %s6, %s4
  loop: start=0, step=1, limit=4
  $region2: #{fc_discriminator_forward.5} parent=0 // loop_pre_header
    _
  $region3: #{fc_discriminator_forward.5} parent=0 // loop_header
    %s9 = sphi 0, %s13
    %p10 = scmp.ge.s32.totalorder %s9, 4
    %s19 = sphi 0, %s21
    %s22 = sphi 0, %s19
    %s23 = sphi 0, %s22
    %s39 = sphi 0, %s23
    %s43 = sphi 0, %s43
    %s45 = sphi 0, %s43
    %s46 = sphi 0, %s45
    %s60 = sphi 0, %s46
    %s64 = sphi 0, %s64
    %s66 = sphi 0, %s64
    %s67 = sphi 0, %s66
    %s81 = sphi 0, %s67
    %s87 = sphi 0, %s89
    %s90 = sphi 0, %s87
    %s91 = sphi 0, %s90
    %s107 = sphi 0, %s91
  $region4: #{fc_discriminator_forward.5} parent=0 // loop_header_branch
    %12 = sbr.rel (%p10) target = $region8
  $region5: #{fc_discriminator_forward.5} parent=0 // loop_body
    %s14 = ssub.s32 %s9, 1
    %s15 = ssub.s32 %s9, 2
    %s16 = sadd.s32 %s9, 1
    %s17 = ssub.s32 %s9, %s16
    %p18 = scmp.eq.s32.totalorder %s17, 0
    %s20 = sadd.s32 %s19, 1
    %s21 = scalar_select %p18, %s19, %s20
    %p24 = pneg %p18
    %p25 = scmp.eq.s32.totalorder %s9, 1
    %p26 = por %p24, %p25
    %p27 = scmp.ne.s32.totalorder %s19, %s22
    %p28 = scmp.eq.s32.totalorder %s9, 0
    %p29 = por %p27, %p28
    %p30 = scmp.ne.s32.totalorder %s19, %s22
    %p31 = scmp.eq.s32.totalorder %s14, 1
    %p32 = por %p30, %p31
    %p33 = scmp.ne.s32.totalorder %s22, %s23
    %p34 = scmp.eq.s32.totalorder %s14, 0
    %p35 = por %p33, %p34
    %p36 = scmp.ne.s32.totalorder %s22, %s23
    %p37 = scmp.eq.s32.totalorder %s15, 1
    %p38 = por %p36, %p37
    %p40 = scmp.ne.s32.totalorder %s23, %s39
    %p41 = scmp.eq.s32.totalorder %s15, 0
    %p42 = por %p40, %p41
    %s44 = sadd.s32 %s43, 1
    %p47 = scmp.eq.s32.totalorder %s9, 1
    %p48 = scmp.ne.s32.totalorder %s43, %s45
    %p49 = scmp.eq.s32.totalorder %s9, 0
    %p50 = por %p48, %p49
    %p51 = scmp.ne.s32.totalorder %s43, %s45
    %p52 = scmp.eq.s32.totalorder %s14, 1
    %p53 = por %p51, %p52
    %p54 = scmp.ne.s32.totalorder %s45, %s46
    %p55 = scmp.eq.s32.totalorder %s14, 0
    %p56 = por %p54, %p55
    %p57 = scmp.ne.s32.totalorder %s45, %s46
    %p58 = scmp.eq.s32.totalorder %s15, 1
    %p59 = por %p57, %p58
    %p61 = scmp.ne.s32.totalorder %s46, %s60
    %p62 = scmp.eq.s32.totalorder %s15, 0
    %p63 = por %p61, %p62
    %s65 = sadd.s32 %s64, 1
    %p68 = scmp.eq.s32.totalorder %s9, 1
    %p69 = scmp.ne.s32.totalorder %s64, %s66
    %p70 = scmp.eq.s32.totalorder %s9, 0
    %p71 = por %p69, %p70
    %p72 = scmp.ne.s32.totalorder %s64, %s66
    %p73 = scmp.eq.s32.totalorder %s14, 1
    %p74 = por %p72, %p73
    %p75 = scmp.ne.s32.totalorder %s66, %s67
    %p76 = scmp.eq.s32.totalorder %s14, 0
    %p77 = por %p75, %p76
    %p78 = scmp.ne.s32.totalorder %s66, %s67
    %p79 = scmp.eq.s32.totalorder %s15, 1
    %p80 = por %p78, %p79
    %p82 = scmp.ne.s32.totalorder %s67, %s81
    %p83 = scmp.eq.s32.totalorder %s15, 0
    %p84 = por %p82, %p83
    %s85 = ssub.s32 %s9, %s16
    %p86 = scmp.eq.s32.totalorder %s85, 0
    %s88 = sadd.s32 %s87, 1
    %s89 = scalar_select %p86, %s87, %s88
    %p92 = pneg %p86
    %p93 = scmp.eq.s32.totalorder %s9, 1
    %p94 = por %p92, %p93
    %p95 = scmp.ne.s32.totalorder %s87, %s90
    %p96 = scmp.eq.s32.totalorder %s9, 0
    %p97 = por %p95, %p96
    %p98 = scmp.ne.s32.totalorder %s87, %s90
    %p99 = scmp.eq.s32.totalorder %s14, 1
    %p100 = por %p98, %p99
    %p101 = scmp.ne.s32.totalorder %s90, %s91
    %p102 = scmp.eq.s32.totalorder %s14, 0
    %p103 = por %p101, %p102
    %p104 = scmp.ne.s32.totalorder %s90, %s91
    %p105 = scmp.eq.s32.totalorder %s15, 1
    %p106 = por %p104, %p105
    %p108 = scmp.ne.s32.totalorder %s91, %s107
    %p109 = scmp.eq.s32.totalorder %s15, 0
    %p110 = por %p108, %p109
    %p111 = scmp.le.s32.totalorder 1, %s9
    %p112 = scmp.lt.s32.totalorder %s9, 3
    %p113 = pnand %p111, %p112
    %p114 = pneg %p113
    // Predicated region
    $region9: #{fc_discriminator_forward.5} parent=5 // pred_check
      _
    $region10: #{fc_discriminator_forward.5} parent=5 // pred_check_branch
      %116 = sbr.rel (%p113) target = $region12
    $region11: #{fc_discriminator_forward.5} parent=5 // pred_region
      %s117 = ssub.s32 %s9, 1
      // Predicated region
      $region13: #{fc_discriminator_forward.5} parent=11 // pred_check
        %p118 = pneg %p56
      $region14: #{fc_discriminator_forward.5} parent=11 // pred_check_branch
        %120 = sbr.rel (%p118) target = $region16
      $region15: #{fc_discriminator_forward.5} parent=11 // pred_region
        _
      $region16: #{fc_discriminator_forward.5} parent=11 // pred_fallthru
        _
      // Predicated region
      $region17: #{fc_discriminator_forward.5} parent=11 // pred_check
        %p121 = pneg %p77
      $region18: #{fc_discriminator_forward.5} parent=11 // pred_check_branch
        %123 = sbr.rel (%p121) target = $region20
      $region19: #{fc_discriminator_forward.5} parent=11 // pred_region
        _
      $region20: #{fc_discriminator_forward.5} parent=11 // pred_fallthru
        _
    $region12: #{fc_discriminator_forward.5} parent=5 // pred_fallthru
      _
    %p124 = scmp.lt.s32.totalorder %s9, 2
    // Predicated region
    $region21: #{fc_discriminator_forward.5} parent=5 // pred_check
      %p125 = pneg %p124
    $region22: #{fc_discriminator_forward.5} parent=5 // pred_check_branch
      %127 = sbr.rel (%p125) target = $region24
    $region23: #{fc_discriminator_forward.5} parent=5 // pred_region
      // Predicated region
      $region25: #{fc_discriminator_forward.5} parent=23 // pred_check
        %p128 = pneg %p29
      $region26: #{fc_discriminator_forward.5} parent=23 // pred_check_branch
        %130 = sbr.rel (%p128) target = $region28
      $region27: #{fc_discriminator_forward.5} parent=23 // pred_region
        %s131 = smul.u32 50, %s9
        %p132 = scmp.lt.s32.totalorder %s131, 99
        %s133 = scalar_select %p132, %s131, 99
        %s134 = smul.addr %s133, 4
        %s135 = scalar_lea.vmem %s0, %s134
        %s136 = smul.u32 50, %s9
      $region28: #{fc_discriminator_forward.5} parent=23 // pred_fallthru
        _
    $region24: #{fc_discriminator_forward.5} parent=5 // pred_fallthru
      _
    %p137 = scmp.le.s32.totalorder 1, %s9
    %p138 = scmp.lt.s32.totalorder %s9, 3
    %p139 = pnand %p137, %p138
    %p140 = pneg %p139
    // Predicated region
    $region29: #{fc_discriminator_forward.5} parent=5 // pred_check
      _
    $region30: #{fc_discriminator_forward.5} parent=5 // pred_check_branch
      %142 = sbr.rel (%p139) target = $region32
    $region31: #{fc_discriminator_forward.5} parent=5 // pred_region
      %s143 = ssub.s32 %s9, 1
      %s144 = smul.u32 50, %s14
      %p145 = scmp.lt.s32.totalorder %s144, 99
      %s146 = scalar_select %p145, %s144, 99
      %s147 = smul.addr %s146, 4
      %s148 = scalar_lea.vmem %s0, %s147
      %p149 = pneg %p35
      %p150 = pneg %p32
      %p151 = pneg %p56
      %p152 = pneg %p53
      %p153 = pneg %p77
      %p154 = pneg %p74
      %p155 = pneg %p103
      %p156 = pneg %p100
      %s157 = smul.u32 50, %s14
      %p158 = scmp.lt.s32.totalorder %s157, 99
      %s159 = scalar_select %p158, %s157, 99
      %s160 = smul.addr %s159, 4
      %s161 = scalar_lea.vmem %s3, %s160
      %s162 = smul.u32 50, %s14
      %p163 = scmp.lt.s32.totalorder %s162, 99
      %s164 = scalar_select %p163, %s162, 99
      %s165 = smul.addr %s164, 4
      %s166 = scalar_lea.vmem %s0, %s165
      %s167 = smul.u32 50, %s14
      %s168 = smul.u32 50, %s14
      %p169 = scmp.lt.s32.totalorder %s168, 99
      %s170 = scalar_select %p169, %s168, 99
      %s171 = smul.addr %s170, 4
      %s172 = scalar_lea.vmem %s3, %s171
      %s173 = smul.u32 50, %s14
      %v175 = vld [vmem:[%s166] sm:$0xf]
      %v176 = vld [vmem:[%s166 + $0x4] sm:$0xf]
      %v177 = vld [vmem:[%s166 + $0x8] sm:$0xf]
      %v178 = vld [vmem:[%s166 + $0xc] sm:$0xf]
      %v179 = vld [vmem:[%s166 + $0x10] sm:$0xf]
      %v180 = vld [vmem:[%s166 + $0x14] sm:$0xf]
      %v181 = vld [vmem:[%s166 + $0x18] sm:$0xf]
      %v182 = vld [vmem:[%s166 + $0x1c] sm:$0xf]
      %v183 = vld [vmem:[%s166 + $0x20] sm:$0xf]
      %v184 = vld [vmem:[%s166 + $0x24] sm:$0xf]
      %v185 = vld [vmem:[%s166 + $0x28] sm:$0xf]
      %v186 = vld [vmem:[%s166 + $0x2c] sm:$0xf]
      %v187 = vld [vmem:[%s166 + $0x30] sm:$0xf]
      %v188 = vld [vmem:[%s166 + $0x34] sm:$0xf]
      %v189 = vld [vmem:[%s166 + $0x38] sm:$0xf]
      %v190 = vld [vmem:[%s166 + $0x3c] sm:$0xf]
      %v191 = vld [vmem:[%s166 + $0x40] sm:$0xf]
      %v192 = vld [vmem:[%s166 + $0x44] sm:$0xf]
      %v193 = vld [vmem:[%s166 + $0x48] sm:$0xf]
      %v194 = vld [vmem:[%s166 + $0x4c] sm:$0xf]
      %v195 = vld [vmem:[%s166 + $0x50] sm:$0xf]
      %v196 = vld [vmem:[%s166 + $0x54] sm:$0xf]
      %v197 = vld [vmem:[%s166 + $0x58] sm:$0xf]
      %v198 = vld [vmem:[%s166 + $0x5c] sm:$0xf]
      %v199 = vld [vmem:[%s166 + $0x60] sm:$0xf]
      %v200 = vld [vmem:[%s166 + $0x64] sm:$0xf]
      %v201 = vld [vmem:[%s166 + $0x68] sm:$0xf]
      %v202 = vld [vmem:[%s166 + $0x6c] sm:$0xf]
      %v203 = vld [vmem:[%s166 + $0x70] sm:$0xf]
      %v204 = vld [vmem:[%s166 + $0x74] sm:$0xf]
      %v205 = vld [vmem:[%s166 + $0x78] sm:$0xf]
      %v206 = vld [vmem:[%s166 + $0x7c] sm:$0xf]
      %v207 = vld [vmem:[%s166 + $0x80] sm:$0xf]
      %v208 = vld [vmem:[%s166 + $0x84] sm:$0xf]
      %v209 = vld [vmem:[%s166 + $0x88] sm:$0xf]
      %v210 = vld [vmem:[%s166 + $0x8c] sm:$0xf]
      %v211 = vld [vmem:[%s166 + $0x90] sm:$0xf]
      %v212 = vld [vmem:[%s166 + $0x94] sm:$0xf]
      %v213 = vld [vmem:[%s166 + $0x98] sm:$0xf]
      %v214 = vld [vmem:[%s166 + $0x9c] sm:$0xf]
      %v215 = vld [vmem:[%s166 + $0xa0] sm:$0xf]
      %v216 = vld [vmem:[%s166 + $0xa4] sm:$0xf]
      %v217 = vld [vmem:[%s166 + $0xa8] sm:$0xf]
      %v218 = vld [vmem:[%s166 + $0xac] sm:$0xf]
      %v219 = vld [vmem:[%s166 + $0xb0] sm:$0xf]
      %v220 = vld [vmem:[%s166 + $0xb4] sm:$0xf]
      %v221 = vld [vmem:[%s166 + $0xb8] sm:$0xf]
      %v222 = vld [vmem:[%s166 + $0xbc] sm:$0xf]
      %v223 = vld [vmem:[%s166 + $0xc0] sm:$0xf]
      %v224 = vld [vmem:[%s166 + $0xc4] sm:$0xf]
      %v225 = vld [vmem:[%s1] sm:$0xf]
      %v226 = vld [vmem:[%s1 + $0x4] sm:$0xf]
      %v227 = vld [vmem:[%s1 + $0x8] sm:$0xf]
      %v228 = vld [vmem:[%s1 + $0xc] sm:$0xf]
      %v229 = vld [vmem:[%s1 + $0x10] sm:$0xf]
      %v230 = vld [vmem:[%s1 + $0x14] sm:$0xf]
      %v231 = vld [vmem:[%s1 + $0x18] sm:$0xf]
      %v232 = vld [vmem:[%s1 + $0x1c] sm:$0xf]
      %v233 = vld [vmem:[%s1 + $0x20] sm:$0xf]
      %v234 = vld [vmem:[%s1 + $0x24] sm:$0xf]
      %v235 = vld [vmem:[%s1 + $0x28] sm:$0xf]
      %v236 = vld [vmem:[%s1 + $0x2c] sm:$0xf]
      %v237 = vld [vmem:[%s1 + $0x30] sm:$0xf]
      %v238 = vld [vmem:[%s1 + $0x34] sm:$0xf]
      %v239 = vld [vmem:[%s1 + $0x38] sm:$0xf]
      %v240 = vld [vmem:[%s1 + $0x3c] sm:$0xf]
      %v241 = vld [vmem:[%s2] sm:$0x1]
      %v243 = vlaneseq
      %v244 = vshrl.u32 %v243, 7
      %v245 = vsub.s32 0, %v244
      %v246 = vrot.slane %v241, %v245
      %v298 = vunpack.c.l.b16 %v175
      %v299 = vunpack.c.l.b16 %v176
      %v300 = vunpack.c.l.b16 %v177
      %v301 = vunpack.c.l.b16 %v178
      %v302 = vunpack.c.l.b16 %v179
      %v303 = vunpack.c.l.b16 %v180
      %v304 = vunpack.c.l.b16 %v181
      %v305 = vunpack.c.l.b16 %v182
      %v306 = vunpack.c.l.b16 %v183
      %v307 = vunpack.c.l.b16 %v184
      %v308 = vunpack.c.l.b16 %v185
      %v309 = vunpack.c.l.b16 %v186
      %v310 = vunpack.c.l.b16 %v187
      %v311 = vunpack.c.l.b16 %v188
      %v312 = vunpack.c.l.b16 %v189
      %v313 = vunpack.c.l.b16 %v190
      %v314 = vunpack.c.l.b16 %v191
      %v315 = vunpack.c.l.b16 %v192
      %v316 = vunpack.c.l.b16 %v193
      %v317 = vunpack.c.l.b16 %v194
      %v318 = vunpack.c.l.b16 %v195
      %v319 = vunpack.c.l.b16 %v196
      %v320 = vunpack.c.l.b16 %v197
      %v321 = vunpack.c.l.b16 %v198
      %v322 = vunpack.c.l.b16 %v199
      %v323 = vunpack.c.l.b16 %v200
      %v324 = vunpack.c.l.b16 %v201
      %v325 = vunpack.c.l.b16 %v202
      %v326 = vunpack.c.l.b16 %v203
      %v327 = vunpack.c.l.b16 %v204
      %v328 = vunpack.c.l.b16 %v205
      %v329 = vunpack.c.l.b16 %v206
      %v330 = vunpack.c.l.b16 %v207
      %v331 = vunpack.c.l.b16 %v208
      %v332 = vunpack.c.l.b16 %v209
      %v333 = vunpack.c.l.b16 %v210
      %v334 = vunpack.c.l.b16 %v211
      %v335 = vunpack.c.l.b16 %v212
      %v336 = vunpack.c.l.b16 %v213
      %v337 = vunpack.c.l.b16 %v214
      %v338 = vunpack.c.l.b16 %v215
      %v339 = vunpack.c.l.b16 %v216
      %v340 = vunpack.c.l.b16 %v217
      %v341 = vunpack.c.l.b16 %v218
      %v342 = vunpack.c.l.b16 %v219
      %v343 = vunpack.c.l.b16 %v220
      %v344 = vunpack.c.l.b16 %v221
      %v345 = vunpack.c.l.b16 %v222
      %v346 = vunpack.c.l.b16 %v223
      %v347 = vunpack.c.l.b16 %v224
      %v348 = vpack.c.b16 %v299, %v298
      %v349 = vpack.c.b16 %v301, %v300
      %v350 = vpack.c.b16 %v303, %v302
      %v351 = vpack.c.b16 %v305, %v304
      %v352 = vpack.c.b16 %v307, %v306
      %v353 = vpack.c.b16 %v309, %v308
      %v354 = vpack.c.b16 %v311, %v310
      %v355 = vpack.c.b16 %v313, %v312
      %v356 = vpack.c.b16 %v315, %v314
      %v357 = vpack.c.b16 %v317, %v316
      %v358 = vpack.c.b16 %v319, %v318
      %v359 = vpack.c.b16 %v321, %v320
      %v360 = vpack.c.b16 %v323, %v322
      %v361 = vpack.c.b16 %v325, %v324
      %v362 = vpack.c.b16 %v327, %v326
      %v363 = vpack.c.b16 %v329, %v328
      %v364 = vpack.c.b16 %v331, %v330
      %v365 = vpack.c.b16 %v333, %v332
      %v366 = vpack.c.b16 %v335, %v334
      %v367 = vpack.c.b16 %v337, %v336
      %v368 = vpack.c.b16 %v339, %v338
      %v369 = vpack.c.b16 %v341, %v340
      %v370 = vpack.c.b16 %v343, %v342
      %v371 = vpack.c.b16 %v345, %v344
      %v372 = vpack.c.b16 %v347, %v346
      %v414 = vunpack.c.l.b16 %v225
      %v415 = vunpack.c.l.b16 %v226
      %v416 = vunpack.c.l.b16 %v227
      %v417 = vunpack.c.l.b16 %v228
      %v418 = vunpack.c.l.b16 %v229
      %v419 = vunpack.c.l.b16 %v230
      %v420 = vunpack.c.l.b16 %v231
      %v421 = vunpack.c.l.b16 %v232
      %v422 = vunpack.c.l.b16 %v233
      %v423 = vunpack.c.l.b16 %v234
      %v424 = vunpack.c.l.b16 %v235
      %v425 = vunpack.c.l.b16 %v236
      %v426 = vunpack.c.l.b16 %v237
      %v427 = vunpack.c.l.b16 %v238
      %v428 = vunpack.c.l.b16 %v239
      %v429 = vunpack.c.l.b16 %v240
      %v430 = vpack.c.b16 %v415, %v414
      %v431 = vpack.c.b16 %v417, %v416
      %v432 = vpack.c.b16 %v419, %v418
      %v433 = vpack.c.b16 %v421, %v420
      %v434 = vpack.c.b16 %v423, %v422
      %v435 = vpack.c.b16 %v425, %v424
      %v436 = vpack.c.b16 %v427, %v426
      %v437 = vpack.c.b16 %v429, %v428
      %446 = vmatprep.subr.bf16.mxu0 0
      %447 = vmatpush1.bf16.msra.mxu0 %v430
      %448 = vmatprep.subr.bf16.mxu0 0
      %449 = vmatpush1.bf16.msra.mxu0 %v431
      %450 = vmatprep.subr.bf16.mxu0 0
      %451 = vmatpush1.bf16.msra.mxu0 %v432
      %452 = vmatprep.subr.bf16.mxu0 0
      %453 = vmatpush1.bf16.msra.mxu0 %v433
      %454 = vmatprep.subr.bf16.mxu0 0
      %455 = vmatpush1.bf16.msra.mxu0 %v434
      %456 = vmatprep.subr.bf16.mxu0 0
      %457 = vmatpush1.bf16.msra.mxu0 %v435
      %458 = vmatprep.subr.bf16.mxu0 0
      %459 = vmatpush1.bf16.msra.mxu0 %v436
      %460 = vmatprep.subr.bf16.mxu0 0
      %461 = vmatpush1.bf16.msra.mxu0 %v437
      %462 = vmatprep.subr.bf16.mxu0 0
      %463 = vmatpush1.bf16.msra.mxu0 0
      %464 = vmatprep.subr.bf16.mxu0 0
      %465 = vmatpush1.bf16.msra.mxu0 0
      %466 = vmatprep.subr.bf16.mxu0 0
      %467 = vmatpush1.bf16.msra.mxu0 0
      %468 = vmatprep.subr.bf16.mxu0 0
      %469 = vmatpush1.bf16.msra.mxu0 0
      %470 = vmatprep.subr.bf16.mxu0 0
      %471 = vmatpush1.bf16.msra.mxu0 0
      %472 = vmatprep.subr.bf16.mxu0 0
      %473 = vmatpush1.bf16.msra.mxu0 0
      %474 = vmatprep.subr.bf16.mxu0 0
      %475 = vmatpush1.bf16.msra.mxu0 0
      %476 = vmatprep.subr.bf16.mxu0 0
      %477 = vmatpush1.bf16.msra.mxu0 0
      %478 = vmatprep.mubr.bf16.mxu0 0
      %479 = vmatmul.mubr.bf16.gmra.mrb[0].mxu0 %v348
      %v480 = vpop.f32.mrb[0].mxu0
      %v481 = vadd.f32 %v246, %v480
      %v482 = vpop.f32.mrb[0].mxu0
      %v483 = vpop.f32.mrb[0].mxu0
      %v484 = vadd.f32 %v246, %v483
      %v485 = vpop.f32.mrb[0].mxu0
      %486 = vmatprep.mubr.bf16.mxu0 0
      %487 = vmatmul.mubr.bf16.gmra.mrb[0].mxu0 %v349
      %v488 = vpop.f32.mrb[0].mxu0
      %v489 = vadd.f32 %v246, %v488
      %v490 = vpop.f32.mrb[0].mxu0
      %v491 = vpop.f32.mrb[0].mxu0
      %v492 = vadd.f32 %v246, %v491
      %v493 = vpop.f32.mrb[0].mxu0
      %494 = vmatprep.mubr.bf16.mxu0 0
      %495 = vmatmul.mubr.bf16.gmra.mrb[0].mxu0 %v350
      %v496 = vpop.f32.mrb[0].mxu0
      %v497 = vadd.f32 %v246, %v496
      %v498 = vpop.f32.mrb[0].mxu0
      %v499 = vpop.f32.mrb[0].mxu0
      %v500 = vadd.f32 %v246, %v499
      %v501 = vpop.f32.mrb[0].mxu0
      %502 = vmatprep.mubr.bf16.mxu0 0
      %503 = vmatmul.mubr.bf16.gmra.mrb[0].mxu0 %v351
      %v504 = vpop.f32.mrb[0].mxu0
      %v505 = vadd.f32 %v246, %v504
      %v506 = vpop.f32.mrb[0].mxu0
      %v507 = vpop.f32.mrb[0].mxu0
      %v508 = vadd.f32 %v246, %v507
      %v509 = vpop.f32.mrb[0].mxu0
      %510 = vmatprep.mubr.bf16.mxu0 0
      %511 = vmatmul.mubr.bf16.gmra.mrb[0].mxu0 %v352
      %v512 = vpop.f32.mrb[0].mxu0
      %v513 = vadd.f32 %v246, %v512
      %v514 = vpop.f32.mrb[0].mxu0
      %v515 = vpop.f32.mrb[0].mxu0
      %v516 = vadd.f32 %v246, %v515
      %v517 = vpop.f32.mrb[0].mxu0
      %518 = vmatprep.mubr.bf16.mxu0 0
      %519 = vmatmul.mubr.bf16.gmra.mrb[0].mxu0 %v353
      %v520 = vpop.f32.mrb[0].mxu0
      %v521 = vadd.f32 %v246, %v520
      %v522 = vpop.f32.mrb[0].mxu0
      %v523 = vpop.f32.mrb[0].mxu0
      %v524 = vadd.f32 %v246, %v523
      %v525 = vpop.f32.mrb[0].mxu0
      %526 = vmatprep.mubr.bf16.mxu0 0
      %527 = vmatmul.mubr.bf16.gmra.mrb[0].mxu0 %v354
      %v528 = vpop.f32.mrb[0].mxu0
      %v529 = vadd.f32 %v246, %v528
      %v530 = vpop.f32.mrb[0].mxu0
      %v531 = vpop.f32.mrb[0].mxu0
      %v532 = vadd.f32 %v246, %v531
      %v533 = vpop.f32.mrb[0].mxu0
      %534 = vmatprep.mubr.bf16.mxu0 0
      %535 = vmatmul.mubr.bf16.gmra.mrb[0].mxu0 %v355
      %v536 = vpop.f32.mrb[0].mxu0
      %v537 = vadd.f32 %v246, %v536
      %v538 = vpop.f32.mrb[0].mxu0
      %v539 = vpop.f32.mrb[0].mxu0
      %v540 = vadd.f32 %v246, %v539
      %v541 = vpop.f32.mrb[0].mxu0
      %542 = vmatprep.mubr.bf16.mxu0 0
      %543 = vmatmul.mubr.bf16.gmra.mrb[0].mxu0 %v356
      %v544 = vpop.f32.mrb[0].mxu0
      %v545 = vadd.f32 %v246, %v544
      %v546 = vpop.f32.mrb[0].mxu0
      %v547 = vpop.f32.mrb[0].mxu0
      %v548 = vadd.f32 %v246, %v547
      %v549 = vpop.f32.mrb[0].mxu0
      %550 = vmatprep.mubr.bf16.mxu0 0
      %551 = vmatmul.mubr.bf16.gmra.mrb[0].mxu0 %v357
      %v552 = vpop.f32.mrb[0].mxu0
      %v553 = vadd.f32 %v246, %v552
      %v554 = vpop.f32.mrb[0].mxu0
      %v555 = vpop.f32.mrb[0].mxu0
      %v556 = vadd.f32 %v246, %v555
      %v557 = vpop.f32.mrb[0].mxu0
      %558 = vmatprep.mubr.bf16.mxu0 0
      %559 = vmatmul.mubr.bf16.gmra.mrb[0].mxu0 %v358
      %v560 = vpop.f32.mrb[0].mxu0
      %v561 = vadd.f32 %v246, %v560
      %v562 = vpop.f32.mrb[0].mxu0
      %v563 = vpop.f32.mrb[0].mxu0
      %v564 = vadd.f32 %v246, %v563
      %v565 = vpop.f32.mrb[0].mxu0
      %566 = vmatprep.mubr.bf16.mxu0 0
      %567 = vmatmul.mubr.bf16.gmra.mrb[0].mxu0 %v359
      %v568 = vpop.f32.mrb[0].mxu0
      %v569 = vadd.f32 %v246, %v568
      %v570 = vpop.f32.mrb[0].mxu0
      %v571 = vpop.f32.mrb[0].mxu0
      %v572 = vadd.f32 %v246, %v571
      %v573 = vpop.f32.mrb[0].mxu0
      %574 = vmatprep.mubr.bf16.mxu0 0
      %575 = vmatmul.mubr.bf16.gmra.mrb[0].mxu0 %v360
      %v576 = vpop.f32.mrb[0].mxu0
      %v577 = vadd.f32 %v246, %v576
      %v578 = vpop.f32.mrb[0].mxu0
      %v579 = vpop.f32.mrb[0].mxu0
      %v580 = vadd.f32 %v246, %v579
      %v581 = vpop.f32.mrb[0].mxu0
      %582 = vmatprep.mubr.bf16.mxu0 0
      %583 = vmatmul.mubr.bf16.gmra.mrb[0].mxu0 %v361
      %v584 = vpop.f32.mrb[0].mxu0
      %v585 = vadd.f32 %v246, %v584
      %v586 = vpop.f32.mrb[0].mxu0
      %v587 = vpop.f32.mrb[0].mxu0
      %v588 = vadd.f32 %v246, %v587
      %v589 = vpop.f32.mrb[0].mxu0
      %590 = vmatprep.mubr.bf16.mxu0 0
      %591 = vmatmul.mubr.bf16.gmra.mrb[0].mxu0 %v362
      %v592 = vpop.f32.mrb[0].mxu0
      %v593 = vadd.f32 %v246, %v592
      %v594 = vpop.f32.mrb[0].mxu0
      %v595 = vpop.f32.mrb[0].mxu0
      %v596 = vadd.f32 %v246, %v595
      %v597 = vpop.f32.mrb[0].mxu0
      %598 = vmatprep.mubr.bf16.mxu0 0
      %599 = vmatmul.mubr.bf16.gmra.mrb[0].mxu0 %v363
      %v600 = vpop.f32.mrb[0].mxu0
      %v601 = vadd.f32 %v246, %v600
      %v602 = vpop.f32.mrb[0].mxu0
      %v603 = vpop.f32.mrb[0].mxu0
      %v604 = vadd.f32 %v246, %v603
      %v605 = vpop.f32.mrb[0].mxu0
      %606 = vmatprep.mubr.bf16.mxu0 0
      %607 = vmatmul.mubr.bf16.gmra.mrb[0].mxu0 %v364
      %v608 = vpop.f32.mrb[0].mxu0
      %v609 = vadd.f32 %v246, %v608
      %v610 = vpop.f32.mrb[0].mxu0
      %v611 = vpop.f32.mrb[0].mxu0
      %v612 = vadd.f32 %v246, %v611
      %v613 = vpop.f32.mrb[0].mxu0
      %614 = vmatprep.mubr.bf16.mxu0 0
      %615 = vmatmul.mubr.bf16.gmra.mrb[0].mxu0 %v365
      %v616 = vpop.f32.mrb[0].mxu0
      %v617 = vadd.f32 %v246, %v616
      %v618 = vpop.f32.mrb[0].mxu0
      %v619 = vpop.f32.mrb[0].mxu0
      %v620 = vadd.f32 %v246, %v619
      %v621 = vpop.f32.mrb[0].mxu0
      %622 = vmatprep.mubr.bf16.mxu0 0
      %623 = vmatmul.mubr.bf16.gmra.mrb[0].mxu0 %v366
      %v624 = vpop.f32.mrb[0].mxu0
      %v625 = vadd.f32 %v246, %v624
      %v626 = vpop.f32.mrb[0].mxu0
      %v627 = vpop.f32.mrb[0].mxu0
      %v628 = vadd.f32 %v246, %v627
      %v629 = vpop.f32.mrb[0].mxu0
      %630 = vmatprep.mubr.bf16.mxu0 0
      %631 = vmatmul.mubr.bf16.gmra.mrb[0].mxu0 %v367
      %v632 = vpop.f32.mrb[0].mxu0
      %v633 = vadd.f32 %v246, %v632
      %v634 = vpop.f32.mrb[0].mxu0
      %v635 = vpop.f32.mrb[0].mxu0
      %v636 = vadd.f32 %v246, %v635
      %v637 = vpop.f32.mrb[0].mxu0
      %638 = vmatprep.mubr.bf16.mxu0 0
      %639 = vmatmul.mubr.bf16.gmra.mrb[0].mxu0 %v368
      %v640 = vpop.f32.mrb[0].mxu0
      %v641 = vadd.f32 %v246, %v640
      %v642 = vpop.f32.mrb[0].mxu0
      %v643 = vpop.f32.mrb[0].mxu0
      %v644 = vadd.f32 %v246, %v643
      %v645 = vpop.f32.mrb[0].mxu0
      %646 = vmatprep.mubr.bf16.mxu0 0
      %647 = vmatmul.mubr.bf16.gmra.mrb[0].mxu0 %v369
      %v648 = vpop.f32.mrb[0].mxu0
      %v649 = vadd.f32 %v246, %v648
      %v650 = vpop.f32.mrb[0].mxu0
      %v651 = vpop.f32.mrb[0].mxu0
      %v652 = vadd.f32 %v246, %v651
      %v653 = vpop.f32.mrb[0].mxu0
      %654 = vmatprep.mubr.bf16.mxu0 0
      %655 = vmatmul.mubr.bf16.gmra.mrb[0].mxu0 %v370
      %v656 = vpop.f32.mrb[0].mxu0
      %v657 = vadd.f32 %v246, %v656
      %v658 = vpop.f32.mrb[0].mxu0
      %v659 = vpop.f32.mrb[0].mxu0
      %v660 = vadd.f32 %v246, %v659
      %v661 = vpop.f32.mrb[0].mxu0
      %662 = vmatprep.mubr.bf16.mxu0 0
      %663 = vmatmul.mubr.bf16.gmra.mrb[0].mxu0 %v371
      %v664 = vpop.f32.mrb[0].mxu0
      %v665 = vadd.f32 %v246, %v664
      %v666 = vpop.f32.mrb[0].mxu0
      %v667 = vpop.f32.mrb[0].mxu0
      %v668 = vadd.f32 %v246, %v667
      %v669 = vpop.f32.mrb[0].mxu0
      %670 = vmatprep.mubr.bf16.mxu0 0
      %671 = vmatmul.mubr.bf16.gmra.mrb[0].mxu0 %v372
      %v672 = vpop.f32.mrb[0].mxu0
      %v673 = vadd.f32 %v246, %v672
      %v674 = vpop.f32.mrb[0].mxu0
      %v675 = vpop.f32.mrb[0].mxu0
      %v676 = vadd.f32 %v246, %v675
      %v677 = vpop.f32.mrb[0].mxu0
      %678 = vdwg.mxu0
      %vm679 = vcmp.ge.f32.partialorder %v481, 0.0
      %vm680 = vcmp.ge.f32.partialorder %v484, 0.0
      %vm681 = vcmp.ge.f32.partialorder %v489, 0.0
      %vm682 = vcmp.ge.f32.partialorder %v492, 0.0
      %vm683 = vcmp.ge.f32.partialorder %v497, 0.0
      %vm684 = vcmp.ge.f32.partialorder %v500, 0.0
      %vm685 = vcmp.ge.f32.partialorder %v505, 0.0
      %vm686 = vcmp.ge.f32.partialorder %v508, 0.0
      %vm687 = vcmp.ge.f32.partialorder %v513, 0.0
      %vm688 = vcmp.ge.f32.partialorder %v516, 0.0
      %vm689 = vcmp.ge.f32.partialorder %v521, 0.0
      %vm690 = vcmp.ge.f32.partialorder %v524, 0.0
      %vm691 = vcmp.ge.f32.partialorder %v529, 0.0
      %vm692 = vcmp.ge.f32.partialorder %v532, 0.0
      %vm693 = vcmp.ge.f32.partialorder %v537, 0.0
      %vm694 = vcmp.ge.f32.partialorder %v540, 0.0
      %vm695 = vcmp.ge.f32.partialorder %v545, 0.0
      %vm696 = vcmp.ge.f32.partialorder %v548, 0.0
      %vm697 = vcmp.ge.f32.partialorder %v553, 0.0
      %vm698 = vcmp.ge.f32.partialorder %v556, 0.0
      %vm699 = vcmp.ge.f32.partialorder %v561, 0.0
      %vm700 = vcmp.ge.f32.partialorder %v564, 0.0
      %vm701 = vcmp.ge.f32.partialorder %v569, 0.0
      %vm702 = vcmp.ge.f32.partialorder %v572, 0.0
      %vm703 = vcmp.ge.f32.partialorder %v577, 0.0
      %vm704 = vcmp.ge.f32.partialorder %v580, 0.0
      %vm705 = vcmp.ge.f32.partialorder %v585, 0.0
      %vm706 = vcmp.ge.f32.partialorder %v588, 0.0
      %vm707 = vcmp.ge.f32.partialorder %v593, 0.0
      %vm708 = vcmp.ge.f32.partialorder %v596, 0.0
      %vm709 = vcmp.ge.f32.partialorder %v601, 0.0
      %vm710 = vcmp.ge.f32.partialorder %v604, 0.0
      %vm711 = vcmp.ge.f32.partialorder %v609, 0.0
      %vm712 = vcmp.ge.f32.partialorder %v612, 0.0
      %vm713 = vcmp.ge.f32.partialorder %v617, 0.0
      %vm714 = vcmp.ge.f32.partialorder %v620, 0.0
      %vm715 = vcmp.ge.f32.partialorder %v625, 0.0
      %vm716 = vcmp.ge.f32.partialorder %v628, 0.0
      %vm717 = vcmp.ge.f32.partialorder %v633, 0.0
      %vm718 = vcmp.ge.f32.partialorder %v636, 0.0
      %vm719 = vcmp.ge.f32.partialorder %v641, 0.0
      %vm720 = vcmp.ge.f32.partialorder %v644, 0.0
      %vm721 = vcmp.ge.f32.partialorder %v649, 0.0
      %vm722 = vcmp.ge.f32.partialorder %v652, 0.0
      %vm723 = vcmp.ge.f32.partialorder %v657, 0.0
      %vm724 = vcmp.ge.f32.partialorder %v660, 0.0
      %vm725 = vcmp.ge.f32.partialorder %v665, 0.0
      %vm726 = vcmp.ge.f32.partialorder %v668, 0.0
      %vm727 = vcmp.ge.f32.partialorder %v673, 0.0
      %vm728 = vcmp.ge.f32.partialorder %v676, 0.0
      %v729 = vmul.f32 %v481, 0.2
      %v730 = vmul.f32 %v484, 0.2
      %v731 = vmul.f32 %v489, 0.2
      %v732 = vmul.f32 %v492, 0.2
      %v733 = vmul.f32 %v497, 0.2
      %v734 = vmul.f32 %v500, 0.2
      %v735 = vmul.f32 %v505, 0.2
      %v736 = vmul.f32 %v508, 0.2
      %v737 = vmul.f32 %v513, 0.2
      %v738 = vmul.f32 %v516, 0.2
      %v739 = vmul.f32 %v521, 0.2
      %v740 = vmul.f32 %v524, 0.2
      %v741 = vmul.f32 %v529, 0.2
      %v742 = vmul.f32 %v532, 0.2
      %v743 = vmul.f32 %v537, 0.2
      %v744 = vmul.f32 %v540, 0.2
      %v745 = vmul.f32 %v545, 0.2
      %v746 = vmul.f32 %v548, 0.2
      %v747 = vmul.f32 %v553, 0.2
      %v748 = vmul.f32 %v556, 0.2
      %v749 = vmul.f32 %v561, 0.2
      %v750 = vmul.f32 %v564, 0.2
      %v751 = vmul.f32 %v569, 0.2
      %v752 = vmul.f32 %v572, 0.2
      %v753 = vmul.f32 %v577, 0.2
      %v754 = vmul.f32 %v580, 0.2
      %v755 = vmul.f32 %v585, 0.2
      %v756 = vmul.f32 %v588, 0.2
      %v757 = vmul.f32 %v593, 0.2
      %v758 = vmul.f32 %v596, 0.2
      %v759 = vmul.f32 %v601, 0.2
      %v760 = vmul.f32 %v604, 0.2
      %v761 = vmul.f32 %v609, 0.2
      %v762 = vmul.f32 %v612, 0.2
      %v763 = vmul.f32 %v617, 0.2
      %v764 = vmul.f32 %v620, 0.2
      %v765 = vmul.f32 %v625, 0.2
      %v766 = vmul.f32 %v628, 0.2
      %v767 = vmul.f32 %v633, 0.2
      %v768 = vmul.f32 %v636, 0.2
      %v769 = vmul.f32 %v641, 0.2
      %v770 = vmul.f32 %v644, 0.2
      %v771 = vmul.f32 %v649, 0.2
      %v772 = vmul.f32 %v652, 0.2
      %v773 = vmul.f32 %v657, 0.2
      %v774 = vmul.f32 %v660, 0.2
      %v775 = vmul.f32 %v665, 0.2
      %v776 = vmul.f32 %v668, 0.2
      %v777 = vmul.f32 %v673, 0.2
      %v778 = vmul.f32 %v676, 0.2
      %v779 = vsel %vm679, %v481, %v729
      %v780 = vsel %vm680, %v484, %v730
      %v781 = vsel %vm681, %v489, %v731
      %v782 = vsel %vm682, %v492, %v732
      %v783 = vsel %vm683, %v497, %v733
      %v784 = vsel %vm684, %v500, %v734
      %v785 = vsel %vm685, %v505, %v735
      %v786 = vsel %vm686, %v508, %v736
      %v787 = vsel %vm687, %v513, %v737
      %v788 = vsel %vm688, %v516, %v738
      %v789 = vsel %vm689, %v521, %v739
      %v790 = vsel %vm690, %v524, %v740
      %v791 = vsel %vm691, %v529, %v741
      %v792 = vsel %vm692, %v532, %v742
      %v793 = vsel %vm693, %v537, %v743
      %v794 = vsel %vm694, %v540, %v744
      %v795 = vsel %vm695, %v545, %v745
      %v796 = vsel %vm696, %v548, %v746
      %v797 = vsel %vm697, %v553, %v747
      %v798 = vsel %vm698, %v556, %v748
      %v799 = vsel %vm699, %v561, %v749
      %v800 = vsel %vm700, %v564, %v750
      %v801 = vsel %vm701, %v569, %v751
      %v802 = vsel %vm702, %v572, %v752
      %v803 = vsel %vm703, %v577, %v753
      %v804 = vsel %vm704, %v580, %v754
      %v805 = vsel %vm705, %v585, %v755
      %v806 = vsel %vm706, %v588, %v756
      %v807 = vsel %vm707, %v593, %v757
      %v808 = vsel %vm708, %v596, %v758
      %v809 = vsel %vm709, %v601, %v759
      %v810 = vsel %vm710, %v604, %v760
      %v811 = vsel %vm711, %v609, %v761
      %v812 = vsel %vm712, %v612, %v762
      %v813 = vsel %vm713, %v617, %v763
      %v814 = vsel %vm714, %v620, %v764
      %v815 = vsel %vm715, %v625, %v765
      %v816 = vsel %vm716, %v628, %v766
      %v817 = vsel %vm717, %v633, %v767
      %v818 = vsel %vm718, %v636, %v768
      %v819 = vsel %vm719, %v641, %v769
      %v820 = vsel %vm720, %v644, %v770
      %v821 = vsel %vm721, %v649, %v771
      %v822 = vsel %vm722, %v652, %v772
      %v823 = vsel %vm723, %v657, %v773
      %v824 = vsel %vm724, %v660, %v774
      %v825 = vsel %vm725, %v665, %v775
      %v826 = vsel %vm726, %v668, %v776
      %v827 = vsel %vm727, %v673, %v777
      %v828 = vsel %vm728, %v676, %v778
      %v829 = vpack.c.bf16 %v780, %v779
      %v830 = vpack.c.bf16 %v782, %v781
      %v831 = vpack.c.bf16 %v784, %v783
      %v832 = vpack.c.bf16 %v786, %v785
      %v833 = vpack.c.bf16 %v788, %v787
      %v834 = vpack.c.bf16 %v790, %v789
      %v835 = vpack.c.bf16 %v792, %v791
      %v836 = vpack.c.bf16 %v794, %v793
      %v837 = vpack.c.bf16 %v796, %v795
      %v838 = vpack.c.bf16 %v798, %v797
      %v839 = vpack.c.bf16 %v800, %v799
      %v840 = vpack.c.bf16 %v802, %v801
      %v841 = vpack.c.bf16 %v804, %v803
      %v842 = vpack.c.bf16 %v806, %v805
      %v843 = vpack.c.bf16 %v808, %v807
      %v844 = vpack.c.bf16 %v810, %v809
      %v845 = vpack.c.bf16 %v812, %v811
      %v846 = vpack.c.bf16 %v814, %v813
      %v847 = vpack.c.bf16 %v816, %v815
      %v848 = vpack.c.bf16 %v818, %v817
      %v849 = vpack.c.bf16 %v820, %v819
      %v850 = vpack.c.bf16 %v822, %v821
      %v851 = vpack.c.bf16 %v824, %v823
      %v852 = vpack.c.bf16 %v826, %v825
      %v853 = vpack.c.bf16 %v828, %v827
      %v879 = vunpack.c.l.b16 %v829
      %v880 = vunpack.c.h.b16 %v829
      %v881 = vunpack.c.l.b16 %v830
      %v882 = vunpack.c.h.b16 %v830
      %v883 = vunpack.c.l.b16 %v831
      %v884 = vunpack.c.h.b16 %v831
      %v885 = vunpack.c.l.b16 %v832
      %v886 = vunpack.c.h.b16 %v832
      %v887 = vunpack.c.l.b16 %v833
      %v888 = vunpack.c.h.b16 %v833
      %v889 = vunpack.c.l.b16 %v834
      %v890 = vunpack.c.h.b16 %v834
      %v891 = vunpack.c.l.b16 %v835
      %v892 = vunpack.c.h.b16 %v835
      %v893 = vunpack.c.l.b16 %v836
      %v894 = vunpack.c.h.b16 %v836
      %v895 = vunpack.c.l.b16 %v837
      %v896 = vunpack.c.h.b16 %v837
      %v897 = vunpack.c.l.b16 %v838
      %v898 = vunpack.c.h.b16 %v838
      %v899 = vunpack.c.l.b16 %v839
      %v900 = vunpack.c.h.b16 %v839
      %v901 = vunpack.c.l.b16 %v840
      %v902 = vunpack.c.h.b16 %v840
      %v903 = vunpack.c.l.b16 %v841
      %v904 = vunpack.c.h.b16 %v841
      %v905 = vunpack.c.l.b16 %v842
      %v906 = vunpack.c.h.b16 %v842
      %v907 = vunpack.c.l.b16 %v843
      %v908 = vunpack.c.h.b16 %v843
      %v909 = vunpack.c.l.b16 %v844
      %v910 = vunpack.c.h.b16 %v844
      %v911 = vunpack.c.l.b16 %v845
      %v912 = vunpack.c.h.b16 %v845
      %v913 = vunpack.c.l.b16 %v846
      %v914 = vunpack.c.h.b16 %v846
      %v915 = vunpack.c.l.b16 %v847
      %v916 = vunpack.c.h.b16 %v847
      %v917 = vunpack.c.l.b16 %v848
      %v918 = vunpack.c.h.b16 %v848
      %v919 = vunpack.c.l.b16 %v849
      %v920 = vunpack.c.h.b16 %v849
      %v921 = vunpack.c.l.b16 %v850
      %v922 = vunpack.c.h.b16 %v850
      %v923 = vunpack.c.l.b16 %v851
      %v924 = vunpack.c.h.b16 %v851
      %v925 = vunpack.c.l.b16 %v852
      %v926 = vunpack.c.h.b16 %v852
      %v927 = vunpack.c.l.b16 %v853
      %v928 = vunpack.c.h.b16 %v853
      %v929 = vpack.c.b16 %v879, %v879
      %v930 = vpack.c.b16 %v880, %v880
      %v931 = vpack.c.b16 %v881, %v881
      %v932 = vpack.c.b16 %v882, %v882
      %v933 = vpack.c.b16 %v883, %v883
      %v934 = vpack.c.b16 %v884, %v884
      %v935 = vpack.c.b16 %v885, %v885
      %v936 = vpack.c.b16 %v886, %v886
      %v937 = vpack.c.b16 %v887, %v887
      %v938 = vpack.c.b16 %v888, %v888
      %v939 = vpack.c.b16 %v889, %v889
      %v940 = vpack.c.b16 %v890, %v890
      %v941 = vpack.c.b16 %v891, %v891
      %v942 = vpack.c.b16 %v892, %v892
      %v943 = vpack.c.b16 %v893, %v893
      %v944 = vpack.c.b16 %v894, %v894
      %v945 = vpack.c.b16 %v895, %v895
      %v946 = vpack.c.b16 %v896, %v896
      %v947 = vpack.c.b16 %v897, %v897
      %v948 = vpack.c.b16 %v898, %v898
      %v949 = vpack.c.b16 %v899, %v899
      %v950 = vpack.c.b16 %v900, %v900
      %v951 = vpack.c.b16 %v901, %v901
      %v952 = vpack.c.b16 %v902, %v902
      %v953 = vpack.c.b16 %v903, %v903
      %v954 = vpack.c.b16 %v904, %v904
      %v955 = vpack.c.b16 %v905, %v905
      %v956 = vpack.c.b16 %v906, %v906
      %v957 = vpack.c.b16 %v907, %v907
      %v958 = vpack.c.b16 %v908, %v908
      %v959 = vpack.c.b16 %v909, %v909
      %v960 = vpack.c.b16 %v910, %v910
      %v961 = vpack.c.b16 %v911, %v911
      %v962 = vpack.c.b16 %v912, %v912
      %v963 = vpack.c.b16 %v913, %v913
      %v964 = vpack.c.b16 %v914, %v914
      %v965 = vpack.c.b16 %v915, %v915
      %v966 = vpack.c.b16 %v916, %v916
      %v967 = vpack.c.b16 %v917, %v917
      %v968 = vpack.c.b16 %v918, %v918
      %v969 = vpack.c.b16 %v919, %v919
      %v970 = vpack.c.b16 %v920, %v920
      %v971 = vpack.c.b16 %v921, %v921
      %v972 = vpack.c.b16 %v922, %v922
      %v973 = vpack.c.b16 %v923, %v923
      %v974 = vpack.c.b16 %v924, %v924
      %v975 = vpack.c.b16 %v925, %v925
      %v976 = vpack.c.b16 %v926, %v926
      %v977 = vpack.c.b16 %v927, %v927
      %v978 = vpack.c.b16 %v928, %v928
      %1029 = vst [vmem:[%s172] sm:$0xf] %v929
      %1030 = vst [vmem:[%s172 + $0x4] sm:$0xf] %v930
      %1031 = vst [vmem:[%s172 + $0x8] sm:$0xf] %v931
      %1032 = vst [vmem:[%s172 + $0xc] sm:$0xf] %v932
      %1033 = vst [vmem:[%s172 + $0x10] sm:$0xf] %v933
      %1034 = vst [vmem:[%s172 + $0x14] sm:$0xf] %v934
      %1035 = vst [vmem:[%s172 + $0x18] sm:$0xf] %v935
      %1036 = vst [vmem:[%s172 + $0x1c] sm:$0xf] %v936
      %1037 = vst [vmem:[%s172 + $0x20] sm:$0xf] %v937
      %1038 = vst [vmem:[%s172 + $0x24] sm:$0xf] %v938
      %1039 = vst [vmem:[%s172 + $0x28] sm:$0xf] %v939
      %1040 = vst [vmem:[%s172 + $0x2c] sm:$0xf] %v940
      %1041 = vst [vmem:[%s172 + $0x30] sm:$0xf] %v941
      %1042 = vst [vmem:[%s172 + $0x34] sm:$0xf] %v942
      %1043 = vst [vmem:[%s172 + $0x38] sm:$0xf] %v943
      %1044 = vst [vmem:[%s172 + $0x3c] sm:$0xf] %v944
      %1045 = vst [vmem:[%s172 + $0x40] sm:$0xf] %v945
      %1046 = vst [vmem:[%s172 + $0x44] sm:$0xf] %v946
      %1047 = vst [vmem:[%s172 + $0x48] sm:$0xf] %v947
      %1048 = vst [vmem:[%s172 + $0x4c] sm:$0xf] %v948
      %1049 = vst [vmem:[%s172 + $0x50] sm:$0xf] %v949
      %1050 = vst [vmem:[%s172 + $0x54] sm:$0xf] %v950
      %1051 = vst [vmem:[%s172 + $0x58] sm:$0xf] %v951
      %1052 = vst [vmem:[%s172 + $0x5c] sm:$0xf] %v952
      %1053 = vst [vmem:[%s172 + $0x60] sm:$0xf] %v953
      %1054 = vst [vmem:[%s172 + $0x64] sm:$0xf] %v954
      %1055 = vst [vmem:[%s172 + $0x68] sm:$0xf] %v955
      %1056 = vst [vmem:[%s172 + $0x6c] sm:$0xf] %v956
      %1057 = vst [vmem:[%s172 + $0x70] sm:$0xf] %v957
      %1058 = vst [vmem:[%s172 + $0x74] sm:$0xf] %v958
      %1059 = vst [vmem:[%s172 + $0x78] sm:$0xf] %v959
      %1060 = vst [vmem:[%s172 + $0x7c] sm:$0xf] %v960
      %1061 = vst [vmem:[%s172 + $0x80] sm:$0xf] %v961
      %1062 = vst [vmem:[%s172 + $0x84] sm:$0xf] %v962
      %1063 = vst [vmem:[%s172 + $0x88] sm:$0xf] %v963
      %1064 = vst [vmem:[%s172 + $0x8c] sm:$0xf] %v964
      %1065 = vst [vmem:[%s172 + $0x90] sm:$0xf] %v965
      %1066 = vst [vmem:[%s172 + $0x94] sm:$0xf] %v966
      %1067 = vst [vmem:[%s172 + $0x98] sm:$0xf] %v967
      %1068 = vst [vmem:[%s172 + $0x9c] sm:$0xf] %v968
      %1069 = vst [vmem:[%s172 + $0xa0] sm:$0xf] %v969
      %1070 = vst [vmem:[%s172 + $0xa4] sm:$0xf] %v970
      %1071 = vst [vmem:[%s172 + $0xa8] sm:$0xf] %v971
      %1072 = vst [vmem:[%s172 + $0xac] sm:$0xf] %v972
      %1073 = vst [vmem:[%s172 + $0xb0] sm:$0xf] %v973
      %1074 = vst [vmem:[%s172 + $0xb4] sm:$0xf] %v974
      %1075 = vst [vmem:[%s172 + $0xb8] sm:$0xf] %v975
      %1076 = vst [vmem:[%s172 + $0xbc] sm:$0xf] %v976
      %1077 = vst [vmem:[%s172 + $0xc0] sm:$0xf] %v977
      %1078 = vst [vmem:[%s172 + $0xc4] sm:$0xf] %v978
      %s1079 = smul.u32 50, %s14
      %p1080 = scmp.lt.s32.totalorder %s1079, 99
      %s1081 = scalar_select %p1080, %s1079, 99
      %s1082 = smul.addr %s1081, 4
      %s1083 = scalar_lea.vmem %s3, %s1082
      // Predicated region
      $region33: #{fc_discriminator_forward.5} parent=31 // pred_check
        %p1084 = pneg %p100
      $region34: #{fc_discriminator_forward.5} parent=31 // pred_check_branch
        %1086 = sbr.rel (%p1084) target = $region36
      $region35: #{fc_discriminator_forward.5} parent=31 // pred_region
        %s1087 = smul.u32 50, %s14
      $region36: #{fc_discriminator_forward.5} parent=31 // pred_fallthru
        _
    $region32: #{fc_discriminator_forward.5} parent=5 // pred_fallthru
      _
    %p1088 = scmp.le.s32.totalorder 2, %s9
    // Predicated region
    $region37: #{fc_discriminator_forward.5} parent=5 // pred_check
      %p1089 = pneg %p1088
    $region38: #{fc_discriminator_forward.5} parent=5 // pred_check_branch
      %1091 = sbr.rel (%p1089) target = $region40
    $region39: #{fc_discriminator_forward.5} parent=5 // pred_region
      %s1092 = ssub.s32 %s9, 2
      // Predicated region
      $region41: #{fc_discriminator_forward.5} parent=39 // pred_check
        %p1093 = pneg %p106
      $region42: #{fc_discriminator_forward.5} parent=39 // pred_check_branch
        %1095 = sbr.rel (%p1093) target = $region44
      $region43: #{fc_discriminator_forward.5} parent=39 // pred_region
        %s1096 = smul.u32 50, %s15
        %p1097 = scmp.lt.s32.totalorder %s1096, 99
        %s1098 = scalar_select %p1097, %s1096, 99
        %s1099 = smul.addr %s1098, 4
        %s1100 = scalar_lea.vmem %s3, %s1099
      $region44: #{fc_discriminator_forward.5} parent=39 // pred_fallthru
        _
    $region40: #{fc_discriminator_forward.5} parent=5 // pred_fallthru
      _
  $region6: #{fc_discriminator_forward.5} parent=0 // loop_footer
    %s13 = sadd.s32 1, %s9
  $region7: #{fc_discriminator_forward.5} parent=0 // loop_footer_branch
    %8 = sbr.rel target = $region3
  $region8: #{fc_discriminator_forward.5} parent=0 // loop_exit
    _

// kernel: fc_discriminator_forward.6
$region0: #{fc_discriminator_forward.6}
  #allocation0 [shape = 'u32[]', space=smem, size = 0x4, offset = 0x4, fixed_abs, tag = 'smem constant byte address 0x4 - core index']
  #allocation1 [shape = 'u32[144,128]{1,0:T(1,128)}', space=vmem, size = 0x12000, scoped, tag = 'internal scratch']
  %s0 = inlined_call_operand.vmem [shape: bf16[256,256], index: 0, kind: input, shape index: {}]
  %s1 = inlined_call_operand.vmem [shape: bf16[256,128], index: 1, kind: input, shape index: {}]
  %s2 = inlined_call_operand.vmem [shape: f32[1,128], index: 2, kind: input, shape index: {}]
  %s3 = inlined_call_operand.vmem [shape: bf16[256,128], index: 3, kind: output, shape index: {}]
  %s4 = sld [smem:[#allocation0]]
  $region45: #{fc_discriminator_forward.6} parent=0
    _
  %s6 = ssub.s32 1, %s4
  %s7 = scalar_select 0, %s6, %s4
  loop: start=0, step=1, limit=4
  $region2: #{fc_discriminator_forward.6} parent=0 // loop_pre_header
    _
  $region3: #{fc_discriminator_forward.6} parent=0 // loop_header
    %s9 = sphi 0, %s13
    %p10 = scmp.ge.s32.totalorder %s9, 4
    %s19 = sphi 0, %s21
    %s22 = sphi 0, %s19
    %s23 = sphi 0, %s22
    %s39 = sphi 0, %s23
    %s43 = sphi 0, %s43
    %s45 = sphi 0, %s43
    %s46 = sphi 0, %s45
    %s60 = sphi 0, %s46
    %s64 = sphi 0, %s64
    %s66 = sphi 0, %s64
    %s67 = sphi 0, %s66
    %s81 = sphi 0, %s67
    %s87 = sphi 0, %s89
    %s90 = sphi 0, %s87
    %s91 = sphi 0, %s90
    %s107 = sphi 0, %s91
  $region4: #{fc_discriminator_forward.6} parent=0 // loop_header_branch
    %12 = sbr.rel (%p10) target = $region8
  $region5: #{fc_discriminator_forward.6} parent=0 // loop_body
    %s14 = ssub.s32 %s9, 1
    %s15 = ssub.s32 %s9, 2
    %s16 = sadd.s32 %s9, 1
    %s17 = ssub.s32 %s9, %s16
    %p18 = scmp.eq.s32.totalorder %s17, 0
    %s20 = sadd.s32 %s19, 1
    %s21 = scalar_select %p18, %s19, %s20
    %p24 = pneg %p18
    %p25 = scmp.eq.s32.totalorder %s9, 1
    %p26 = por %p24, %p25
    %p27 = scmp.ne.s32.totalorder %s19, %s22
    %p28 = scmp.eq.s32.totalorder %s9, 0
    %p29 = por %p27, %p28
    %p30 = scmp.ne.s32.totalorder %s19, %s22
    %p31 = scmp.eq.s32.totalorder %s14, 1
    %p32 = por %p30, %p31
    %p33 = scmp.ne.s32.totalorder %s22, %s23
    %p34 = scmp.eq.s32.totalorder %s14, 0
    %p35 = por %p33, %p34
    %p36 = scmp.ne.s32.totalorder %s22, %s23
    %p37 = scmp.eq.s32.totalorder %s15, 1
    %p38 = por %p36, %p37
    %p40 = scmp.ne.s32.totalorder %s23, %s39
    %p41 = scmp.eq.s32.totalorder %s15, 0
    %p42 = por %p40, %p41
    %s44 = sadd.s32 %s43, 1
    %p47 = scmp.eq.s32.totalorder %s9, 1
    %p48 = scmp.ne.s32.totalorder %s43, %s45
    %p49 = scmp.eq.s32.totalorder %s9, 0
    %p50 = por %p48, %p49
    %p51 = scmp.ne.s32.totalorder %s43, %s45
    %p52 = scmp.eq.s32.totalorder %s14, 1
    %p53 = por %p51, %p52
    %p54 = scmp.ne.s32.totalorder %s45, %s46
    %p55 = scmp.eq.s32.totalorder %s14, 0
    %p56 = por %p54, %p55
    %p57 = scmp.ne.s32.totalorder %s45, %s46
    %p58 = scmp.eq.s32.totalorder %s15, 1
    %p59 = por %p57, %p58
    %p61 = scmp.ne.s32.totalorder %s46, %s60
    %p62 = scmp.eq.s32.totalorder %s15, 0
    %p63 = por %p61, %p62
    %s65 = sadd.s32 %s64, 1
    %p68 = scmp.eq.s32.totalorder %s9, 1
    %p69 = scmp.ne.s32.totalorder %s64, %s66
    %p70 = scmp.eq.s32.totalorder %s9, 0
    %p71 = por %p69, %p70
    %p72 = scmp.ne.s32.totalorder %s64, %s66
    %p73 = scmp.eq.s32.totalorder %s14, 1
    %p74 = por %p72, %p73
    %p75 = scmp.ne.s32.totalorder %s66, %s67
    %p76 = scmp.eq.s32.totalorder %s14, 0
    %p77 = por %p75, %p76
    %p78 = scmp.ne.s32.totalorder %s66, %s67
    %p79 = scmp.eq.s32.totalorder %s15, 1
    %p80 = por %p78, %p79
    %p82 = scmp.ne.s32.totalorder %s67, %s81
    %p83 = scmp.eq.s32.totalorder %s15, 0
    %p84 = por %p82, %p83
    %s85 = ssub.s32 %s9, %s16
    %p86 = scmp.eq.s32.totalorder %s85, 0
    %s88 = sadd.s32 %s87, 1
    %s89 = scalar_select %p86, %s87, %s88
    %p92 = pneg %p86
    %p93 = scmp.eq.s32.totalorder %s9, 1
    %p94 = por %p92, %p93
    %p95 = scmp.ne.s32.totalorder %s87, %s90
    %p96 = scmp.eq.s32.totalorder %s9, 0
    %p97 = por %p95, %p96
    %p98 = scmp.ne.s32.totalorder %s87, %s90
    %p99 = scmp.eq.s32.totalorder %s14, 1
    %p100 = por %p98, %p99
    %p101 = scmp.ne.s32.totalorder %s90, %s91
    %p102 = scmp.eq.s32.totalorder %s14, 0
    %p103 = por %p101, %p102
    %p104 = scmp.ne.s32.totalorder %s90, %s91
    %p105 = scmp.eq.s32.totalorder %s15, 1
    %p106 = por %p104, %p105
    %p108 = scmp.ne.s32.totalorder %s91, %s107
    %p109 = scmp.eq.s32.totalorder %s15, 0
    %p110 = por %p108, %p109
    %p111 = scmp.le.s32.totalorder 1, %s9
    %p112 = scmp.lt.s32.totalorder %s9, 3
    %p113 = pnand %p111, %p112
    %p114 = pneg %p113
    // Predicated region
    $region9: #{fc_discriminator_forward.6} parent=5 // pred_check
      _
    $region10: #{fc_discriminator_forward.6} parent=5 // pred_check_branch
      %116 = sbr.rel (%p113) target = $region12
    $region11: #{fc_discriminator_forward.6} parent=5 // pred_region
      %s117 = ssub.s32 %s9, 1
      // Predicated region
      $region13: #{fc_discriminator_forward.6} parent=11 // pred_check
        %p118 = pneg %p56
      $region14: #{fc_discriminator_forward.6} parent=11 // pred_check_branch
        %120 = sbr.rel (%p118) target = $region16
      $region15: #{fc_discriminator_forward.6} parent=11 // pred_region
        _
      $region16: #{fc_discriminator_forward.6} parent=11 // pred_fallthru
        _
      // Predicated region
      $region17: #{fc_discriminator_forward.6} parent=11 // pred_check
        %p121 = pneg %p77
      $region18: #{fc_discriminator_forward.6} parent=11 // pred_check_branch
        %123 = sbr.rel (%p121) target = $region20
      $region19: #{fc_discriminator_forward.6} parent=11 // pred_region
        _
      $region20: #{fc_discriminator_forward.6} parent=11 // pred_fallthru
        _
    $region12: #{fc_discriminator_forward.6} parent=5 // pred_fallthru
      _
    %p124 = scmp.lt.s32.totalorder %s9, 2
    // Predicated region
    $region21: #{fc_discriminator_forward.6} parent=5 // pred_check
      %p125 = pneg %p124
    $region22: #{fc_discriminator_forward.6} parent=5 // pred_check_branch
      %127 = sbr.rel (%p125) target = $region24
    $region23: #{fc_discriminator_forward.6} parent=5 // pred_region
      // Predicated region
      $region25: #{fc_discriminator_forward.6} parent=23 // pred_check
        %p128 = pneg %p29
      $region26: #{fc_discriminator_forward.6} parent=23 // pred_check_branch
        %130 = sbr.rel (%p128) target = $region28
      $region27: #{fc_discriminator_forward.6} parent=23 // pred_region
        %s131 = smul.u32 16, %s9
        %p132 = scmp.lt.s32.totalorder %s131, 31
        %s133 = scalar_select %p132, %s131, 31
        %s134 = smul.addr %s133, 2
        %s135 = smul.addr %s134, 4
        %s136 = scalar_lea.vmem %s0, %s135
        %s137 = smul.u32 16, %s9
      $region28: #{fc_discriminator_forward.6} parent=23 // pred_fallthru
        _
    $region24: #{fc_discriminator_forward.6} parent=5 // pred_fallthru
      _
    %p138 = scmp.le.s32.totalorder 1, %s9
    %p139 = scmp.lt.s32.totalorder %s9, 3
    %p140 = pnand %p138, %p139
    %p141 = pneg %p140
    // Predicated region
    $region29: #{fc_discriminator_forward.6} parent=5 // pred_check
      _
    $region30: #{fc_discriminator_forward.6} parent=5 // pred_check_branch
      %143 = sbr.rel (%p140) target = $region32
    $region31: #{fc_discriminator_forward.6} parent=5 // pred_region
      %s144 = ssub.s32 %s9, 1
      %s145 = smul.u32 16, %s14
      %p146 = scmp.lt.s32.totalorder %s145, 31
      %s147 = scalar_select %p146, %s145, 31
      %s148 = smul.addr %s147, 2
      %s149 = smul.addr %s148, 4
      %s150 = scalar_lea.vmem %s0, %s149
      %p151 = pneg %p35
      %p152 = pneg %p32
      %p153 = pneg %p56
      %p154 = pneg %p53
      %p155 = pneg %p77
      %p156 = pneg %p74
      %p157 = pneg %p103
      %p158 = pneg %p100
      %s159 = smul.u32 16, %s14
      %p160 = scmp.lt.s32.totalorder %s159, 31
      %s161 = scalar_select %p160, %s159, 31
      %s162 = smul.addr %s161, 4
      %s163 = scalar_lea.vmem %s3, %s162
      %s164 = smul.u32 16, %s14
      %p165 = scmp.lt.s32.totalorder %s164, 31
      %s166 = scalar_select %p165, %s164, 31
      %s167 = smul.addr %s166, 2
      %s168 = smul.addr %s167, 4
      %s169 = scalar_lea.vmem %s0, %s168
      %s170 = smul.u32 16, %s14
      %s171 = smul.u32 16, %s14
      %p172 = scmp.lt.s32.totalorder %s171, 31
      %s173 = scalar_select %p172, %s171, 31
      %s174 = smul.addr %s173, 4
      %s175 = scalar_lea.vmem %s3, %s174
      %s176 = smul.u32 16, %s14
      %v178 = vld [vmem:[%s169] sm:$0xff]
      %v179 = vld [vmem:[%s169 + $0x8] sm:$0xff]
      %v180 = vld [vmem:[%s169 + $0x10] sm:$0xff]
      %v181 = vld [vmem:[%s169 + $0x18] sm:$0xff]
      %v182 = vld [vmem:[%s169 + $0x20] sm:$0xff]
      %v183 = vld [vmem:[%s169 + $0x28] sm:$0xff]
      %v184 = vld [vmem:[%s169 + $0x30] sm:$0xff]
      %v185 = vld [vmem:[%s169 + $0x38] sm:$0xff]
      %v186 = vld [vmem:[%s169 + $0x40] sm:$0xff]
      %v187 = vld [vmem:[%s169 + $0x48] sm:$0xff]
      %v188 = vld [vmem:[%s169 + $0x50] sm:$0xff]
      %v189 = vld [vmem:[%s169 + $0x58] sm:$0xff]
      %v190 = vld [vmem:[%s169 + $0x60] sm:$0xff]
      %v191 = vld [vmem:[%s169 + $0x68] sm:$0xff]
      %v192 = vld [vmem:[%s169 + $0x70] sm:$0xff]
      %v193 = vld [vmem:[%s169 + $0x78] sm:$0xff]
      %v194 = vld [vmem:[%s1] sm:$0xf]
      %v195 = vld [vmem:[%s1 + $0x4] sm:$0xf]
      %v196 = vld [vmem:[%s1 + $0x8] sm:$0xf]
      %v197 = vld [vmem:[%s1 + $0xc] sm:$0xf]
      %v198 = vld [vmem:[%s1 + $0x10] sm:$0xf]
      %v199 = vld [vmem:[%s1 + $0x14] sm:$0xf]
      %v200 = vld [vmem:[%s1 + $0x18] sm:$0xf]
      %v201 = vld [vmem:[%s1 + $0x1c] sm:$0xf]
      %v202 = vld [vmem:[%s1 + $0x20] sm:$0xf]
      %v203 = vld [vmem:[%s1 + $0x24] sm:$0xf]
      %v204 = vld [vmem:[%s1 + $0x28] sm:$0xf]
      %v205 = vld [vmem:[%s1 + $0x2c] sm:$0xf]
      %v206 = vld [vmem:[%s1 + $0x30] sm:$0xf]
      %v207 = vld [vmem:[%s1 + $0x34] sm:$0xf]
      %v208 = vld [vmem:[%s1 + $0x38] sm:$0xf]
      %v209 = vld [vmem:[%s1 + $0x3c] sm:$0xf]
      %v210 = vld [vmem:[%s1 + $0x40] sm:$0xf]
      %v211 = vld [vmem:[%s1 + $0x44] sm:$0xf]
      %v212 = vld [vmem:[%s1 + $0x48] sm:$0xf]
      %v213 = vld [vmem:[%s1 + $0x4c] sm:$0xf]
      %v214 = vld [vmem:[%s1 + $0x50] sm:$0xf]
      %v215 = vld [vmem:[%s1 + $0x54] sm:$0xf]
      %v216 = vld [vmem:[%s1 + $0x58] sm:$0xf]
      %v217 = vld [vmem:[%s1 + $0x5c] sm:$0xf]
      %v218 = vld [vmem:[%s1 + $0x60] sm:$0xf]
      %v219 = vld [vmem:[%s1 + $0x64] sm:$0xf]
      %v220 = vld [vmem:[%s1 + $0x68] sm:$0xf]
      %v221 = vld [vmem:[%s1 + $0x6c] sm:$0xf]
      %v222 = vld [vmem:[%s1 + $0x70] sm:$0xf]
      %v223 = vld [vmem:[%s1 + $0x74] sm:$0xf]
      %v224 = vld [vmem:[%s1 + $0x78] sm:$0xf]
      %v225 = vld [vmem:[%s1 + $0x7c] sm:$0xf]
      %v226 = vld [vmem:[%s2] sm:$0x1]
      %v228 = vlaneseq
      %v229 = vshrl.u32 %v228, 7
      %v230 = vsub.s32 0, %v229
      %v231 = vrot.slane %v226, %v230
      %v249 = vunpack.c.l.b16 %v178
      %v250 = vunpack.c.h.b16 %v178
      %v251 = vunpack.c.l.b16 %v179
      %v252 = vunpack.c.h.b16 %v179
      %v253 = vunpack.c.l.b16 %v180
      %v254 = vunpack.c.h.b16 %v180
      %v255 = vunpack.c.l.b16 %v181
      %v256 = vunpack.c.h.b16 %v181
      %v257 = vunpack.c.l.b16 %v182
      %v258 = vunpack.c.h.b16 %v182
      %v259 = vunpack.c.l.b16 %v183
      %v260 = vunpack.c.h.b16 %v183
      %v261 = vunpack.c.l.b16 %v184
      %v262 = vunpack.c.h.b16 %v184
      %v263 = vunpack.c.l.b16 %v185
      %v264 = vunpack.c.h.b16 %v185
      %v265 = vunpack.c.l.b16 %v186
      %v266 = vunpack.c.h.b16 %v186
      %v267 = vunpack.c.l.b16 %v187
      %v268 = vunpack.c.h.b16 %v187
      %v269 = vunpack.c.l.b16 %v188
      %v270 = vunpack.c.h.b16 %v188
      %v271 = vunpack.c.l.b16 %v189
      %v272 = vunpack.c.h.b16 %v189
      %v273 = vunpack.c.l.b16 %v190
      %v274 = vunpack.c.h.b16 %v190
      %v275 = vunpack.c.l.b16 %v191
      %v276 = vunpack.c.h.b16 %v191
      %v277 = vunpack.c.l.b16 %v192
      %v278 = vunpack.c.h.b16 %v192
      %v279 = vunpack.c.l.b16 %v193
      %v280 = vunpack.c.h.b16 %v193
      %v281 = vpack.c.b16 %v251, %v249
      %v282 = vpack.c.b16 %v252, %v250
      %v283 = vpack.c.b16 %v255, %v253
      %v284 = vpack.c.b16 %v256, %v254
      %v285 = vpack.c.b16 %v259, %v257
      %v286 = vpack.c.b16 %v260, %v258
      %v287 = vpack.c.b16 %v263, %v261
      %v288 = vpack.c.b16 %v264, %v262
      %v289 = vpack.c.b16 %v267, %v265
      %v290 = vpack.c.b16 %v268, %v266
      %v291 = vpack.c.b16 %v271, %v269
      %v292 = vpack.c.b16 %v272, %v270
      %v293 = vpack.c.b16 %v275, %v273
      %v294 = vpack.c.b16 %v276, %v274
      %v295 = vpack.c.b16 %v279, %v277
      %v296 = vpack.c.b16 %v280, %v278
      %v345 = vunpack.c.l.b16 %v194
      %v346 = vunpack.c.l.b16 %v195
      %v347 = vunpack.c.l.b16 %v196
      %v348 = vunpack.c.l.b16 %v197
      %v349 = vunpack.c.l.b16 %v198
      %v350 = vunpack.c.l.b16 %v199
      %v351 = vunpack.c.l.b16 %v200
      %v352 = vunpack.c.l.b16 %v201
      %v353 = vunpack.c.l.b16 %v202
      %v354 = vunpack.c.l.b16 %v203
      %v355 = vunpack.c.l.b16 %v204
      %v356 = vunpack.c.l.b16 %v205
      %v357 = vunpack.c.l.b16 %v206
      %v358 = vunpack.c.l.b16 %v207
      %v359 = vunpack.c.l.b16 %v208
      %v360 = vunpack.c.l.b16 %v209
      %v361 = vunpack.c.l.b16 %v210
      %v362 = vunpack.c.l.b16 %v211
      %v363 = vunpack.c.l.b16 %v212
      %v364 = vunpack.c.l.b16 %v213
      %v365 = vunpack.c.l.b16 %v214
      %v366 = vunpack.c.l.b16 %v215
      %v367 = vunpack.c.l.b16 %v216
      %v368 = vunpack.c.l.b16 %v217
      %v369 = vunpack.c.l.b16 %v218
      %v370 = vunpack.c.l.b16 %v219
      %v371 = vunpack.c.l.b16 %v220
      %v372 = vunpack.c.l.b16 %v221
      %v373 = vunpack.c.l.b16 %v222
      %v374 = vunpack.c.l.b16 %v223
      %v375 = vunpack.c.l.b16 %v224
      %v376 = vunpack.c.l.b16 %v225
      %v377 = vpack.c.b16 %v346, %v345
      %v378 = vpack.c.b16 %v348, %v347
      %v379 = vpack.c.b16 %v350, %v349
      %v380 = vpack.c.b16 %v352, %v351
      %v381 = vpack.c.b16 %v354, %v353
      %v382 = vpack.c.b16 %v356, %v355
      %v383 = vpack.c.b16 %v358, %v357
      %v384 = vpack.c.b16 %v360, %v359
      %v385 = vpack.c.b16 %v362, %v361
      %v386 = vpack.c.b16 %v364, %v363
      %v387 = vpack.c.b16 %v366, %v365
      %v388 = vpack.c.b16 %v368, %v367
      %v389 = vpack.c.b16 %v370, %v369
      %v390 = vpack.c.b16 %v372, %v371
      %v391 = vpack.c.b16 %v374, %v373
      %v392 = vpack.c.b16 %v376, %v375
      %409 = vmatprep.subr.bf16.mxu0 0
      %410 = vmatpush1.bf16.msra.mxu0 %v377
      %411 = vmatprep.subr.bf16.mxu0 0
      %412 = vmatpush1.bf16.msra.mxu0 %v378
      %413 = vmatprep.subr.bf16.mxu0 0
      %414 = vmatpush1.bf16.msra.mxu0 %v379
      %415 = vmatprep.subr.bf16.mxu0 0
      %416 = vmatpush1.bf16.msra.mxu0 %v380
      %417 = vmatprep.subr.bf16.mxu0 0
      %418 = vmatpush1.bf16.msra.mxu0 %v381
      %419 = vmatprep.subr.bf16.mxu0 0
      %420 = vmatpush1.bf16.msra.mxu0 %v382
      %421 = vmatprep.subr.bf16.mxu0 0
      %422 = vmatpush1.bf16.msra.mxu0 %v383
      %423 = vmatprep.subr.bf16.mxu0 0
      %424 = vmatpush1.bf16.msra.mxu0 %v384
      %425 = vmatprep.subr.bf16.mxu0 0
      %426 = vmatpush1.bf16.msra.mxu0 %v385
      %427 = vmatprep.subr.bf16.mxu0 0
      %428 = vmatpush1.bf16.msra.mxu0 %v386
      %429 = vmatprep.subr.bf16.mxu0 0
      %430 = vmatpush1.bf16.msra.mxu0 %v387
      %431 = vmatprep.subr.bf16.mxu0 0
      %432 = vmatpush1.bf16.msra.mxu0 %v388
      %433 = vmatprep.subr.bf16.mxu0 0
      %434 = vmatpush1.bf16.msra.mxu0 %v389
      %435 = vmatprep.subr.bf16.mxu0 0
      %436 = vmatpush1.bf16.msra.mxu0 %v390
      %437 = vmatprep.subr.bf16.mxu0 0
      %438 = vmatpush1.bf16.msra.mxu0 %v391
      %439 = vmatprep.subr.bf16.mxu0 0
      %440 = vmatpush1.bf16.msra.mxu0 %v392
      %441 = vmatprep.mubr.bf16.mxu0 %v282
      %442 = vmatmul.mubr.bf16.gmra.mrb[0].mxu0 %v281
      %v443 = vpop.f32.mrb[0].mxu0
      %v444 = vadd.f32 %v231, %v443
      %v445 = vpop.f32.mrb[0].mxu0
      %v446 = vpop.f32.mrb[0].mxu0
      %v447 = vadd.f32 %v231, %v446
      %v448 = vpop.f32.mrb[0].mxu0
      %449 = vmatprep.mubr.bf16.mxu0 %v284
      %450 = vmatmul.mubr.bf16.gmra.mrb[0].mxu0 %v283
      %v451 = vpop.f32.mrb[0].mxu0
      %v452 = vadd.f32 %v231, %v451
      %v453 = vpop.f32.mrb[0].mxu0
      %v454 = vpop.f32.mrb[0].mxu0
      %v455 = vadd.f32 %v231, %v454
      %v456 = vpop.f32.mrb[0].mxu0
      %457 = vmatprep.mubr.bf16.mxu0 %v286
      %458 = vmatmul.mubr.bf16.gmra.mrb[0].mxu0 %v285
      %v459 = vpop.f32.mrb[0].mxu0
      %v460 = vadd.f32 %v231, %v459
      %v461 = vpop.f32.mrb[0].mxu0
      %v462 = vpop.f32.mrb[0].mxu0
      %v463 = vadd.f32 %v231, %v462
      %v464 = vpop.f32.mrb[0].mxu0
      %465 = vmatprep.mubr.bf16.mxu0 %v288
      %466 = vmatmul.mubr.bf16.gmra.mrb[0].mxu0 %v287
      %v467 = vpop.f32.mrb[0].mxu0
      %v468 = vadd.f32 %v231, %v467
      %v469 = vpop.f32.mrb[0].mxu0
      %v470 = vpop.f32.mrb[0].mxu0
      %v471 = vadd.f32 %v231, %v470
      %v472 = vpop.f32.mrb[0].mxu0
      %473 = vmatprep.mubr.bf16.mxu0 %v290
      %474 = vmatmul.mubr.bf16.gmra.mrb[0].mxu0 %v289
      %v475 = vpop.f32.mrb[0].mxu0
      %v476 = vadd.f32 %v231, %v475
      %v477 = vpop.f32.mrb[0].mxu0
      %v478 = vpop.f32.mrb[0].mxu0
      %v479 = vadd.f32 %v231, %v478
      %v480 = vpop.f32.mrb[0].mxu0
      %481 = vmatprep.mubr.bf16.mxu0 %v292
      %482 = vmatmul.mubr.bf16.gmra.mrb[0].mxu0 %v291
      %v483 = vpop.f32.mrb[0].mxu0
      %v484 = vadd.f32 %v231, %v483
      %v485 = vpop.f32.mrb[0].mxu0
      %v486 = vpop.f32.mrb[0].mxu0
      %v487 = vadd.f32 %v231, %v486
      %v488 = vpop.f32.mrb[0].mxu0
      %489 = vmatprep.mubr.bf16.mxu0 %v294
      %490 = vmatmul.mubr.bf16.gmra.mrb[0].mxu0 %v293
      %v491 = vpop.f32.mrb[0].mxu0
      %v492 = vadd.f32 %v231, %v491
      %v493 = vpop.f32.mrb[0].mxu0
      %v494 = vpop.f32.mrb[0].mxu0
      %v495 = vadd.f32 %v231, %v494
      %v496 = vpop.f32.mrb[0].mxu0
      %497 = vmatprep.mubr.bf16.mxu0 %v296
      %498 = vmatmul.mubr.bf16.gmra.mrb[0].mxu0 %v295
      %v499 = vpop.f32.mrb[0].mxu0
      %v500 = vadd.f32 %v231, %v499
      %v501 = vpop.f32.mrb[0].mxu0
      %v502 = vpop.f32.mrb[0].mxu0
      %v503 = vadd.f32 %v231, %v502
      %v504 = vpop.f32.mrb[0].mxu0
      %505 = vdwg.mxu0
      %vm506 = vcmp.ge.f32.partialorder %v444, 0.0
      %vm507 = vcmp.ge.f32.partialorder %v447, 0.0
      %vm508 = vcmp.ge.f32.partialorder %v452, 0.0
      %vm509 = vcmp.ge.f32.partialorder %v455, 0.0
      %vm510 = vcmp.ge.f32.partialorder %v460, 0.0
      %vm511 = vcmp.ge.f32.partialorder %v463, 0.0
      %vm512 = vcmp.ge.f32.partialorder %v468, 0.0
      %vm513 = vcmp.ge.f32.partialorder %v471, 0.0
      %vm514 = vcmp.ge.f32.partialorder %v476, 0.0
      %vm515 = vcmp.ge.f32.partialorder %v479, 0.0
      %vm516 = vcmp.ge.f32.partialorder %v484, 0.0
      %vm517 = vcmp.ge.f32.partialorder %v487, 0.0
      %vm518 = vcmp.ge.f32.partialorder %v492, 0.0
      %vm519 = vcmp.ge.f32.partialorder %v495, 0.0
      %vm520 = vcmp.ge.f32.partialorder %v500, 0.0
      %vm521 = vcmp.ge.f32.partialorder %v503, 0.0
      %v522 = vmul.f32 %v444, 0.2
      %v523 = vmul.f32 %v447, 0.2
      %v524 = vmul.f32 %v452, 0.2
      %v525 = vmul.f32 %v455, 0.2
      %v526 = vmul.f32 %v460, 0.2
      %v527 = vmul.f32 %v463, 0.2
      %v528 = vmul.f32 %v468, 0.2
      %v529 = vmul.f32 %v471, 0.2
      %v530 = vmul.f32 %v476, 0.2
      %v531 = vmul.f32 %v479, 0.2
      %v532 = vmul.f32 %v484, 0.2
      %v533 = vmul.f32 %v487, 0.2
      %v534 = vmul.f32 %v492, 0.2
      %v535 = vmul.f32 %v495, 0.2
      %v536 = vmul.f32 %v500, 0.2
      %v537 = vmul.f32 %v503, 0.2
      %v538 = vsel %vm506, %v444, %v522
      %v539 = vsel %vm507, %v447, %v523
      %v540 = vsel %vm508, %v452, %v524
      %v541 = vsel %vm509, %v455, %v525
      %v542 = vsel %vm510, %v460, %v526
      %v543 = vsel %vm511, %v463, %v527
      %v544 = vsel %vm512, %v468, %v528
      %v545 = vsel %vm513, %v471, %v529
      %v546 = vsel %vm514, %v476, %v530
      %v547 = vsel %vm515, %v479, %v531
      %v548 = vsel %vm516, %v484, %v532
      %v549 = vsel %vm517, %v487, %v533
      %v550 = vsel %vm518, %v492, %v534
      %v551 = vsel %vm519, %v495, %v535
      %v552 = vsel %vm520, %v500, %v536
      %v553 = vsel %vm521, %v503, %v537
      %v554 = vpack.c.bf16 %v539, %v538
      %v555 = vpack.c.bf16 %v541, %v540
      %v556 = vpack.c.bf16 %v543, %v542
      %v557 = vpack.c.bf16 %v545, %v544
      %v558 = vpack.c.bf16 %v547, %v546
      %v559 = vpack.c.bf16 %v549, %v548
      %v560 = vpack.c.bf16 %v551, %v550
      %v561 = vpack.c.bf16 %v553, %v552
      %v570 = vunpack.c.l.b16 %v554
      %v571 = vunpack.c.h.b16 %v554
      %v572 = vunpack.c.l.b16 %v555
      %v573 = vunpack.c.h.b16 %v555
      %v574 = vunpack.c.l.b16 %v556
      %v575 = vunpack.c.h.b16 %v556
      %v576 = vunpack.c.l.b16 %v557
      %v577 = vunpack.c.h.b16 %v557
      %v578 = vunpack.c.l.b16 %v558
      %v579 = vunpack.c.h.b16 %v558
      %v580 = vunpack.c.l.b16 %v559
      %v581 = vunpack.c.h.b16 %v559
      %v582 = vunpack.c.l.b16 %v560
      %v583 = vunpack.c.h.b16 %v560
      %v584 = vunpack.c.l.b16 %v561
      %v585 = vunpack.c.h.b16 %v561
      %v586 = vpack.c.b16 %v570, %v570
      %v587 = vpack.c.b16 %v571, %v571
      %v588 = vpack.c.b16 %v572, %v572
      %v589 = vpack.c.b16 %v573, %v573
      %v590 = vpack.c.b16 %v574, %v574
      %v591 = vpack.c.b16 %v575, %v575
      %v592 = vpack.c.b16 %v576, %v576
      %v593 = vpack.c.b16 %v577, %v577
      %v594 = vpack.c.b16 %v578, %v578
      %v595 = vpack.c.b16 %v579, %v579
      %v596 = vpack.c.b16 %v580, %v580
      %v597 = vpack.c.b16 %v581, %v581
      %v598 = vpack.c.b16 %v582, %v582
      %v599 = vpack.c.b16 %v583, %v583
      %v600 = vpack.c.b16 %v584, %v584
      %v601 = vpack.c.b16 %v585, %v585
      %618 = vst [vmem:[%s175] sm:$0xf] %v586
      %619 = vst [vmem:[%s175 + $0x4] sm:$0xf] %v587
      %620 = vst [vmem:[%s175 + $0x8] sm:$0xf] %v588
      %621 = vst [vmem:[%s175 + $0xc] sm:$0xf] %v589
      %622 = vst [vmem:[%s175 + $0x10] sm:$0xf] %v590
      %623 = vst [vmem:[%s175 + $0x14] sm:$0xf] %v591
      %624 = vst [vmem:[%s175 + $0x18] sm:$0xf] %v592
      %625 = vst [vmem:[%s175 + $0x1c] sm:$0xf] %v593
      %626 = vst [vmem:[%s175 + $0x20] sm:$0xf] %v594
      %627 = vst [vmem:[%s175 + $0x24] sm:$0xf] %v595
      %628 = vst [vmem:[%s175 + $0x28] sm:$0xf] %v596
      %629 = vst [vmem:[%s175 + $0x2c] sm:$0xf] %v597
      %630 = vst [vmem:[%s175 + $0x30] sm:$0xf] %v598
      %631 = vst [vmem:[%s175 + $0x34] sm:$0xf] %v599
      %632 = vst [vmem:[%s175 + $0x38] sm:$0xf] %v600
      %633 = vst [vmem:[%s175 + $0x3c] sm:$0xf] %v601
      %s634 = smul.u32 16, %s14
      %p635 = scmp.lt.s32.totalorder %s634, 31
      %s636 = scalar_select %p635, %s634, 31
      %s637 = smul.addr %s636, 4
      %s638 = scalar_lea.vmem %s3, %s637
      // Predicated region
      $region33: #{fc_discriminator_forward.6} parent=31 // pred_check
        %p639 = pneg %p100
      $region34: #{fc_discriminator_forward.6} parent=31 // pred_check_branch
        %641 = sbr.rel (%p639) target = $region36
      $region35: #{fc_discriminator_forward.6} parent=31 // pred_region
        %s642 = smul.u32 16, %s14
      $region36: #{fc_discriminator_forward.6} parent=31 // pred_fallthru
        _
    $region32: #{fc_discriminator_forward.6} parent=5 // pred_fallthru
      _
    %p643 = scmp.le.s32.totalorder 2, %s9
    // Predicated region
    $region37: #{fc_discriminator_forward.6} parent=5 // pred_check
      %p644 = pneg %p643
    $region38: #{fc_discriminator_forward.6} parent=5 // pred_check_branch
      %646 = sbr.rel (%p644) target = $region40
    $region39: #{fc_discriminator_forward.6} parent=5 // pred_region
      %s647 = ssub.s32 %s9, 2
      // Predicated region
      $region41: #{fc_discriminator_forward.6} parent=39 // pred_check
        %p648 = pneg %p106
      $region42: #{fc_discriminator_forward.6} parent=39 // pred_check_branch
        %650 = sbr.rel (%p648) target = $region44
      $region43: #{fc_discriminator_forward.6} parent=39 // pred_region
        %s651 = smul.u32 16, %s15
        %p652 = scmp.lt.s32.totalorder %s651, 31
        %s653 = scalar_select %p652, %s651, 31
        %s654 = smul.addr %s653, 4
        %s655 = scalar_lea.vmem %s3, %s654
      $region44: #{fc_discriminator_forward.6} parent=39 // pred_fallthru
        _
    $region40: #{fc_discriminator_forward.6} parent=5 // pred_fallthru
      _
  $region6: #{fc_discriminator_forward.6} parent=0 // loop_footer
    %s13 = sadd.s32 1, %s9
  $region7: #{fc_discriminator_forward.6} parent=0 // loop_footer_branch
    %8 = sbr.rel target = $region3
  $region8: #{fc_discriminator_forward.6} parent=0 // loop_exit
    _

// kernel: fc_discriminator_forward.7
$region0: #{fc_discriminator_forward.7}
  #allocation0 [shape = 'u32[]', space=smem, size = 0x4, offset = 0x4, fixed_abs, tag = 'smem constant byte address 0x4 - core index']
  #allocation1 [shape = 'u32[144,128]{1,0:T(1,128)}', space=vmem, size = 0x12000, scoped, tag = 'internal scratch']
  %s0 = inlined_call_operand.vmem [shape: bf16[288,512], index: 0, kind: input, shape index: {}]
  %s1 = inlined_call_operand.vmem [shape: bf16[512,128], index: 1, kind: input, shape index: {}]
  %s2 = inlined_call_operand.vmem [shape: f32[1,128], index: 2, kind: input, shape index: {}]
  %s3 = inlined_call_operand.vmem [shape: bf16[288,128], index: 3, kind: output, shape index: {}]
  %s4 = sld [smem:[#allocation0]]
  $region45: #{fc_discriminator_forward.7} parent=0
    _
  %s6 = ssub.s32 1, %s4
  %s7 = scalar_select 0, %s6, %s4
  loop: start=0, step=1, limit=4
  $region2: #{fc_discriminator_forward.7} parent=0 // loop_pre_header
    _
  $region3: #{fc_discriminator_forward.7} parent=0 // loop_header
    %s9 = sphi 0, %s13
    %p10 = scmp.ge.s32.totalorder %s9, 4
    %s19 = sphi 0, %s21
    %s22 = sphi 0, %s19
    %s23 = sphi 0, %s22
    %s39 = sphi 0, %s23
    %s43 = sphi 0, %s43
    %s45 = sphi 0, %s43
    %s46 = sphi 0, %s45
    %s60 = sphi 0, %s46
    %s64 = sphi 0, %s64
    %s66 = sphi 0, %s64
    %s67 = sphi 0, %s66
    %s81 = sphi 0, %s67
    %s87 = sphi 0, %s89
    %s90 = sphi 0, %s87
    %s91 = sphi 0, %s90
    %s107 = sphi 0, %s91
  $region4: #{fc_discriminator_forward.7} parent=0 // loop_header_branch
    %12 = sbr.rel (%p10) target = $region8
  $region5: #{fc_discriminator_forward.7} parent=0 // loop_body
    %s14 = ssub.s32 %s9, 1
    %s15 = ssub.s32 %s9, 2
    %s16 = sadd.s32 %s9, 1
    %s17 = ssub.s32 %s9, %s16
    %p18 = scmp.eq.s32.totalorder %s17, 0
    %s20 = sadd.s32 %s19, 1
    %s21 = scalar_select %p18, %s19, %s20
    %p24 = pneg %p18
    %p25 = scmp.eq.s32.totalorder %s9, 1
    %p26 = por %p24, %p25
    %p27 = scmp.ne.s32.totalorder %s19, %s22
    %p28 = scmp.eq.s32.totalorder %s9, 0
    %p29 = por %p27, %p28
    %p30 = scmp.ne.s32.totalorder %s19, %s22
    %p31 = scmp.eq.s32.totalorder %s14, 1
    %p32 = por %p30, %p31
    %p33 = scmp.ne.s32.totalorder %s22, %s23
    %p34 = scmp.eq.s32.totalorder %s14, 0
    %p35 = por %p33, %p34
    %p36 = scmp.ne.s32.totalorder %s22, %s23
    %p37 = scmp.eq.s32.totalorder %s15, 1
    %p38 = por %p36, %p37
    %p40 = scmp.ne.s32.totalorder %s23, %s39
    %p41 = scmp.eq.s32.totalorder %s15, 0
    %p42 = por %p40, %p41
    %s44 = sadd.s32 %s43, 1
    %p47 = scmp.eq.s32.totalorder %s9, 1
    %p48 = scmp.ne.s32.totalorder %s43, %s45
    %p49 = scmp.eq.s32.totalorder %s9, 0
    %p50 = por %p48, %p49
    %p51 = scmp.ne.s32.totalorder %s43, %s45
    %p52 = scmp.eq.s32.totalorder %s14, 1
    %p53 = por %p51, %p52
    %p54 = scmp.ne.s32.totalorder %s45, %s46
    %p55 = scmp.eq.s32.totalorder %s14, 0
    %p56 = por %p54, %p55
    %p57 = scmp.ne.s32.totalorder %s45, %s46
    %p58 = scmp.eq.s32.totalorder %s15, 1
    %p59 = por %p57, %p58
    %p61 = scmp.ne.s32.totalorder %s46, %s60
    %p62 = scmp.eq.s32.totalorder %s15, 0
    %p63 = por %p61, %p62
    %s65 = sadd.s32 %s64, 1
    %p68 = scmp.eq.s32.totalorder %s9, 1
    %p69 = scmp.ne.s32.totalorder %s64, %s66
    %p70 = scmp.eq.s32.totalorder %s9, 0
    %p71 = por %p69, %p70
    %p72 = scmp.ne.s32.totalorder %s64, %s66
    %p73 = scmp.eq.s32.totalorder %s14, 1
    %p74 = por %p72, %p73
    %p75 = scmp.ne.s32.totalorder %s66, %s67
    %p76 = scmp.eq.s32.totalorder %s14, 0
    %p77 = por %p75, %p76
    %p78 = scmp.ne.s32.totalorder %s66, %s67
    %p79 = scmp.eq.s32.totalorder %s15, 1
    %p80 = por %p78, %p79
    %p82 = scmp.ne.s32.totalorder %s67, %s81
    %p83 = scmp.eq.s32.totalorder %s15, 0
    %p84 = por %p82, %p83
    %s85 = ssub.s32 %s9, %s16
    %p86 = scmp.eq.s32.totalorder %s85, 0
    %s88 = sadd.s32 %s87, 1
    %s89 = scalar_select %p86, %s87, %s88
    %p92 = pneg %p86
    %p93 = scmp.eq.s32.totalorder %s9, 1
    %p94 = por %p92, %p93
    %p95 = scmp.ne.s32.totalorder %s87, %s90
    %p96 = scmp.eq.s32.totalorder %s9, 0
    %p97 = por %p95, %p96
    %p98 = scmp.ne.s32.totalorder %s87, %s90
    %p99 = scmp.eq.s32.totalorder %s14, 1
    %p100 = por %p98, %p99
    %p101 = scmp.ne.s32.totalorder %s90, %s91
    %p102 = scmp.eq.s32.totalorder %s14, 0
    %p103 = por %p101, %p102
    %p104 = scmp.ne.s32.totalorder %s90, %s91
    %p105 = scmp.eq.s32.totalorder %s15, 1
    %p106 = por %p104, %p105
    %p108 = scmp.ne.s32.totalorder %s91, %s107
    %p109 = scmp.eq.s32.totalorder %s15, 0
    %p110 = por %p108, %p109
    %p111 = scmp.le.s32.totalorder 1, %s9
    %p112 = scmp.lt.s32.totalorder %s9, 3
    %p113 = pnand %p111, %p112
    %p114 = pneg %p113
    // Predicated region
    $region9: #{fc_discriminator_forward.7} parent=5 // pred_check
      _
    $region10: #{fc_discriminator_forward.7} parent=5 // pred_check_branch
      %116 = sbr.rel (%p113) target = $region12
    $region11: #{fc_discriminator_forward.7} parent=5 // pred_region
      %s117 = ssub.s32 %s9, 1
      // Predicated region
      $region13: #{fc_discriminator_forward.7} parent=11 // pred_check
        %p118 = pneg %p56
      $region14: #{fc_discriminator_forward.7} parent=11 // pred_check_branch
        %120 = sbr.rel (%p118) target = $region16
      $region15: #{fc_discriminator_forward.7} parent=11 // pred_region
        _
      $region16: #{fc_discriminator_forward.7} parent=11 // pred_fallthru
        _
      // Predicated region
      $region17: #{fc_discriminator_forward.7} parent=11 // pred_check
        %p121 = pneg %p77
      $region18: #{fc_discriminator_forward.7} parent=11 // pred_check_branch
        %123 = sbr.rel (%p121) target = $region20
      $region19: #{fc_discriminator_forward.7} parent=11 // pred_region
        _
      $region20: #{fc_discriminator_forward.7} parent=11 // pred_fallthru
        _
    $region12: #{fc_discriminator_forward.7} parent=5 // pred_fallthru
      _
    %p124 = scmp.lt.s32.totalorder %s9, 2
    // Predicated region
    $region21: #{fc_discriminator_forward.7} parent=5 // pred_check
      %p125 = pneg %p124
    $region22: #{fc_discriminator_forward.7} parent=5 // pred_check_branch
      %127 = sbr.rel (%p125) target = $region24
    $region23: #{fc_discriminator_forward.7} parent=5 // pred_region
      // Predicated region
      $region25: #{fc_discriminator_forward.7} parent=23 // pred_check
        %p128 = pneg %p29
      $region26: #{fc_discriminator_forward.7} parent=23 // pred_check_branch
        %130 = sbr.rel (%p128) target = $region28
      $region27: #{fc_discriminator_forward.7} parent=23 // pred_region
        %s131 = smul.u32 18, %s9
        %p132 = scmp.lt.s32.totalorder %s131, 35
        %s133 = scalar_select %p132, %s131, 35
        %s134 = smul.addr %s133, 4
        %s135 = smul.addr %s134, 4
        %s136 = scalar_lea.vmem %s0, %s135
        %s137 = smul.u32 18, %s9
      $region28: #{fc_discriminator_forward.7} parent=23 // pred_fallthru
        _
    $region24: #{fc_discriminator_forward.7} parent=5 // pred_fallthru
      _
    %p138 = scmp.le.s32.totalorder 1, %s9
    %p139 = scmp.lt.s32.totalorder %s9, 3
    %p140 = pnand %p138, %p139
    %p141 = pneg %p140
    // Predicated region
    $region29: #{fc_discriminator_forward.7} parent=5 // pred_check
      _
    $region30: #{fc_discriminator_forward.7} parent=5 // pred_check_branch
      %143 = sbr.rel (%p140) target = $region32
    $region31: #{fc_discriminator_forward.7} parent=5 // pred_region
      %s144 = ssub.s32 %s9, 1
      %s145 = smul.u32 18, %s14
      %p146 = scmp.lt.s32.totalorder %s145, 35
      %s147 = scalar_select %p146, %s145, 35
      %s148 = smul.addr %s147, 4
      %s149 = smul.addr %s148, 4
      %s150 = scalar_lea.vmem %s0, %s149
      %p151 = pneg %p35
      %p152 = pneg %p32
      %p153 = pneg %p56
      %p154 = pneg %p53
      %p155 = pneg %p77
      %p156 = pneg %p74
      %p157 = pneg %p103
      %p158 = pneg %p100
      %s159 = smul.u32 18, %s14
      %p160 = scmp.lt.s32.totalorder %s159, 35
      %s161 = scalar_select %p160, %s159, 35
      %s162 = smul.addr %s161, 4
      %s163 = scalar_lea.vmem %s3, %s162
      %s164 = smul.u32 18, %s14
      %p165 = scmp.lt.s32.totalorder %s164, 35
      %s166 = scalar_select %p165, %s164, 35
      %s167 = smul.addr %s166, 4
      %s168 = smul.addr %s167, 4
      %s169 = scalar_lea.vmem %s0, %s168
      %s170 = smul.u32 18, %s14
      %s171 = smul.u32 18, %s14
      %p172 = scmp.lt.s32.totalorder %s171, 35
      %s173 = scalar_select %p172, %s171, 35
      %s174 = smul.addr %s173, 4
      %s175 = scalar_lea.vmem %s3, %s174
      %s176 = smul.u32 18, %s14
      %v178 = vld [vmem:[%s169] sm:$0xff]
      %v179 = vld [vmem:[%s169 + $0x8] sm:$0xff]
      %v180 = vld [vmem:[%s169 + $0x10] sm:$0xff]
      %v181 = vld [vmem:[%s169 + $0x18] sm:$0xff]
      %v182 = vld [vmem:[%s169 + $0x20] sm:$0xff]
      %v183 = vld [vmem:[%s169 + $0x28] sm:$0xff]
      %v184 = vld [vmem:[%s169 + $0x30] sm:$0xff]
      %v185 = vld [vmem:[%s169 + $0x38] sm:$0xff]
      %v186 = vld [vmem:[%s169 + $0x40] sm:$0xff]
      %v187 = vld [vmem:[%s169 + $0x48] sm:$0xff]
      %v188 = vld [vmem:[%s169 + $0x50] sm:$0xff]
      %v189 = vld [vmem:[%s169 + $0x58] sm:$0xff]
      %v190 = vld [vmem:[%s169 + $0x60] sm:$0xff]
      %v191 = vld [vmem:[%s169 + $0x68] sm:$0xff]
      %v192 = vld [vmem:[%s169 + $0x70] sm:$0xff]
      %v193 = vld [vmem:[%s169 + $0x78] sm:$0xff]
      %v194 = vld [vmem:[%s169 + $0x80] sm:$0xff]
      %v195 = vld [vmem:[%s169 + $0x88] sm:$0xff]
      %v196 = vld [vmem:[%s169 + $0x90] sm:$0xff]
      %v197 = vld [vmem:[%s169 + $0x98] sm:$0xff]
      %v198 = vld [vmem:[%s169 + $0xa0] sm:$0xff]
      %v199 = vld [vmem:[%s169 + $0xa8] sm:$0xff]
      %v200 = vld [vmem:[%s169 + $0xb0] sm:$0xff]
      %v201 = vld [vmem:[%s169 + $0xb8] sm:$0xff]
      %v202 = vld [vmem:[%s169 + $0xc0] sm:$0xff]
      %v203 = vld [vmem:[%s169 + $0xc8] sm:$0xff]
      %v204 = vld [vmem:[%s169 + $0xd0] sm:$0xff]
      %v205 = vld [vmem:[%s169 + $0xd8] sm:$0xff]
      %v206 = vld [vmem:[%s169 + $0xe0] sm:$0xff]
      %v207 = vld [vmem:[%s169 + $0xe8] sm:$0xff]
      %v208 = vld [vmem:[%s169 + $0xf0] sm:$0xff]
      %v209 = vld [vmem:[%s169 + $0xf8] sm:$0xff]
      %v210 = vld [vmem:[%s169 + $0x100] sm:$0xff]
      %v211 = vld [vmem:[%s169 + $0x108] sm:$0xff]
      %v212 = vld [vmem:[%s169 + $0x110] sm:$0xff]
      %v213 = vld [vmem:[%s169 + $0x118] sm:$0xff]
      %v214 = vld [vmem:[%s1] sm:$0xf]
      %v215 = vld [vmem:[%s1 + $0x4] sm:$0xf]
      %v216 = vld [vmem:[%s1 + $0x8] sm:$0xf]
      %v217 = vld [vmem:[%s1 + $0xc] sm:$0xf]
      %v218 = vld [vmem:[%s1 + $0x10] sm:$0xf]
      %v219 = vld [vmem:[%s1 + $0x14] sm:$0xf]
      %v220 = vld [vmem:[%s1 + $0x18] sm:$0xf]
      %v221 = vld [vmem:[%s1 + $0x1c] sm:$0xf]
      %v222 = vld [vmem:[%s1 + $0x20] sm:$0xf]
      %v223 = vld [vmem:[%s1 + $0x24] sm:$0xf]
      %v224 = vld [vmem:[%s1 + $0x28] sm:$0xf]
      %v225 = vld [vmem:[%s1 + $0x2c] sm:$0xf]
      %v226 = vld [vmem:[%s1 + $0x30] sm:$0xf]
      %v227 = vld [vmem:[%s1 + $0x34] sm:$0xf]
      %v228 = vld [vmem:[%s1 + $0x38] sm:$0xf]
      %v229 = vld [vmem:[%s1 + $0x3c] sm:$0xf]
      %v230 = vld [vmem:[%s1 + $0x40] sm:$0xf]
      %v231 = vld [vmem:[%s1 + $0x44] sm:$0xf]
      %v232 = vld [vmem:[%s1 + $0x48] sm:$0xf]
      %v233 = vld [vmem:[%s1 + $0x4c] sm:$0xf]
      %v234 = vld [vmem:[%s1 + $0x50] sm:$0xf]
      %v235 = vld [vmem:[%s1 + $0x54] sm:$0xf]
      %v236 = vld [vmem:[%s1 + $0x58] sm:$0xf]
      %v237 = vld [vmem:[%s1 + $0x5c] sm:$0xf]
      %v238 = vld [vmem:[%s1 + $0x60] sm:$0xf]
      %v239 = vld [vmem:[%s1 + $0x64] sm:$0xf]
      %v240 = vld [vmem:[%s1 + $0x68] sm:$0xf]
      %v241 = vld [vmem:[%s1 + $0x6c] sm:$0xf]
      %v242 = vld [vmem:[%s1 + $0x70] sm:$0xf]
      %v243 = vld [vmem:[%s1 + $0x74] sm:$0xf]
      %v244 = vld [vmem:[%s1 + $0x78] sm:$0xf]
      %v245 = vld [vmem:[%s1 + $0x7c] sm:$0xf]
      %v246 = vld [vmem:[%s1 + $0x80] sm:$0xf]
      %v247 = vld [vmem:[%s1 + $0x84] sm:$0xf]
      %v248 = vld [vmem:[%s1 + $0x88] sm:$0xf]
      %v249 = vld [vmem:[%s1 + $0x8c] sm:$0xf]
      %v250 = vld [vmem:[%s1 + $0x90] sm:$0xf]
      %v251 = vld [vmem:[%s1 + $0x94] sm:$0xf]
      %v252 = vld [vmem:[%s1 + $0x98] sm:$0xf]
      %v253 = vld [vmem:[%s1 + $0x9c] sm:$0xf]
      %v254 = vld [vmem:[%s1 + $0xa0] sm:$0xf]
      %v255 = vld [vmem:[%s1 + $0xa4] sm:$0xf]
      %v256 = vld [vmem:[%s1 + $0xa8] sm:$0xf]
      %v257 = vld [vmem:[%s1 + $0xac] sm:$0xf]
      %v258 = vld [vmem:[%s1 + $0xb0] sm:$0xf]
      %v259 = vld [vmem:[%s1 + $0xb4] sm:$0xf]
      %v260 = vld [vmem:[%s1 + $0xb8] sm:$0xf]
      %v261 = vld [vmem:[%s1 + $0xbc] sm:$0xf]
      %v262 = vld [vmem:[%s1 + $0xc0] sm:$0xf]
      %v263 = vld [vmem:[%s1 + $0xc4] sm:$0xf]
      %v264 = vld [vmem:[%s1 + $0xc8] sm:$0xf]
      %v265 = vld [vmem:[%s1 + $0xcc] sm:$0xf]
      %v266 = vld [vmem:[%s1 + $0xd0] sm:$0xf]
      %v267 = vld [vmem:[%s1 + $0xd4] sm:$0xf]
      %v268 = vld [vmem:[%s1 + $0xd8] sm:$0xf]
      %v269 = vld [vmem:[%s1 + $0xdc] sm:$0xf]
      %v270 = vld [vmem:[%s1 + $0xe0] sm:$0xf]
      %v271 = vld [vmem:[%s1 + $0xe4] sm:$0xf]
      %v272 = vld [vmem:[%s1 + $0xe8] sm:$0xf]
      %v273 = vld [vmem:[%s1 + $0xec] sm:$0xf]
      %v274 = vld [vmem:[%s1 + $0xf0] sm:$0xf]
      %v275 = vld [vmem:[%s1 + $0xf4] sm:$0xf]
      %v276 = vld [vmem:[%s1 + $0xf8] sm:$0xf]
      %v277 = vld [vmem:[%s1 + $0xfc] sm:$0xf]
      %v278 = vld [vmem:[%s2] sm:$0x1]
      %v280 = vlaneseq
      %v281 = vshrl.u32 %v280, 7
      %v282 = vsub.s32 0, %v281
      %v283 = vrot.slane %v278, %v282
      %v321 = vunpack.c.l.b16 %v178
      %v322 = vunpack.c.h.b16 %v178
      %v323 = vunpack.c.l.b16 %v179
      %v324 = vunpack.c.h.b16 %v179
      %v325 = vunpack.c.l.b16 %v180
      %v326 = vunpack.c.h.b16 %v180
      %v327 = vunpack.c.l.b16 %v181
      %v328 = vunpack.c.h.b16 %v181
      %v329 = vunpack.c.l.b16 %v182
      %v330 = vunpack.c.h.b16 %v182
      %v331 = vunpack.c.l.b16 %v183
      %v332 = vunpack.c.h.b16 %v183
      %v333 = vunpack.c.l.b16 %v184
      %v334 = vunpack.c.h.b16 %v184
      %v335 = vunpack.c.l.b16 %v185
      %v336 = vunpack.c.h.b16 %v185
      %v337 = vunpack.c.l.b16 %v186
      %v338 = vunpack.c.h.b16 %v186
      %v339 = vunpack.c.l.b16 %v187
      %v340 = vunpack.c.h.b16 %v187
      %v341 = vunpack.c.l.b16 %v188
      %v342 = vunpack.c.h.b16 %v188
      %v343 = vunpack.c.l.b16 %v189
      %v344 = vunpack.c.h.b16 %v189
      %v345 = vunpack.c.l.b16 %v190
      %v346 = vunpack.c.h.b16 %v190
      %v347 = vunpack.c.l.b16 %v191
      %v348 = vunpack.c.h.b16 %v191
      %v349 = vunpack.c.l.b16 %v192
      %v350 = vunpack.c.h.b16 %v192
      %v351 = vunpack.c.l.b16 %v193
      %v352 = vunpack.c.h.b16 %v193
      %v353 = vunpack.c.l.b16 %v194
      %v354 = vunpack.c.h.b16 %v194
      %v355 = vunpack.c.l.b16 %v195
      %v356 = vunpack.c.h.b16 %v195
      %v357 = vunpack.c.l.b16 %v196
      %v358 = vunpack.c.h.b16 %v196
      %v359 = vunpack.c.l.b16 %v197
      %v360 = vunpack.c.h.b16 %v197
      %v361 = vunpack.c.l.b16 %v198
      %v362 = vunpack.c.h.b16 %v198
      %v363 = vunpack.c.l.b16 %v199
      %v364 = vunpack.c.h.b16 %v199
      %v365 = vunpack.c.l.b16 %v200
      %v366 = vunpack.c.h.b16 %v200
      %v367 = vunpack.c.l.b16 %v201
      %v368 = vunpack.c.h.b16 %v201
      %v369 = vunpack.c.l.b16 %v202
      %v370 = vunpack.c.h.b16 %v202
      %v371 = vunpack.c.l.b16 %v203
      %v372 = vunpack.c.h.b16 %v203
      %v373 = vunpack.c.l.b16 %v204
      %v374 = vunpack.c.h.b16 %v204
      %v375 = vunpack.c.l.b16 %v205
      %v376 = vunpack.c.h.b16 %v205
      %v377 = vunpack.c.l.b16 %v206
      %v378 = vunpack.c.h.b16 %v206
      %v379 = vunpack.c.l.b16 %v207
      %v380 = vunpack.c.h.b16 %v207
      %v381 = vunpack.c.l.b16 %v208
      %v382 = vunpack.c.h.b16 %v208
      %v383 = vunpack.c.l.b16 %v209
      %v384 = vunpack.c.h.b16 %v209
      %v385 = vunpack.c.l.b16 %v210
      %v386 = vunpack.c.h.b16 %v210
      %v387 = vunpack.c.l.b16 %v211
      %v388 = vunpack.c.h.b16 %v211
      %v389 = vunpack.c.l.b16 %v212
      %v390 = vunpack.c.h.b16 %v212
      %v391 = vunpack.c.l.b16 %v213
      %v392 = vunpack.c.h.b16 %v213
      %v393 = vpack.c.b16 %v325, %v321
      %v394 = vpack.c.b16 %v326, %v322
      %v395 = vpack.c.b16 %v327, %v323
      %v396 = vpack.c.b16 %v328, %v324
      %v397 = vpack.c.b16 %v333, %v329
      %v398 = vpack.c.b16 %v334, %v330
      %v399 = vpack.c.b16 %v335, %v331
      %v400 = vpack.c.b16 %v336, %v332
      %v401 = vpack.c.b16 %v341, %v337
      %v402 = vpack.c.b16 %v342, %v338
      %v403 = vpack.c.b16 %v343, %v339
      %v404 = vpack.c.b16 %v344, %v340
      %v405 = vpack.c.b16 %v349, %v345
      %v406 = vpack.c.b16 %v350, %v346
      %v407 = vpack.c.b16 %v351, %v347
      %v408 = vpack.c.b16 %v352, %v348
      %v409 = vpack.c.b16 %v357, %v353
      %v410 = vpack.c.b16 %v358, %v354
      %v411 = vpack.c.b16 %v359, %v355
      %v412 = vpack.c.b16 %v360, %v356
      %v413 = vpack.c.b16 %v365, %v361
      %v414 = vpack.c.b16 %v366, %v362
      %v415 = vpack.c.b16 %v367, %v363
      %v416 = vpack.c.b16 %v368, %v364
      %v417 = vpack.c.b16 %v373, %v369
      %v418 = vpack.c.b16 %v374, %v370
      %v419 = vpack.c.b16 %v375, %v371
      %v420 = vpack.c.b16 %v376, %v372
      %v421 = vpack.c.b16 %v381, %v377
      %v422 = vpack.c.b16 %v382, %v378
      %v423 = vpack.c.b16 %v383, %v379
      %v424 = vpack.c.b16 %v384, %v380
      %v425 = vpack.c.b16 %v389, %v385
      %v426 = vpack.c.b16 %v390, %v386
      %v427 = vpack.c.b16 %v391, %v387
      %v428 = vpack.c.b16 %v392, %v388
      %v529 = vunpack.c.l.b16 %v214
      %v530 = vunpack.c.l.b16 %v215
      %v531 = vunpack.c.l.b16 %v216
      %v532 = vunpack.c.l.b16 %v217
      %v533 = vunpack.c.l.b16 %v218
      %v534 = vunpack.c.l.b16 %v219
      %v535 = vunpack.c.l.b16 %v220
      %v536 = vunpack.c.l.b16 %v221
      %v537 = vunpack.c.l.b16 %v222
      %v538 = vunpack.c.l.b16 %v223
      %v539 = vunpack.c.l.b16 %v224
      %v540 = vunpack.c.l.b16 %v225
      %v541 = vunpack.c.l.b16 %v226
      %v542 = vunpack.c.l.b16 %v227
      %v543 = vunpack.c.l.b16 %v228
      %v544 = vunpack.c.l.b16 %v229
      %v545 = vunpack.c.l.b16 %v230
      %v546 = vunpack.c.l.b16 %v231
      %v547 = vunpack.c.l.b16 %v232
      %v548 = vunpack.c.l.b16 %v233
      %v549 = vunpack.c.l.b16 %v234
      %v550 = vunpack.c.l.b16 %v235
      %v551 = vunpack.c.l.b16 %v236
      %v552 = vunpack.c.l.b16 %v237
      %v553 = vunpack.c.l.b16 %v238
      %v554 = vunpack.c.l.b16 %v239
      %v555 = vunpack.c.l.b16 %v240
      %v556 = vunpack.c.l.b16 %v241
      %v557 = vunpack.c.l.b16 %v242
      %v558 = vunpack.c.l.b16 %v243
      %v559 = vunpack.c.l.b16 %v244
      %v560 = vunpack.c.l.b16 %v245
      %v561 = vunpack.c.l.b16 %v246
      %v562 = vunpack.c.l.b16 %v247
      %v563 = vunpack.c.l.b16 %v248
      %v564 = vunpack.c.l.b16 %v249
      %v565 = vunpack.c.l.b16 %v250
      %v566 = vunpack.c.l.b16 %v251
      %v567 = vunpack.c.l.b16 %v252
      %v568 = vunpack.c.l.b16 %v253
      %v569 = vunpack.c.l.b16 %v254
      %v570 = vunpack.c.l.b16 %v255
      %v571 = vunpack.c.l.b16 %v256
      %v572 = vunpack.c.l.b16 %v257
      %v573 = vunpack.c.l.b16 %v258
      %v574 = vunpack.c.l.b16 %v259
      %v575 = vunpack.c.l.b16 %v260
      %v576 = vunpack.c.l.b16 %v261
      %v577 = vunpack.c.l.b16 %v262
      %v578 = vunpack.c.l.b16 %v263
      %v579 = vunpack.c.l.b16 %v264
      %v580 = vunpack.c.l.b16 %v265
      %v581 = vunpack.c.l.b16 %v266
      %v582 = vunpack.c.l.b16 %v267
      %v583 = vunpack.c.l.b16 %v268
      %v584 = vunpack.c.l.b16 %v269
      %v585 = vunpack.c.l.b16 %v270
      %v586 = vunpack.c.l.b16 %v271
      %v587 = vunpack.c.l.b16 %v272
      %v588 = vunpack.c.l.b16 %v273
      %v589 = vunpack.c.l.b16 %v274
      %v590 = vunpack.c.l.b16 %v275
      %v591 = vunpack.c.l.b16 %v276
      %v592 = vunpack.c.l.b16 %v277
      %v593 = vpack.c.b16 %v530, %v529
      %v594 = vpack.c.b16 %v532, %v531
      %v595 = vpack.c.b16 %v534, %v533
      %v596 = vpack.c.b16 %v536, %v535
      %v597 = vpack.c.b16 %v538, %v537
      %v598 = vpack.c.b16 %v540, %v539
      %v599 = vpack.c.b16 %v542, %v541
      %v600 = vpack.c.b16 %v544, %v543
      %v601 = vpack.c.b16 %v546, %v545
      %v602 = vpack.c.b16 %v548, %v547
      %v603 = vpack.c.b16 %v550, %v549
      %v604 = vpack.c.b16 %v552, %v551
      %v605 = vpack.c.b16 %v554, %v553
      %v606 = vpack.c.b16 %v556, %v555
      %v607 = vpack.c.b16 %v558, %v557
      %v608 = vpack.c.b16 %v560, %v559
      %v609 = vpack.c.b16 %v562, %v561
      %v610 = vpack.c.b16 %v564, %v563
      %v611 = vpack.c.b16 %v566, %v565
      %v612 = vpack.c.b16 %v568, %v567
      %v613 = vpack.c.b16 %v570, %v569
      %v614 = vpack.c.b16 %v572, %v571
      %v615 = vpack.c.b16 %v574, %v573
      %v616 = vpack.c.b16 %v576, %v575
      %v617 = vpack.c.b16 %v578, %v577
      %v618 = vpack.c.b16 %v580, %v579
      %v619 = vpack.c.b16 %v582, %v581
      %v620 = vpack.c.b16 %v584, %v583
      %v621 = vpack.c.b16 %v586, %v585
      %v622 = vpack.c.b16 %v588, %v587
      %v623 = vpack.c.b16 %v590, %v589
      %v624 = vpack.c.b16 %v592, %v591
      %657 = vmatprep.subr.bf16.mxu0 0
      %658 = vmatpush1.bf16.msra.mxu0 %v593
      %659 = vmatprep.subr.bf16.mxu0 0
      %660 = vmatpush1.bf16.msra.mxu0 %v594
      %661 = vmatprep.subr.bf16.mxu0 0
      %662 = vmatpush1.bf16.msra.mxu0 %v595
      %663 = vmatprep.subr.bf16.mxu0 0
      %664 = vmatpush1.bf16.msra.mxu0 %v596
      %665 = vmatprep.subr.bf16.mxu0 0
      %666 = vmatpush1.bf16.msra.mxu0 %v597
      %667 = vmatprep.subr.bf16.mxu0 0
      %668 = vmatpush1.bf16.msra.mxu0 %v598
      %669 = vmatprep.subr.bf16.mxu0 0
      %670 = vmatpush1.bf16.msra.mxu0 %v599
      %671 = vmatprep.subr.bf16.mxu0 0
      %672 = vmatpush1.bf16.msra.mxu0 %v600
      %673 = vmatprep.subr.bf16.mxu0 0
      %674 = vmatpush1.bf16.msra.mxu0 %v601
      %675 = vmatprep.subr.bf16.mxu0 0
      %676 = vmatpush1.bf16.msra.mxu0 %v602
      %677 = vmatprep.subr.bf16.mxu0 0
      %678 = vmatpush1.bf16.msra.mxu0 %v603
      %679 = vmatprep.subr.bf16.mxu0 0
      %680 = vmatpush1.bf16.msra.mxu0 %v604
      %681 = vmatprep.subr.bf16.mxu0 0
      %682 = vmatpush1.bf16.msra.mxu0 %v605
      %683 = vmatprep.subr.bf16.mxu0 0
      %684 = vmatpush1.bf16.msra.mxu0 %v606
      %685 = vmatprep.subr.bf16.mxu0 0
      %686 = vmatpush1.bf16.msra.mxu0 %v607
      %687 = vmatprep.subr.bf16.mxu0 0
      %688 = vmatpush1.bf16.msra.mxu0 %v608
      %689 = vmatprep.mubr.bf16.mxu0 %v394
      %690 = vmatmul.mubr.bf16.gmra.mrb[0].mxu0 %v393
      %v691 = vpop.f32.mrb[0].mxu0
      %v692 = vadd.f32 %v283, %v691
      %v693 = vpop.f32.mrb[0].mxu0
      %v694 = vpop.f32.mrb[0].mxu0
      %v695 = vadd.f32 %v283, %v694
      %v696 = vpop.f32.mrb[0].mxu0
      %697 = vmatprep.mubr.bf16.mxu0 %v398
      %698 = vmatmul.mubr.bf16.gmra.mrb[0].mxu0 %v397
      %v699 = vpop.f32.mrb[0].mxu0
      %v700 = vadd.f32 %v283, %v699
      %v701 = vpop.f32.mrb[0].mxu0
      %v702 = vpop.f32.mrb[0].mxu0
      %v703 = vadd.f32 %v283, %v702
      %v704 = vpop.f32.mrb[0].mxu0
      %705 = vmatprep.mubr.bf16.mxu0 %v402
      %706 = vmatmul.mubr.bf16.gmra.mrb[0].mxu0 %v401
      %v707 = vpop.f32.mrb[0].mxu0
      %v708 = vadd.f32 %v283, %v707
      %v709 = vpop.f32.mrb[0].mxu0
      %v710 = vpop.f32.mrb[0].mxu0
      %v711 = vadd.f32 %v283, %v710
      %v712 = vpop.f32.mrb[0].mxu0
      %713 = vmatprep.mubr.bf16.mxu0 %v406
      %714 = vmatmul.mubr.bf16.gmra.mrb[0].mxu0 %v405
      %v715 = vpop.f32.mrb[0].mxu0
      %v716 = vadd.f32 %v283, %v715
      %v717 = vpop.f32.mrb[0].mxu0
      %v718 = vpop.f32.mrb[0].mxu0
      %v719 = vadd.f32 %v283, %v718
      %v720 = vpop.f32.mrb[0].mxu0
      %721 = vmatprep.mubr.bf16.mxu0 %v410
      %722 = vmatmul.mubr.bf16.gmra.mrb[0].mxu0 %v409
      %v723 = vpop.f32.mrb[0].mxu0
      %v724 = vadd.f32 %v283, %v723
      %v725 = vpop.f32.mrb[0].mxu0
      %v726 = vpop.f32.mrb[0].mxu0
      %v727 = vadd.f32 %v283, %v726
      %v728 = vpop.f32.mrb[0].mxu0
      %729 = vmatprep.mubr.bf16.mxu0 %v414
      %730 = vmatmul.mubr.bf16.gmra.mrb[0].mxu0 %v413
      %v731 = vpop.f32.mrb[0].mxu0
      %v732 = vadd.f32 %v283, %v731
      %v733 = vpop.f32.mrb[0].mxu0
      %v734 = vpop.f32.mrb[0].mxu0
      %v735 = vadd.f32 %v283, %v734
      %v736 = vpop.f32.mrb[0].mxu0
      %737 = vmatprep.mubr.bf16.mxu0 %v418
      %738 = vmatmul.mubr.bf16.gmra.mrb[0].mxu0 %v417
      %v739 = vpop.f32.mrb[0].mxu0
      %v740 = vadd.f32 %v283, %v739
      %v741 = vpop.f32.mrb[0].mxu0
      %v742 = vpop.f32.mrb[0].mxu0
      %v743 = vadd.f32 %v283, %v742
      %v744 = vpop.f32.mrb[0].mxu0
      %745 = vmatprep.mubr.bf16.mxu0 %v422
      %746 = vmatmul.mubr.bf16.gmra.mrb[0].mxu0 %v421
      %v747 = vpop.f32.mrb[0].mxu0
      %v748 = vadd.f32 %v283, %v747
      %v749 = vpop.f32.mrb[0].mxu0
      %v750 = vpop.f32.mrb[0].mxu0
      %v751 = vadd.f32 %v283, %v750
      %v752 = vpop.f32.mrb[0].mxu0
      %753 = vmatprep.mubr.bf16.mxu0 %v426
      %754 = vmatmul.mubr.bf16.gmra.mrb[0].mxu0 %v425
      %v755 = vpop.f32.mrb[0].mxu0
      %v756 = vadd.f32 %v283, %v755
      %v757 = vpop.f32.mrb[0].mxu0
      %v758 = vpop.f32.mrb[0].mxu0
      %v759 = vadd.f32 %v283, %v758
      %v760 = vpop.f32.mrb[0].mxu0
      %761 = vdwg.mxu0
      %762 = vmatprep.subr.bf16.mxu0 0
      %763 = vmatpush1.bf16.msra.mxu0 %v609
      %764 = vmatprep.subr.bf16.mxu0 0
      %765 = vmatpush1.bf16.msra.mxu0 %v610
      %766 = vmatprep.subr.bf16.mxu0 0
      %767 = vmatpush1.bf16.msra.mxu0 %v611
      %768 = vmatprep.subr.bf16.mxu0 0
      %769 = vmatpush1.bf16.msra.mxu0 %v612
      %770 = vmatprep.subr.bf16.mxu0 0
      %771 = vmatpush1.bf16.msra.mxu0 %v613
      %772 = vmatprep.subr.bf16.mxu0 0
      %773 = vmatpush1.bf16.msra.mxu0 %v614
      %774 = vmatprep.subr.bf16.mxu0 0
      %775 = vmatpush1.bf16.msra.mxu0 %v615
      %776 = vmatprep.subr.bf16.mxu0 0
      %777 = vmatpush1.bf16.msra.mxu0 %v616
      %778 = vmatprep.subr.bf16.mxu0 0
      %779 = vmatpush1.bf16.msra.mxu0 %v617
      %780 = vmatprep.subr.bf16.mxu0 0
      %781 = vmatpush1.bf16.msra.mxu0 %v618
      %782 = vmatprep.subr.bf16.mxu0 0
      %783 = vmatpush1.bf16.msra.mxu0 %v619
      %784 = vmatprep.subr.bf16.mxu0 0
      %785 = vmatpush1.bf16.msra.mxu0 %v620
      %786 = vmatprep.subr.bf16.mxu0 0
      %787 = vmatpush1.bf16.msra.mxu0 %v621
      %788 = vmatprep.subr.bf16.mxu0 0
      %789 = vmatpush1.bf16.msra.mxu0 %v622
      %790 = vmatprep.subr.bf16.mxu0 0
      %791 = vmatpush1.bf16.msra.mxu0 %v623
      %792 = vmatprep.subr.bf16.mxu0 0
      %793 = vmatpush1.bf16.msra.mxu0 %v624
      %794 = vmatprep.mubr.bf16.mxu0 %v396
      %795 = vmatmul.mubr.bf16.gmra.mrb[0].mxu0 %v395
      %v796 = vpop.f32.mrb[0].mxu0
      %v797 = vadd.f32 %v692, %v796
      %v798 = vpop.f32.mrb[0].mxu0
      %v799 = vpop.f32.mrb[0].mxu0
      %v800 = vadd.f32 %v695, %v799
      %v801 = vpop.f32.mrb[0].mxu0
      %802 = vmatprep.mubr.bf16.mxu0 %v400
      %803 = vmatmul.mubr.bf16.gmra.mrb[0].mxu0 %v399
      %v804 = vpop.f32.mrb[0].mxu0
      %v805 = vadd.f32 %v700, %v804
      %v806 = vpop.f32.mrb[0].mxu0
      %v807 = vpop.f32.mrb[0].mxu0
      %v808 = vadd.f32 %v703, %v807
      %v809 = vpop.f32.mrb[0].mxu0
      %810 = vmatprep.mubr.bf16.mxu0 %v404
      %811 = vmatmul.mubr.bf16.gmra.mrb[0].mxu0 %v403
      %v812 = vpop.f32.mrb[0].mxu0
      %v813 = vadd.f32 %v708, %v812
      %v814 = vpop.f32.mrb[0].mxu0
      %v815 = vpop.f32.mrb[0].mxu0
      %v816 = vadd.f32 %v711, %v815
      %v817 = vpop.f32.mrb[0].mxu0
      %818 = vmatprep.mubr.bf16.mxu0 %v408
      %819 = vmatmul.mubr.bf16.gmra.mrb[0].mxu0 %v407
      %v820 = vpop.f32.mrb[0].mxu0
      %v821 = vadd.f32 %v716, %v820
      %v822 = vpop.f32.mrb[0].mxu0
      %v823 = vpop.f32.mrb[0].mxu0
      %v824 = vadd.f32 %v719, %v823
      %v825 = vpop.f32.mrb[0].mxu0
      %826 = vmatprep.mubr.bf16.mxu0 %v412
      %827 = vmatmul.mubr.bf16.gmra.mrb[0].mxu0 %v411
      %v828 = vpop.f32.mrb[0].mxu0
      %v829 = vadd.f32 %v724, %v828
      %v830 = vpop.f32.mrb[0].mxu0
      %v831 = vpop.f32.mrb[0].mxu0
      %v832 = vadd.f32 %v727, %v831
      %v833 = vpop.f32.mrb[0].mxu0
      %834 = vmatprep.mubr.bf16.mxu0 %v416
      %835 = vmatmul.mubr.bf16.gmra.mrb[0].mxu0 %v415
      %v836 = vpop.f32.mrb[0].mxu0
      %v837 = vadd.f32 %v732, %v836
      %v838 = vpop.f32.mrb[0].mxu0
      %v839 = vpop.f32.mrb[0].mxu0
      %v840 = vadd.f32 %v735, %v839
      %v841 = vpop.f32.mrb[0].mxu0
      %842 = vmatprep.mubr.bf16.mxu0 %v420
      %843 = vmatmul.mubr.bf16.gmra.mrb[0].mxu0 %v419
      %v844 = vpop.f32.mrb[0].mxu0
      %v845 = vadd.f32 %v740, %v844
      %v846 = vpop.f32.mrb[0].mxu0
      %v847 = vpop.f32.mrb[0].mxu0
      %v848 = vadd.f32 %v743, %v847
      %v849 = vpop.f32.mrb[0].mxu0
      %850 = vmatprep.mubr.bf16.mxu0 %v424
      %851 = vmatmul.mubr.bf16.gmra.mrb[0].mxu0 %v423
      %v852 = vpop.f32.mrb[0].mxu0
      %v853 = vadd.f32 %v748, %v852
      %v854 = vpop.f32.mrb[0].mxu0
      %v855 = vpop.f32.mrb[0].mxu0
      %v856 = vadd.f32 %v751, %v855
      %v857 = vpop.f32.mrb[0].mxu0
      %858 = vmatprep.mubr.bf16.mxu0 %v428
      %859 = vmatmul.mubr.bf16.gmra.mrb[0].mxu0 %v427
      %v860 = vpop.f32.mrb[0].mxu0
      %v861 = vadd.f32 %v756, %v860
      %v862 = vpop.f32.mrb[0].mxu0
      %v863 = vpop.f32.mrb[0].mxu0
      %v864 = vadd.f32 %v759, %v863
      %v865 = vpop.f32.mrb[0].mxu0
      %866 = vdwg.mxu0
      %vm867 = vcmp.ge.f32.partialorder %v797, 0.0
      %vm868 = vcmp.ge.f32.partialorder %v800, 0.0
      %vm869 = vcmp.ge.f32.partialorder %v805, 0.0
      %vm870 = vcmp.ge.f32.partialorder %v808, 0.0
      %vm871 = vcmp.ge.f32.partialorder %v813, 0.0
      %vm872 = vcmp.ge.f32.partialorder %v816, 0.0
      %vm873 = vcmp.ge.f32.partialorder %v821, 0.0
      %vm874 = vcmp.ge.f32.partialorder %v824, 0.0
      %vm875 = vcmp.ge.f32.partialorder %v829, 0.0
      %vm876 = vcmp.ge.f32.partialorder %v832, 0.0
      %vm877 = vcmp.ge.f32.partialorder %v837, 0.0
      %vm878 = vcmp.ge.f32.partialorder %v840, 0.0
      %vm879 = vcmp.ge.f32.partialorder %v845, 0.0
      %vm880 = vcmp.ge.f32.partialorder %v848, 0.0
      %vm881 = vcmp.ge.f32.partialorder %v853, 0.0
      %vm882 = vcmp.ge.f32.partialorder %v856, 0.0
      %vm883 = vcmp.ge.f32.partialorder %v861, 0.0
      %vm884 = vcmp.ge.f32.partialorder %v864, 0.0
      %v885 = vmul.f32 %v797, 0.2
      %v886 = vmul.f32 %v800, 0.2
      %v887 = vmul.f32 %v805, 0.2
      %v888 = vmul.f32 %v808, 0.2
      %v889 = vmul.f32 %v813, 0.2
      %v890 = vmul.f32 %v816, 0.2
      %v891 = vmul.f32 %v821, 0.2
      %v892 = vmul.f32 %v824, 0.2
      %v893 = vmul.f32 %v829, 0.2
      %v894 = vmul.f32 %v832, 0.2
      %v895 = vmul.f32 %v837, 0.2
      %v896 = vmul.f32 %v840, 0.2
      %v897 = vmul.f32 %v845, 0.2
      %v898 = vmul.f32 %v848, 0.2
      %v899 = vmul.f32 %v853, 0.2
      %v900 = vmul.f32 %v856, 0.2
      %v901 = vmul.f32 %v861, 0.2
      %v902 = vmul.f32 %v864, 0.2
      %v903 = vsel %vm867, %v797, %v885
      %v904 = vsel %vm868, %v800, %v886
      %v905 = vsel %vm869, %v805, %v887
      %v906 = vsel %vm870, %v808, %v888
      %v907 = vsel %vm871, %v813, %v889
      %v908 = vsel %vm872, %v816, %v890
      %v909 = vsel %vm873, %v821, %v891
      %v910 = vsel %vm874, %v824, %v892
      %v911 = vsel %vm875, %v829, %v893
      %v912 = vsel %vm876, %v832, %v894
      %v913 = vsel %vm877, %v837, %v895
      %v914 = vsel %vm878, %v840, %v896
      %v915 = vsel %vm879, %v845, %v897
      %v916 = vsel %vm880, %v848, %v898
      %v917 = vsel %vm881, %v853, %v899
      %v918 = vsel %vm882, %v856, %v900
      %v919 = vsel %vm883, %v861, %v901
      %v920 = vsel %vm884, %v864, %v902
      %v921 = vpack.c.bf16 %v904, %v903
      %v922 = vpack.c.bf16 %v906, %v905
      %v923 = vpack.c.bf16 %v908, %v907
      %v924 = vpack.c.bf16 %v910, %v909
      %v925 = vpack.c.bf16 %v912, %v911
      %v926 = vpack.c.bf16 %v914, %v913
      %v927 = vpack.c.bf16 %v916, %v915
      %v928 = vpack.c.bf16 %v918, %v917
      %v929 = vpack.c.bf16 %v920, %v919
      %v939 = vunpack.c.l.b16 %v921
      %v940 = vunpack.c.h.b16 %v921
      %v941 = vunpack.c.l.b16 %v922
      %v942 = vunpack.c.h.b16 %v922
      %v943 = vunpack.c.l.b16 %v923
      %v944 = vunpack.c.h.b16 %v923
      %v945 = vunpack.c.l.b16 %v924
      %v946 = vunpack.c.h.b16 %v924
      %v947 = vunpack.c.l.b16 %v925
      %v948 = vunpack.c.h.b16 %v925
      %v949 = vunpack.c.l.b16 %v926
      %v950 = vunpack.c.h.b16 %v926
      %v951 = vunpack.c.l.b16 %v927
      %v952 = vunpack.c.h.b16 %v927
      %v953 = vunpack.c.l.b16 %v928
      %v954 = vunpack.c.h.b16 %v928
      %v955 = vunpack.c.l.b16 %v929
      %v956 = vunpack.c.h.b16 %v929
      %v957 = vpack.c.b16 %v939, %v939
      %v958 = vpack.c.b16 %v940, %v940
      %v959 = vpack.c.b16 %v941, %v941
      %v960 = vpack.c.b16 %v942, %v942
      %v961 = vpack.c.b16 %v943, %v943
      %v962 = vpack.c.b16 %v944, %v944
      %v963 = vpack.c.b16 %v945, %v945
      %v964 = vpack.c.b16 %v946, %v946
      %v965 = vpack.c.b16 %v947, %v947
      %v966 = vpack.c.b16 %v948, %v948
      %v967 = vpack.c.b16 %v949, %v949
      %v968 = vpack.c.b16 %v950, %v950
      %v969 = vpack.c.b16 %v951, %v951
      %v970 = vpack.c.b16 %v952, %v952
      %v971 = vpack.c.b16 %v953, %v953
      %v972 = vpack.c.b16 %v954, %v954
      %v973 = vpack.c.b16 %v955, %v955
      %v974 = vpack.c.b16 %v956, %v956
      %993 = vst [vmem:[%s175] sm:$0xf] %v957
      %994 = vst [vmem:[%s175 + $0x4] sm:$0xf] %v958
      %995 = vst [vmem:[%s175 + $0x8] sm:$0xf] %v959
      %996 = vst [vmem:[%s175 + $0xc] sm:$0xf] %v960
      %997 = vst [vmem:[%s175 + $0x10] sm:$0xf] %v961
      %998 = vst [vmem:[%s175 + $0x14] sm:$0xf] %v962
      %999 = vst [vmem:[%s175 + $0x18] sm:$0xf] %v963
      %1000 = vst [vmem:[%s175 + $0x1c] sm:$0xf] %v964
      %1001 = vst [vmem:[%s175 + $0x20] sm:$0xf] %v965
      %1002 = vst [vmem:[%s175 + $0x24] sm:$0xf] %v966
      %1003 = vst [vmem:[%s175 + $0x28] sm:$0xf] %v967
      %1004 = vst [vmem:[%s175 + $0x2c] sm:$0xf] %v968
      %1005 = vst [vmem:[%s175 + $0x30] sm:$0xf] %v969
      %1006 = vst [vmem:[%s175 + $0x34] sm:$0xf] %v970
      %1007 = vst [vmem:[%s175 + $0x38] sm:$0xf] %v971
      %1008 = vst [vmem:[%s175 + $0x3c] sm:$0xf] %v972
      %1009 = vst [vmem:[%s175 + $0x40] sm:$0xf] %v973
      %1010 = vst [vmem:[%s175 + $0x44] sm:$0xf] %v974
      %s1011 = smul.u32 18, %s14
      %p1012 = scmp.lt.s32.totalorder %s1011, 35
      %s1013 = scalar_select %p1012, %s1011, 35
      %s1014 = smul.addr %s1013, 4
      %s1015 = scalar_lea.vmem %s3, %s1014
      // Predicated region
      $region33: #{fc_discriminator_forward.7} parent=31 // pred_check
        %p1016 = pneg %p100
      $region34: #{fc_discriminator_forward.7} parent=31 // pred_check_branch
        %1018 = sbr.rel (%p1016) target = $region36
      $region35: #{fc_discriminator_forward.7} parent=31 // pred_region
        %s1019 = smul.u32 18, %s14
      $region36: #{fc_discriminator_forward.7} parent=31 // pred_fallthru
        _
    $region32: #{fc_discriminator_forward.7} parent=5 // pred_fallthru
      _
    %p1020 = scmp.le.s32.totalorder 2, %s9
    // Predicated region
    $region37: #{fc_discriminator_forward.7} parent=5 // pred_check
      %p1021 = pneg %p1020
    $region38: #{fc_discriminator_forward.7} parent=5 // pred_check_branch
      %1023 = sbr.rel (%p1021) target = $region40
    $region39: #{fc_discriminator_forward.7} parent=5 // pred_region
      %s1024 = ssub.s32 %s9, 2
      // Predicated region
      $region41: #{fc_discriminator_forward.7} parent=39 // pred_check
        %p1025 = pneg %p106
      $region42: #{fc_discriminator_forward.7} parent=39 // pred_check_branch
        %1027 = sbr.rel (%p1025) target = $region44
      $region43: #{fc_discriminator_forward.7} parent=39 // pred_region
        %s1028 = smul.u32 18, %s15
        %p1029 = scmp.lt.s32.totalorder %s1028, 35
        %s1030 = scalar_select %p1029, %s1028, 35
        %s1031 = smul.addr %s1030, 4
        %s1032 = scalar_lea.vmem %s3, %s1031
      $region44: #{fc_discriminator_forward.7} parent=39 // pred_fallthru
        _
    $region40: #{fc_discriminator_forward.7} parent=5 // pred_fallthru
      _
  $region6: #{fc_discriminator_forward.7} parent=0 // loop_footer
    %s13 = sadd.s32 1, %s9
  $region7: #{fc_discriminator_forward.7} parent=0 // loop_footer_branch
    %8 = sbr.rel target = $region3
  $region8: #{fc_discriminator_forward.7} parent=0 // loop_exit
    _

</llo_original>
